<compile_context>
chip_gen: v6e
topology: v6e:2x2x1
jax: 0.10.0
libtpu: 0.0.40
codegen_flags: <defaults>
</compile_context>

<pallas_src>
import jax
import jax.numpy as jnp
from jax.experimental import pallas as pl
from jax.experimental.pallas import tpu as pltpu


def down_kernel(x_ref, w1_ref, s1_ref, b1_ref, w2_ref, s2_ref, b2_ref, o_ref):
    # x_ref:  (1, H, Wp, 2*Cin)  one batch element, W folded into even/odd pairs
    # w1_ref: (9*Cin, Cout)      conv1 weights as im2col matrix ((dy,dx,ci) major->minor)
    # s1/b1:  (1, Cout)          folded BN1 scale / bias (conv bias included)
    # w2_ref: (9*Cout, Cout)     conv2 weights as im2col matrix
    # s2/b2:  (1, Cout)          folded BN2 scale / bias
    # o_ref:  (1, Hp, Wp, Cout)  output tile (Cout = 128 in the demo -> dense stores)
    _, H, Wp, two_cin = x_ref.shape
    cin = two_cin // 2
    hp = H // 2
    cout = o_ref.shape[-1]

    # ---- MaxPool2d(2), fused ----
    xw = x_ref[0]                                        # (H, Wp, 2*Cin)
    pw = jnp.maximum(xw[:, :, :cin], xw[:, :, cin:])     # max over W pairs (lane slice)
    pwr = pw.reshape(hp, 2, Wp, cin)                     # split H into pairs (leading dim)
    pooled = jnp.maximum(pwr[:, 0, :, :], pwr[:, 1, :, :])   # (Hp, Wp, Cin)

    def pad_hw(t):
        # zero-pad (Hp, Wp, C) -> (Hp+2, Wp+2, C) as a value (no scratch buffer,
        # no repeated zero-fill stores).
        c = t.shape[-1]
        zc = jnp.zeros((hp, 1, c), jnp.float32)
        t = jnp.concatenate([zc, t, zc], axis=1)
        zr = jnp.zeros((1, Wp + 2, c), jnp.float32)
        return jnp.concatenate([zr, t, zr], axis=0)

    def conv3x3(t, w, scale, bias):
        # im2col: build the (Hp*Wp, 9*C) slab once, then a single MXU matmul,
        # followed by the folded-BN + ReLU epilogue in f32.
        c = t.shape[-1]
        p = pad_hw(t)
        cols = [p[dy:dy + hp, dx:dx + Wp, :]
                for dy in range(3) for dx in range(3)]
        slab = jnp.concatenate(cols, axis=-1).reshape(hp * Wp, 9 * c)
        acc = jnp.dot(slab, w, preferred_element_type=jnp.float32)
        return jnp.maximum(acc * scale + bias, 0.0)      # (Hp*Wp, Cout)

    # hoist scale/bias loads (each broadcast happens exactly once per conv)
    s1 = s1_ref[...]
    b1 = b1_ref[...]
    s2 = s2_ref[...]
    b2 = b2_ref[...]

    y1 = conv3x3(pooled, w1_ref[...], s1, b1).reshape(hp, Wp, cout)
    y2 = conv3x3(y1, w2_ref[...], s2, b2)
    o_ref[0] = y2.reshape(hp, Wp, cout)                  # lane-dense (Cout=128) store


def down_forward(x_nchw, w1, s1, b1, w2, s2, b2):
    """Down: MaxPool2d(2) -> (Conv3x3 -> BN(eval) -> ReLU) x 2.  NCHW in / NCHW out."""
    x = jnp.transpose(x_nchw, (0, 2, 3, 1))              # NCHW -> NHWC
    N, H, W, cin = x.shape
    cout = w1.shape[-1]
    hp, wp = H // 2, W // 2

    # Fold W into even/odd pairs so the in-kernel W-pooling is a lane-slice max.
    # (Order-preserving reshape; free.)
    x_pairs = x.reshape(N, H, wp, 2 * cin)

    # Pre-reshape conv weights (HWIO) to im2col matrices once on the host side.
    w1r = w1.reshape(9 * cin, cout)
    w2r = w2.reshape(9 * cout, cout)
    s1_ = s1.reshape(1, cout)
    b1_ = b1.reshape(1, cout)
    s2_ = s2.reshape(1, cout)
    b2_ = b2.reshape(1, cout)

    out_nhwc = pl.pallas_call(
        down_kernel,
        out_shape=jax.ShapeDtypeStruct((N, hp, wp, cout), jnp.float32),
        grid_spec=pltpu.PrefetchScalarGridSpec(
            num_scalar_prefetch=0,
            grid=(N,),
            in_specs=[
                pl.BlockSpec((1, H, wp, 2 * cin), lambda n: (n, 0, 0, 0)),
                pl.BlockSpec((9 * cin, cout), lambda n: (0, 0)),
                pl.BlockSpec((1, cout), lambda n: (0, 0)),
                pl.BlockSpec((1, cout), lambda n: (0, 0)),
                pl.BlockSpec((9 * cout, cout), lambda n: (0, 0)),
                pl.BlockSpec((1, cout), lambda n: (0, 0)),
                pl.BlockSpec((1, cout), lambda n: (0, 0)),
            ],
            out_specs=pl.BlockSpec((1, hp, wp, cout), lambda n: (n, 0, 0, 0)),
        ),
        compiler_params=pltpu.CompilerParams(
            dimension_semantics=("parallel",)),          # v7x: shard batch over 2 TCs
    )(x_pairs, w1r, s1_, b1_, w2r, s2_, b2_)

    return jnp.transpose(out_nhwc, (0, 3, 1, 2))         # NHWC -> NCHW


def init_params(key, cin, cout):
    """Deterministic synthetic params. Conv weights in HWIO; BN params raw."""
    ks = jax.random.split(key, 12)
    eps = 1e-5

    def conv_init(kw, kb, ci, co):
        fan_in = ci * 9
        bound = 1.0 / jnp.sqrt(jnp.float32(fan_in))
        w = jax.random.uniform(kw, (3, 3, ci, co), jnp.float32, -bound, bound)
        b = jax.random.uniform(kb, (co,), jnp.float32, -bound, bound)
        return w, b

    w1, bconv1 = conv_init(ks[0], ks[1], cin, cout)
    w2, bconv2 = conv_init(ks[2], ks[3], cout, cout)

    def bn_init(kg, kb, km, kv, co):
        gamma = jax.random.uniform(kg, (co,), jnp.float32, 0.5, 1.5)
        beta = jax.random.uniform(kb, (co,), jnp.float32, -0.5, 0.5)
        rmean = jax.random.uniform(km, (co,), jnp.float32, -0.5, 0.5)
        rvar = jax.random.uniform(kv, (co,), jnp.float32, 0.5, 1.5)
        return gamma, beta, rmean, rvar

    g1, be1, rm1, rv1 = bn_init(ks[4], ks[5], ks[6], ks[7], cout)
    g2, be2, rm2, rv2 = bn_init(ks[8], ks[9], ks[10], ks[11], cout)

    # Fold conv bias + inference-mode BN into per-channel scale / bias.
    s1 = g1 / jnp.sqrt(rv1 + eps)
    b1 = (bconv1 - rm1) * s1 + be1
    s2 = g2 / jnp.sqrt(rv2 + eps)
    b2 = (bconv2 - rm2) * s2 + be2

    raw = (w1, bconv1, g1, be1, rm1, rv1, w2, bconv2, g2, be2, rm2, rv2)
    folded = (w1, s1, b1, w2, s2, b2)
    return folded, raw


def ref_forward(x_nchw, raw):
    """Pure-JAX reference: MaxPool2d(2) -> (conv -> BN(eval) -> ReLU) x 2."""
    (w1, bc1, g1, be1, rm1, rv1, w2, bc2, g2, be2, rm2, rv2) = raw
    eps = 1e-5
    x = jnp.transpose(x_nchw, (0, 2, 3, 1))              # NHWC
    x = jax.lax.reduce_window(x, -jnp.inf, jax.lax.max,
                              (1, 2, 2, 1), (1, 2, 2, 1), "VALID")

    def block(x, w, bc, g, be, rm, rv):
        y = jax.lax.conv_general_dilated(
            x, w, window_strides=(1, 1), padding="SAME",
            dimension_numbers=("NHWC", "HWIO", "NHWC"),
            precision=jax.lax.Precision.HIGHEST) + bc
        y = (y - rm) / jnp.sqrt(rv + eps) * g + be
        return jnp.maximum(y, 0.0)

    y = block(x, w1, bc1, g1, be1, rm1, rv1)
    y = block(y, w2, bc2, g2, be2, rm2, rv2)
    return jnp.transpose(y, (0, 3, 1, 2))


if __name__ == "__main__":
    key = jax.random.PRNGKey(0)
    kx, kp = jax.random.split(key)

    # Realistic UNet Down channel counts so channels-last is lane-dense on TPU.
    N, Cin, Cout, H, W = 2, 64, 128, 32, 32
    x = jax.random.normal(kx, (N, Cin, H, W), jnp.float32)

    folded, raw = init_params(kp, Cin, Cout)

    out = down_forward(x, *folded)
    out = jax.block_until_ready(out)

    ref = ref_forward(x, raw)
    assert out.shape == (N, Cout, H // 2, W // 2), out.shape
    assert jnp.allclose(out, ref, atol=1e-3, rtol=1e-3), float(
        jnp.max(jnp.abs(out - ref)))

    print("KERNEL_OK")
</pallas_src>

<mosaic_0001>
module attributes {stable_mosaic.version = 11 : i64} {
  func.func @down_kernel(%arg0: i32, %arg1: memref<1x32x16x128xf32, #tpu.memory_space<vmem>>, %arg2: memref<576x128xf32, #tpu.memory_space<vmem>>, %arg3: memref<1x128xf32, #tpu.memory_space<vmem>>, %arg4: memref<1x128xf32, #tpu.memory_space<vmem>>, %arg5: memref<1152x128xf32, #tpu.memory_space<vmem>>, %arg6: memref<1x128xf32, #tpu.memory_space<vmem>>, %arg7: memref<1x128xf32, #tpu.memory_space<vmem>>, %arg8: memref<1x16x16x128xf32, #tpu.memory_space<vmem>>) attributes {dimension_semantics = [#tpu.dimension_semantics<parallel>], iteration_bounds = array<i64: 2>, scalar_prefetch = 0 : i64, scratch_operands = 0 : i64, tpu.core_type = #tpu.core_type<tc>, window_params = [{transform_indices = @transform_0, window_bounds = array<i64: 1, 32, 16, 128>}, {pipeline_mode = #tpu.pipeline_mode<synchronous>, transform_indices = @transform_1, window_bounds = array<i64: 576, 128>}, {pipeline_mode = #tpu.pipeline_mode<synchronous>, transform_indices = @transform_2, window_bounds = array<i64: 1, 128>}, {pipeline_mode = #tpu.pipeline_mode<synchronous>, transform_indices = @transform_3, window_bounds = array<i64: 1, 128>}, {pipeline_mode = #tpu.pipeline_mode<synchronous>, transform_indices = @transform_4, window_bounds = array<i64: 1152, 128>}, {pipeline_mode = #tpu.pipeline_mode<synchronous>, transform_indices = @transform_5, window_bounds = array<i64: 1, 128>}, {pipeline_mode = #tpu.pipeline_mode<synchronous>, transform_indices = @transform_6, window_bounds = array<i64: 1, 128>}, {transform_indices = @transform_7, window_bounds = array<i64: 1, 16, 16, 128>}]} {
    %c0 = arith.constant 0 : index
    %c0_0 = arith.constant 0 : index
    %c0_1 = arith.constant 0 : index
    %c0_2 = arith.constant 0 : index
    %0 = vector.load %arg1[%c0, %c0_0, %c0_1, %c0_2] : memref<1x32x16x128xf32, #tpu.memory_space<vmem>>, vector<1x32x16x128xf32>
    %1 = vector.shape_cast %0 : vector<1x32x16x128xf32> to vector<32x16x128xf32>
    %2 = vector.extract_strided_slice %1 {offsets = [0, 0, 0], sizes = [32, 16, 64], strides = [1, 1, 1]} : vector<32x16x128xf32> to vector<32x16x64xf32>
    %3 = vector.extract_strided_slice %1 {offsets = [0, 0, 64], sizes = [32, 16, 64], strides = [1, 1, 1]} : vector<32x16x128xf32> to vector<32x16x64xf32>
    %4 = arith.maximumf %2, %3 : vector<32x16x64xf32>
    %5 = vector.shape_cast %4 : vector<32x16x64xf32> to vector<16x2x16x64xf32>
    %6 = vector.extract_strided_slice %5 {offsets = [0, 0, 0, 0], sizes = [16, 1, 16, 64], strides = [1, 1, 1, 1]} : vector<16x2x16x64xf32> to vector<16x1x16x64xf32>
    %7 = vector.shape_cast %6 : vector<16x1x16x64xf32> to vector<16x16x64xf32>
    %8 = vector.extract_strided_slice %5 {offsets = [0, 1, 0, 0], sizes = [16, 1, 16, 64], strides = [1, 1, 1, 1]} : vector<16x2x16x64xf32> to vector<16x1x16x64xf32>
    %9 = vector.shape_cast %8 : vector<16x1x16x64xf32> to vector<16x16x64xf32>
    %10 = arith.maximumf %7, %9 : vector<16x16x64xf32>
    %c0_3 = arith.constant 0 : index
    %c0_4 = arith.constant 0 : index
    %11 = vector.load %arg3[%c0_3, %c0_4] : memref<1x128xf32, #tpu.memory_space<vmem>>, vector<1x128xf32>
    %c0_5 = arith.constant 0 : index
    %c0_6 = arith.constant 0 : index
    %12 = vector.load %arg4[%c0_5, %c0_6] : memref<1x128xf32, #tpu.memory_space<vmem>>, vector<1x128xf32>
    %c0_7 = arith.constant 0 : index
    %c0_8 = arith.constant 0 : index
    %13 = vector.load %arg6[%c0_7, %c0_8] : memref<1x128xf32, #tpu.memory_space<vmem>>, vector<1x128xf32>
    %c0_9 = arith.constant 0 : index
    %c0_10 = arith.constant 0 : index
    %14 = vector.load %arg7[%c0_9, %c0_10] : memref<1x128xf32, #tpu.memory_space<vmem>>, vector<1x128xf32>
    %c0_11 = arith.constant 0 : index
    %c0_12 = arith.constant 0 : index
    %15 = vector.load %arg2[%c0_11, %c0_12] : memref<576x128xf32, #tpu.memory_space<vmem>>, vector<576x128xf32>
    %cst = arith.constant 0.000000e+00 : f32
    %16 = vector.broadcast %cst : f32 to vector<16x1x64xf32>
    %17 = tpu.concatenate %16, %10, %16 in 1 : vector<16x1x64xf32>, vector<16x16x64xf32>, vector<16x1x64xf32> -> vector<16x18x64xf32>
    %cst_13 = arith.constant 0.000000e+00 : f32
    %18 = vector.broadcast %cst_13 : f32 to vector<1x18x64xf32>
    %19 = tpu.concatenate %18, %17, %18 in 0 : vector<1x18x64xf32>, vector<16x18x64xf32>, vector<1x18x64xf32> -> vector<18x18x64xf32>
    %20 = vector.extract_strided_slice %19 {offsets = [0, 0, 0], sizes = [16, 16, 64], strides = [1, 1, 1]} : vector<18x18x64xf32> to vector<16x16x64xf32>
    %21 = vector.extract_strided_slice %19 {offsets = [0, 1, 0], sizes = [16, 16, 64], strides = [1, 1, 1]} : vector<18x18x64xf32> to vector<16x16x64xf32>
    %22 = vector.extract_strided_slice %19 {offsets = [0, 2, 0], sizes = [16, 16, 64], strides = [1, 1, 1]} : vector<18x18x64xf32> to vector<16x16x64xf32>
    %23 = vector.extract_strided_slice %19 {offsets = [1, 0, 0], sizes = [16, 16, 64], strides = [1, 1, 1]} : vector<18x18x64xf32> to vector<16x16x64xf32>
    %24 = vector.extract_strided_slice %19 {offsets = [1, 1, 0], sizes = [16, 16, 64], strides = [1, 1, 1]} : vector<18x18x64xf32> to vector<16x16x64xf32>
    %25 = vector.extract_strided_slice %19 {offsets = [1, 2, 0], sizes = [16, 16, 64], strides = [1, 1, 1]} : vector<18x18x64xf32> to vector<16x16x64xf32>
    %26 = vector.extract_strided_slice %19 {offsets = [2, 0, 0], sizes = [16, 16, 64], strides = [1, 1, 1]} : vector<18x18x64xf32> to vector<16x16x64xf32>
    %27 = vector.extract_strided_slice %19 {offsets = [2, 1, 0], sizes = [16, 16, 64], strides = [1, 1, 1]} : vector<18x18x64xf32> to vector<16x16x64xf32>
    %28 = vector.extract_strided_slice %19 {offsets = [2, 2, 0], sizes = [16, 16, 64], strides = [1, 1, 1]} : vector<18x18x64xf32> to vector<16x16x64xf32>
    %29 = tpu.concatenate %20, %21, %22, %23, %24, %25, %26, %27, %28 in 2 : vector<16x16x64xf32>, vector<16x16x64xf32>, vector<16x16x64xf32>, vector<16x16x64xf32>, vector<16x16x64xf32>, vector<16x16x64xf32>, vector<16x16x64xf32>, vector<16x16x64xf32>, vector<16x16x64xf32> -> vector<16x16x576xf32>
    %30 = vector.shape_cast %29 : vector<16x16x576xf32> to vector<256x576xf32>
    %cst_14 = arith.constant dense<0.000000e+00> : vector<256x128xf32>
    %31 = tpu.matmul %30, %15, %cst_14 {dimension_numbers = #tpu.dot_dimension_numbers<[1], [0], [0], [1], [0, 0, 1, 1], [], []>} : vector<256x576xf32>, vector<576x128xf32>, vector<256x128xf32> -> vector<256x128xf32>
    %32 = vector.broadcast %11 : vector<1x128xf32> to vector<256x128xf32>
    %33 = arith.mulf %31, %32 : vector<256x128xf32>
    %34 = vector.broadcast %12 : vector<1x128xf32> to vector<256x128xf32>
    %35 = arith.addf %33, %34 : vector<256x128xf32>
    %cst_15 = arith.constant 0.000000e+00 : f32
    %36 = vector.broadcast %cst_15 : f32 to vector<256x128xf32>
    %37 = arith.maximumf %35, %36 : vector<256x128xf32>
    %38 = vector.shape_cast %37 : vector<256x128xf32> to vector<16x16x128xf32>
    %c0_16 = arith.constant 0 : index
    %c0_17 = arith.constant 0 : index
    %39 = vector.load %arg5[%c0_16, %c0_17] : memref<1152x128xf32, #tpu.memory_space<vmem>>, vector<1152x128xf32>
    %cst_18 = arith.constant 0.000000e+00 : f32
    %40 = vector.broadcast %cst_18 : f32 to vector<16x1x128xf32>
    %41 = tpu.concatenate %40, %38, %40 in 1 : vector<16x1x128xf32>, vector<16x16x128xf32>, vector<16x1x128xf32> -> vector<16x18x128xf32>
    %cst_19 = arith.constant 0.000000e+00 : f32
    %42 = vector.broadcast %cst_19 : f32 to vector<1x18x128xf32>
    %43 = tpu.concatenate %42, %41, %42 in 0 : vector<1x18x128xf32>, vector<16x18x128xf32>, vector<1x18x128xf32> -> vector<18x18x128xf32>
    %44 = vector.extract_strided_slice %43 {offsets = [0, 0, 0], sizes = [16, 16, 128], strides = [1, 1, 1]} : vector<18x18x128xf32> to vector<16x16x128xf32>
    %45 = vector.extract_strided_slice %43 {offsets = [0, 1, 0], sizes = [16, 16, 128], strides = [1, 1, 1]} : vector<18x18x128xf32> to vector<16x16x128xf32>
    %46 = vector.extract_strided_slice %43 {offsets = [0, 2, 0], sizes = [16, 16, 128], strides = [1, 1, 1]} : vector<18x18x128xf32> to vector<16x16x128xf32>
    %47 = vector.extract_strided_slice %43 {offsets = [1, 0, 0], sizes = [16, 16, 128], strides = [1, 1, 1]} : vector<18x18x128xf32> to vector<16x16x128xf32>
    %48 = vector.extract_strided_slice %43 {offsets = [1, 1, 0], sizes = [16, 16, 128], strides = [1, 1, 1]} : vector<18x18x128xf32> to vector<16x16x128xf32>
    %49 = vector.extract_strided_slice %43 {offsets = [1, 2, 0], sizes = [16, 16, 128], strides = [1, 1, 1]} : vector<18x18x128xf32> to vector<16x16x128xf32>
    %50 = vector.extract_strided_slice %43 {offsets = [2, 0, 0], sizes = [16, 16, 128], strides = [1, 1, 1]} : vector<18x18x128xf32> to vector<16x16x128xf32>
    %51 = vector.extract_strided_slice %43 {offsets = [2, 1, 0], sizes = [16, 16, 128], strides = [1, 1, 1]} : vector<18x18x128xf32> to vector<16x16x128xf32>
    %52 = vector.extract_strided_slice %43 {offsets = [2, 2, 0], sizes = [16, 16, 128], strides = [1, 1, 1]} : vector<18x18x128xf32> to vector<16x16x128xf32>
    %53 = tpu.concatenate %44, %45, %46, %47, %48, %49, %50, %51, %52 in 2 : vector<16x16x128xf32>, vector<16x16x128xf32>, vector<16x16x128xf32>, vector<16x16x128xf32>, vector<16x16x128xf32>, vector<16x16x128xf32>, vector<16x16x128xf32>, vector<16x16x128xf32>, vector<16x16x128xf32> -> vector<16x16x1152xf32>
    %54 = vector.shape_cast %53 : vector<16x16x1152xf32> to vector<256x1152xf32>
    %cst_20 = arith.constant dense<0.000000e+00> : vector<256x128xf32>
    %55 = tpu.matmul %54, %39, %cst_20 {dimension_numbers = #tpu.dot_dimension_numbers<[1], [0], [0], [1], [0, 0, 1, 1], [], []>} : vector<256x1152xf32>, vector<1152x128xf32>, vector<256x128xf32> -> vector<256x128xf32>
    %56 = vector.broadcast %13 : vector<1x128xf32> to vector<256x128xf32>
    %57 = arith.mulf %55, %56 : vector<256x128xf32>
    %58 = vector.broadcast %14 : vector<1x128xf32> to vector<256x128xf32>
    %59 = arith.addf %57, %58 : vector<256x128xf32>
    %cst_21 = arith.constant 0.000000e+00 : f32
    %60 = vector.broadcast %cst_21 : f32 to vector<256x128xf32>
    %61 = arith.maximumf %59, %60 : vector<256x128xf32>
    %62 = vector.shape_cast %61 : vector<256x128xf32> to vector<16x16x128xf32>
    %c0_22 = arith.constant 0 : index
    %c0_23 = arith.constant 0 : index
    %c0_24 = arith.constant 0 : index
    %c0_25 = arith.constant 0 : index
    %63 = vector.load %arg8[%c0_22, %c0_23, %c0_24, %c0_25] : memref<1x16x16x128xf32, #tpu.memory_space<vmem>>, vector<1x16x16x128xf32>
    %64 = vector.shape_cast %63 : vector<1x16x16x128xf32> to vector<16x16x128xf32>
    %65 = vector.shape_cast %62 : vector<16x16x128xf32> to vector<1x16x16x128xf32>
    tpu.vector_store %arg8[%c0_22, %c0_23, %c0_24, %c0_25], %65 {strides = array<i32>} : memref<1x16x16x128xf32, #tpu.memory_space<vmem>>, vector<1x16x16x128xf32>,
    return
  }
  func.func @transform_0(%arg0: i32) -> (i32, i32, i32, i32) {
    %c0_i32 = arith.constant 0 : i32
    %c0_i32_0 = arith.constant 0 : i32
    %c0_i32_1 = arith.constant 0 : i32
    %c0_i32_2 = arith.constant 0 : i32
    return %arg0, %c0_i32, %c0_i32_0, %c0_i32_1 : i32, i32, i32, i32
  }
  func.func @transform_1(%arg0: i32) -> (i32, i32) {
    %c0_i32 = arith.constant 0 : i32
    %c0_i32_0 = arith.constant 0 : i32
    %c0_i32_1 = arith.constant 0 : i32
    return %c0_i32, %c0_i32_0 : i32, i32
  }
  func.func @transform_2(%arg0: i32) -> (i32, i32) {
    %c0_i32 = arith.constant 0 : i32
    %c0_i32_0 = arith.constant 0 : i32
    %c0_i32_1 = arith.constant 0 : i32
    return %c0_i32, %c0_i32_0 : i32, i32
  }
  func.func @transform_3(%arg0: i32) -> (i32, i32) {
    %c0_i32 = arith.constant 0 : i32
    %c0_i32_0 = arith.constant 0 : i32
    %c0_i32_1 = arith.constant 0 : i32
    return %c0_i32, %c0_i32_0 : i32, i32
  }
  func.func @transform_4(%arg0: i32) -> (i32, i32) {
    %c0_i32 = arith.constant 0 : i32
    %c0_i32_0 = arith.constant 0 : i32
    %c0_i32_1 = arith.constant 0 : i32
    return %c0_i32, %c0_i32_0 : i32, i32
  }
  func.func @transform_5(%arg0: i32) -> (i32, i32) {
    %c0_i32 = arith.constant 0 : i32
    %c0_i32_0 = arith.constant 0 : i32
    %c0_i32_1 = arith.constant 0 : i32
    return %c0_i32, %c0_i32_0 : i32, i32
  }
  func.func @transform_6(%arg0: i32) -> (i32, i32) {
    %c0_i32 = arith.constant 0 : i32
    %c0_i32_0 = arith.constant 0 : i32
    %c0_i32_1 = arith.constant 0 : i32
    return %c0_i32, %c0_i32_0 : i32, i32
  }
  func.func @transform_7(%arg0: i32) -> (i32, i32, i32, i32) {
    %c0_i32 = arith.constant 0 : i32
    %c0_i32_0 = arith.constant 0 : i32
    %c0_i32_1 = arith.constant 0 : i32
    %c0_i32_2 = arith.constant 0 : i32
    return %arg0, %c0_i32, %c0_i32_0, %c0_i32_1 : i32, i32, i32, i32
  }
}

</mosaic_0001>

<llo_original>
// kernel: tpu_custom_call.1
$region0: #{tpu_custom_call.1}
  #allocation0 [shape = 'u32[]', space=smem, size = 0x4, offset = 0x4, fixed_abs, tag = 'smem constant byte address 0x4 - core index']
  #allocation1 [shape = 'u32[144,128]{1,0:T(1,128)}', space=vmem, size = 0x12000, scoped, tag = 'internal scratch']
  %s0 = inlined_call_operand.hbm [shape: f32[2,32,16,128], index: 0, kind: input, shape index: {}]
  %s1 = inlined_call_operand.hbm [shape: f32[576,128], index: 1, kind: input, shape index: {}]
  %s2 = inlined_call_operand.vmem [shape: f32[1,128], index: 2, kind: input, shape index: {}]
  %s3 = inlined_call_operand.vmem [shape: f32[1,128], index: 3, kind: input, shape index: {}]
  %s4 = inlined_call_operand.hbm [shape: f32[1152,128], index: 4, kind: input, shape index: {}]
  %s5 = inlined_call_operand.vmem [shape: f32[1,128], index: 5, kind: input, shape index: {}]
  %s6 = inlined_call_operand.vmem [shape: f32[1,128], index: 6, kind: input, shape index: {}]
  %s7 = inlined_call_operand.hbm [shape: f32[2,16,16,128], index: 7, kind: output, shape index: {}]
  %s8 = sld [smem:[#allocation0]]
  $region73: #{tpu_custom_call.1} parent=0
    _
  %s10 = ssub.s32 1, %s8
  %s11 = scalar_select 0, %s10, %s8
  $region1: #{tpu_custom_call.1} parent=0
    #allocation2 [shape = 'u8[524288]{0}', space=vmem, size = 0x80000, scoped, tag = 'input window, operand 0']
    #allocation3 [shape = 's32[2]{0}', space=sflag, size = 0x8, scoped, tag = 'scoped memory for tpu_custom_call.1']
    #allocation4 [shape = 's32[2]{0}', space=sflag, size = 0x8, scoped, tag = 'scoped memory for tpu_custom_call.1']
    #allocation5 [shape = 'u8[294912]{0}', space=vmem, size = 0x48000, scoped, tag = 'input window, operand 1, single buffered']
    #allocation6 [shape = 's32[1]{0}', space=sflag, size = 0x4, scoped, tag = 'scoped memory for tpu_custom_call.1']
    #allocation7 [shape = 'u8[589824]{0}', space=vmem, size = 0x90000, scoped, tag = 'input window, operand 4, single buffered']
    #allocation8 [shape = 'u8[262144]{0}', space=vmem, size = 0x40000, scoped, tag = 'output window, operand 0']
    %12 = vsyncpa [#allocation3], 0
    %s13 = scalar_lea.sflag [#allocation3], 1
    %14 = vsyncpa %s13, 0
    %15 = vsyncpa [#allocation6], 0
    %16 = vsyncpa [#allocation4], 0
    %s17 = scalar_lea.sflag [#allocation4], 1
    %18 = vsyncpa %s17, 0
    loop: start=0, step=1, limit=4
    $region2: #{tpu_custom_call.1} parent=1 // loop_pre_header
      _
    $region3: #{tpu_custom_call.1} parent=1 // loop_header
      %s20 = sphi 0, %s24
      %p21 = scmp.ge.s32.totalorder %s20, 4
      %s30 = sphi 0, %s32
      %s33 = sphi 0, %s30
      %s34 = sphi 0, %s33
      %s50 = sphi 0, %s34
      %s54 = sphi 0, %s54
      %s56 = sphi 0, %s54
      %s57 = sphi 0, %s56
      %s71 = sphi 0, %s57
      %s75 = sphi 0, %s75
      %s77 = sphi 0, %s75
      %s78 = sphi 0, %s77
      %s92 = sphi 0, %s78
      %s96 = sphi 0, %s96
      %s98 = sphi 0, %s96
      %s99 = sphi 0, %s98
      %s113 = sphi 0, %s99
      %s117 = sphi 0, %s117
      %s119 = sphi 0, %s117
      %s120 = sphi 0, %s119
      %s134 = sphi 0, %s120
      %s138 = sphi 0, %s138
      %s140 = sphi 0, %s138
      %s141 = sphi 0, %s140
      %s155 = sphi 0, %s141
      %s159 = sphi 0, %s159
      %s161 = sphi 0, %s159
      %s162 = sphi 0, %s161
      %s176 = sphi 0, %s162
      %s182 = sphi 0, %s184
      %s185 = sphi 0, %s182
      %s186 = sphi 0, %s185
      %s202 = sphi 0, %s186
    $region4: #{tpu_custom_call.1} parent=1 // loop_header_branch
      %23 = sbr.rel (%p21) target = $region8
    $region5: #{tpu_custom_call.1} parent=1 // loop_body
      %s25 = ssub.s32 %s20, 1
      %s26 = ssub.s32 %s20, 2
      %s27 = sadd.s32 %s20, 1
      %s28 = ssub.s32 %s20, %s27
      %p29 = scmp.eq.s32.totalorder %s28, 0
      %s31 = sadd.s32 %s30, 1
      %s32 = scalar_select %p29, %s30, %s31
      %p35 = pneg %p29
      %p36 = scmp.eq.s32.totalorder %s20, 1
      %p37 = por %p35, %p36
      %p38 = scmp.ne.s32.totalorder %s30, %s33
      %p39 = scmp.eq.s32.totalorder %s20, 0
      %p40 = por %p38, %p39
      %p41 = scmp.ne.s32.totalorder %s30, %s33
      %p42 = scmp.eq.s32.totalorder %s25, 1
      %p43 = por %p41, %p42
      %p44 = scmp.ne.s32.totalorder %s33, %s34
      %p45 = scmp.eq.s32.totalorder %s25, 0
      %p46 = por %p44, %p45
      %p47 = scmp.ne.s32.totalorder %s33, %s34
      %p48 = scmp.eq.s32.totalorder %s26, 1
      %p49 = por %p47, %p48
      %p51 = scmp.ne.s32.totalorder %s34, %s50
      %p52 = scmp.eq.s32.totalorder %s26, 0
      %p53 = por %p51, %p52
      %s55 = sadd.s32 %s54, 1
      %p58 = scmp.eq.s32.totalorder %s20, 1
      %p59 = scmp.ne.s32.totalorder %s54, %s56
      %p60 = scmp.eq.s32.totalorder %s20, 0
      %p61 = por %p59, %p60
      %p62 = scmp.ne.s32.totalorder %s54, %s56
      %p63 = scmp.eq.s32.totalorder %s25, 1
      %p64 = por %p62, %p63
      %p65 = scmp.ne.s32.totalorder %s56, %s57
      %p66 = scmp.eq.s32.totalorder %s25, 0
      %p67 = por %p65, %p66
      %p68 = scmp.ne.s32.totalorder %s56, %s57
      %p69 = scmp.eq.s32.totalorder %s26, 1
      %p70 = por %p68, %p69
      %p72 = scmp.ne.s32.totalorder %s57, %s71
      %p73 = scmp.eq.s32.totalorder %s26, 0
      %p74 = por %p72, %p73
      %s76 = sadd.s32 %s75, 1
      %p79 = scmp.eq.s32.totalorder %s20, 1
      %p80 = scmp.ne.s32.totalorder %s75, %s77
      %p81 = scmp.eq.s32.totalorder %s20, 0
      %p82 = por %p80, %p81
      %p83 = scmp.ne.s32.totalorder %s75, %s77
      %p84 = scmp.eq.s32.totalorder %s25, 1
      %p85 = por %p83, %p84
      %p86 = scmp.ne.s32.totalorder %s77, %s78
      %p87 = scmp.eq.s32.totalorder %s25, 0
      %p88 = por %p86, %p87
      %p89 = scmp.ne.s32.totalorder %s77, %s78
      %p90 = scmp.eq.s32.totalorder %s26, 1
      %p91 = por %p89, %p90
      %p93 = scmp.ne.s32.totalorder %s78, %s92
      %p94 = scmp.eq.s32.totalorder %s26, 0
      %p95 = por %p93, %p94
      %s97 = sadd.s32 %s96, 1
      %p100 = scmp.eq.s32.totalorder %s20, 1
      %p101 = scmp.ne.s32.totalorder %s96, %s98
      %p102 = scmp.eq.s32.totalorder %s20, 0
      %p103 = por %p101, %p102
      %p104 = scmp.ne.s32.totalorder %s96, %s98
      %p105 = scmp.eq.s32.totalorder %s25, 1
      %p106 = por %p104, %p105
      %p107 = scmp.ne.s32.totalorder %s98, %s99
      %p108 = scmp.eq.s32.totalorder %s25, 0
      %p109 = por %p107, %p108
      %p110 = scmp.ne.s32.totalorder %s98, %s99
      %p111 = scmp.eq.s32.totalorder %s26, 1
      %p112 = por %p110, %p111
      %p114 = scmp.ne.s32.totalorder %s99, %s113
      %p115 = scmp.eq.s32.totalorder %s26, 0
      %p116 = por %p114, %p115
      %s118 = sadd.s32 %s117, 1
      %p121 = scmp.eq.s32.totalorder %s20, 1
      %p122 = scmp.ne.s32.totalorder %s117, %s119
      %p123 = scmp.eq.s32.totalorder %s20, 0
      %p124 = por %p122, %p123
      %p125 = scmp.ne.s32.totalorder %s117, %s119
      %p126 = scmp.eq.s32.totalorder %s25, 1
      %p127 = por %p125, %p126
      %p128 = scmp.ne.s32.totalorder %s119, %s120
      %p129 = scmp.eq.s32.totalorder %s25, 0
      %p130 = por %p128, %p129
      %p131 = scmp.ne.s32.totalorder %s119, %s120
      %p132 = scmp.eq.s32.totalorder %s26, 1
      %p133 = por %p131, %p132
      %p135 = scmp.ne.s32.totalorder %s120, %s134
      %p136 = scmp.eq.s32.totalorder %s26, 0
      %p137 = por %p135, %p136
      %s139 = sadd.s32 %s138, 1
      %p142 = scmp.eq.s32.totalorder %s20, 1
      %p143 = scmp.ne.s32.totalorder %s138, %s140
      %p144 = scmp.eq.s32.totalorder %s20, 0
      %p145 = por %p143, %p144
      %p146 = scmp.ne.s32.totalorder %s138, %s140
      %p147 = scmp.eq.s32.totalorder %s25, 1
      %p148 = por %p146, %p147
      %p149 = scmp.ne.s32.totalorder %s140, %s141
      %p150 = scmp.eq.s32.totalorder %s25, 0
      %p151 = por %p149, %p150
      %p152 = scmp.ne.s32.totalorder %s140, %s141
      %p153 = scmp.eq.s32.totalorder %s26, 1
      %p154 = por %p152, %p153
      %p156 = scmp.ne.s32.totalorder %s141, %s155
      %p157 = scmp.eq.s32.totalorder %s26, 0
      %p158 = por %p156, %p157
      %s160 = sadd.s32 %s159, 1
      %p163 = scmp.eq.s32.totalorder %s20, 1
      %p164 = scmp.ne.s32.totalorder %s159, %s161
      %p165 = scmp.eq.s32.totalorder %s20, 0
      %p166 = por %p164, %p165
      %p167 = scmp.ne.s32.totalorder %s159, %s161
      %p168 = scmp.eq.s32.totalorder %s25, 1
      %p169 = por %p167, %p168
      %p170 = scmp.ne.s32.totalorder %s161, %s162
      %p171 = scmp.eq.s32.totalorder %s25, 0
      %p172 = por %p170, %p171
      %p173 = scmp.ne.s32.totalorder %s161, %s162
      %p174 = scmp.eq.s32.totalorder %s26, 1
      %p175 = por %p173, %p174
      %p177 = scmp.ne.s32.totalorder %s162, %s176
      %p178 = scmp.eq.s32.totalorder %s26, 0
      %p179 = por %p177, %p178
      %s180 = ssub.s32 %s20, %s27
      %p181 = scmp.eq.s32.totalorder %s180, 0
      %s183 = sadd.s32 %s182, 1
      %s184 = scalar_select %p181, %s182, %s183
      %p187 = pneg %p181
      %p188 = scmp.eq.s32.totalorder %s20, 1
      %p189 = por %p187, %p188
      %p190 = scmp.ne.s32.totalorder %s182, %s185
      %p191 = scmp.eq.s32.totalorder %s20, 0
      %p192 = por %p190, %p191
      %p193 = scmp.ne.s32.totalorder %s182, %s185
      %p194 = scmp.eq.s32.totalorder %s25, 1
      %p195 = por %p193, %p194
      %p196 = scmp.ne.s32.totalorder %s185, %s186
      %p197 = scmp.eq.s32.totalorder %s25, 0
      %p198 = por %p196, %p197
      %p199 = scmp.ne.s32.totalorder %s185, %s186
      %p200 = scmp.eq.s32.totalorder %s26, 1
      %p201 = por %p199, %p200
      %p203 = scmp.ne.s32.totalorder %s186, %s202
      %p204 = scmp.eq.s32.totalorder %s26, 0
      %p205 = por %p203, %p204
      %p206 = scmp.le.s32.totalorder 1, %s20
      %p207 = scmp.lt.s32.totalorder %s20, 3
      %p208 = pnand %p206, %p207
      %p209 = pneg %p208
      // Predicated region
      $region9: #{tpu_custom_call.1} parent=5 // pred_check
        _
      $region10: #{tpu_custom_call.1} parent=5 // pred_check_branch
        %211 = sbr.rel (%p208) target = $region12
      $region11: #{tpu_custom_call.1} parent=5 // pred_region
        %s212 = ssub.s32 %s20, 1
        // Predicated region
        $region13: #{tpu_custom_call.1} parent=11 // pred_check
          %p213 = pneg %p67
        $region14: #{tpu_custom_call.1} parent=11 // pred_check_branch
          %215 = sbr.rel (%p213) target = $region16
        $region15: #{tpu_custom_call.1} parent=11 // pred_region
          %s217 = ssub.s32 9216, 9216
          %218 = vsyncadd [#allocation6], %s217
          %s219 = sshll.u32 [#allocation5], 4
          %s220 = int_to_ptr.vmem [resolvable:$true] %s219
          %225 = dma.hbm_to_vmem [thread:$0]  %s1, 9216, %s220, [#allocation6], 128, 128, 8
        $region16: #{tpu_custom_call.1} parent=11 // pred_fallthru
          _
        // Predicated region
        $region17: #{tpu_custom_call.1} parent=11 // pred_check
          %p226 = pneg %p88
        $region18: #{tpu_custom_call.1} parent=11 // pred_check_branch
          %228 = sbr.rel (%p226) target = $region20
        $region19: #{tpu_custom_call.1} parent=11 // pred_region
          _
        $region20: #{tpu_custom_call.1} parent=11 // pred_fallthru
          _
        // Predicated region
        $region21: #{tpu_custom_call.1} parent=11 // pred_check
          %p229 = pneg %p109
        $region22: #{tpu_custom_call.1} parent=11 // pred_check_branch
          %231 = sbr.rel (%p229) target = $region24
        $region23: #{tpu_custom_call.1} parent=11 // pred_region
          _
        $region24: #{tpu_custom_call.1} parent=11 // pred_fallthru
          _
        // Predicated region
        $region25: #{tpu_custom_call.1} parent=11 // pred_check
          %p232 = pneg %p130
        $region26: #{tpu_custom_call.1} parent=11 // pred_check_branch
          %234 = sbr.rel (%p232) target = $region28
        $region27: #{tpu_custom_call.1} parent=11 // pred_region
          %s236 = ssub.s32 18432, 18432
          %237 = vsyncadd [#allocation6], %s236
          %s238 = sshll.u32 [#allocation7], 4
          %s239 = int_to_ptr.vmem [resolvable:$true] %s238
          %244 = dma.hbm_to_vmem [thread:$0]  %s4, 18432, %s239, [#allocation6], 128, 128, 8
        $region28: #{tpu_custom_call.1} parent=11 // pred_fallthru
          _
        // Predicated region
        $region29: #{tpu_custom_call.1} parent=11 // pred_check
          %p245 = pneg %p151
        $region30: #{tpu_custom_call.1} parent=11 // pred_check_branch
          %247 = sbr.rel (%p245) target = $region32
        $region31: #{tpu_custom_call.1} parent=11 // pred_region
          _
        $region32: #{tpu_custom_call.1} parent=11 // pred_fallthru
          _
        // Predicated region
        $region33: #{tpu_custom_call.1} parent=11 // pred_check
          %p248 = pneg %p172
        $region34: #{tpu_custom_call.1} parent=11 // pred_check_branch
          %250 = sbr.rel (%p248) target = $region36
        $region35: #{tpu_custom_call.1} parent=11 // pred_region
          _
        $region36: #{tpu_custom_call.1} parent=11 // pred_fallthru
          _
      $region12: #{tpu_custom_call.1} parent=5 // pred_fallthru
        _
      %p251 = scmp.lt.s32.totalorder %s20, 2
      // Predicated region
      $region37: #{tpu_custom_call.1} parent=5 // pred_check
        %p252 = pneg %p251
      $region38: #{tpu_custom_call.1} parent=5 // pred_check_branch
        %254 = sbr.rel (%p252) target = $region40
      $region39: #{tpu_custom_call.1} parent=5 // pred_region
        // Predicated region
        $region41: #{tpu_custom_call.1} parent=39 // pred_check
          %p255 = pneg %p40
        $region42: #{tpu_custom_call.1} parent=39 // pred_check_branch
          %257 = sbr.rel (%p255) target = $region44
        $region43: #{tpu_custom_call.1} parent=39 // pred_region
          %s258 = sand.u32 %s30, 1
          %s259 = scalar_lea.sflag [#allocation3], %s258
          %s260 = sand.u32 %s30, 1
          %s261 = smul.addr %s260, 512
          %s262 = scalar_lea.vmem [#allocation2], %s261
          %s264 = ssub.s32 8192, 8192
          %265 = vsyncadd %s259, %s264
          %s266 = smul.addr %s20, 64
          %s267 = smul.addr %s266, 128
          %s268 = scalar_lea.hbm %s0, %s267
          %s269 = sshll.u32 %s262, 4
          %s270 = int_to_ptr.vmem [resolvable:$true] %s269
          %275 = dma.hbm_to_vmem [thread:$0]  %s268, 8192, %s270, %s259, 128, 128, 8
        $region44: #{tpu_custom_call.1} parent=39 // pred_fallthru
          _
      $region40: #{tpu_custom_call.1} parent=5 // pred_fallthru
        _
      %p276 = scmp.le.s32.totalorder 1, %s20
      %p277 = scmp.lt.s32.totalorder %s20, 3
      %p278 = pnand %p276, %p277
      %p279 = pneg %p278
      // Predicated region
      $region45: #{tpu_custom_call.1} parent=5 // pred_check
        _
      $region46: #{tpu_custom_call.1} parent=5 // pred_check_branch
        %281 = sbr.rel (%p278) target = $region48
      $region47: #{tpu_custom_call.1} parent=5 // pred_region
        %s282 = ssub.s32 %s20, 1
        %s283 = sand.u32 %s33, 1
        %s284 = scalar_lea.sflag [#allocation3], %s283
        %s285 = sand.u32 %s33, 1
        %s286 = smul.addr %s285, 512
        %s287 = scalar_lea.vmem [#allocation2], %s286
        // Predicated region
        $region49: #{tpu_custom_call.1} parent=47 // pred_check
          %p288 = pneg %p46
        $region50: #{tpu_custom_call.1} parent=47 // pred_check_branch
          %290 = sbr.rel (%p288) target = $region52
        $region51: #{tpu_custom_call.1} parent=47 // pred_region
          %291 = dma.done %s284, 8192
        $region52: #{tpu_custom_call.1} parent=47 // pred_fallthru
          _
        // Predicated region
        $region53: #{tpu_custom_call.1} parent=47 // pred_check
          %p292 = pneg %p67
        $region54: #{tpu_custom_call.1} parent=47 // pred_check_branch
          %294 = sbr.rel (%p292) target = $region56
        $region55: #{tpu_custom_call.1} parent=47 // pred_region
          %295 = dma.done [#allocation6], 9216
        $region56: #{tpu_custom_call.1} parent=47 // pred_fallthru
          _
        // Predicated region
        $region57: #{tpu_custom_call.1} parent=47 // pred_check
          %p296 = pneg %p130
        $region58: #{tpu_custom_call.1} parent=47 // pred_check_branch
          %298 = sbr.rel (%p296) target = $region60
        $region59: #{tpu_custom_call.1} parent=47 // pred_region
          %299 = dma.done [#allocation6], 18432
        $region60: #{tpu_custom_call.1} parent=47 // pred_fallthru
          _
        %s300 = sand.u32 %s33, 1
        %s301 = scalar_lea.sflag [#allocation3], %s300
        %s302 = sand.u32 %s33, 1
        %s303 = smul.addr %s302, 512
        %s304 = scalar_lea.vmem [#allocation2], %s303
        %p305 = pneg %p46
        %p306 = pneg %p43
        %p307 = pneg %p67
        %p308 = pneg %p64
        %p309 = pneg %p88
        %p310 = pneg %p85
        %p311 = pneg %p109
        %p312 = pneg %p106
        %p313 = pneg %p130
        %p314 = pneg %p127
        %p315 = pneg %p151
        %p316 = pneg %p148
        %p317 = pneg %p172
        %p318 = pneg %p169
        %p319 = pneg %p198
        %p320 = pneg %p195
        %s321 = sand.u32 %s185, 1
        %s322 = scalar_lea.sflag [#allocation4], %s321
        %s323 = sand.u32 %s185, 1
        %s324 = smul.addr %s323, 256
        %s325 = scalar_lea.vmem [#allocation8], %s324
        %v326 = vld [vmem:[%s287] sm:$0xff]
        %v327 = vld [vmem:[%s287 + $0x8] sm:$0xff]
        %v328 = vld [vmem:[%s287 + $0x10] sm:$0xff]
        %v329 = vld [vmem:[%s287 + $0x18] sm:$0xff]
        %v330 = vld [vmem:[%s287 + $0x20] sm:$0xff]
        %v331 = vld [vmem:[%s287 + $0x28] sm:$0xff]
        %v332 = vld [vmem:[%s287 + $0x30] sm:$0xff]
        %v333 = vld [vmem:[%s287 + $0x38] sm:$0xff]
        %v334 = vld [vmem:[%s287 + $0x40] sm:$0xff]
        %v335 = vld [vmem:[%s287 + $0x48] sm:$0xff]
        %v336 = vld [vmem:[%s287 + $0x50] sm:$0xff]
        %v337 = vld [vmem:[%s287 + $0x58] sm:$0xff]
        %v338 = vld [vmem:[%s287 + $0x60] sm:$0xff]
        %v339 = vld [vmem:[%s287 + $0x68] sm:$0xff]
        %v340 = vld [vmem:[%s287 + $0x70] sm:$0xff]
        %v341 = vld [vmem:[%s287 + $0x78] sm:$0xff]
        %v342 = vld [vmem:[%s287 + $0x80] sm:$0xff]
        %v343 = vld [vmem:[%s287 + $0x88] sm:$0xff]
        %v344 = vld [vmem:[%s287 + $0x90] sm:$0xff]
        %v345 = vld [vmem:[%s287 + $0x98] sm:$0xff]
        %v346 = vld [vmem:[%s287 + $0xa0] sm:$0xff]
        %v347 = vld [vmem:[%s287 + $0xa8] sm:$0xff]
        %v348 = vld [vmem:[%s287 + $0xb0] sm:$0xff]
        %v349 = vld [vmem:[%s287 + $0xb8] sm:$0xff]
        %v350 = vld [vmem:[%s287 + $0xc0] sm:$0xff]
        %v351 = vld [vmem:[%s287 + $0xc8] sm:$0xff]
        %v352 = vld [vmem:[%s287 + $0xd0] sm:$0xff]
        %v353 = vld [vmem:[%s287 + $0xd8] sm:$0xff]
        %v354 = vld [vmem:[%s287 + $0xe0] sm:$0xff]
        %v355 = vld [vmem:[%s287 + $0xe8] sm:$0xff]
        %v356 = vld [vmem:[%s287 + $0xf0] sm:$0xff]
        %v357 = vld [vmem:[%s287 + $0xf8] sm:$0xff]
        %v358 = vld [vmem:[%s287 + $0x100] sm:$0xff]
        %v359 = vld [vmem:[%s287 + $0x108] sm:$0xff]
        %v360 = vld [vmem:[%s287 + $0x110] sm:$0xff]
        %v361 = vld [vmem:[%s287 + $0x118] sm:$0xff]
        %v362 = vld [vmem:[%s287 + $0x120] sm:$0xff]
        %v363 = vld [vmem:[%s287 + $0x128] sm:$0xff]
        %v364 = vld [vmem:[%s287 + $0x130] sm:$0xff]
        %v365 = vld [vmem:[%s287 + $0x138] sm:$0xff]
        %v366 = vld [vmem:[%s287 + $0x140] sm:$0xff]
        %v367 = vld [vmem:[%s287 + $0x148] sm:$0xff]
        %v368 = vld [vmem:[%s287 + $0x150] sm:$0xff]
        %v369 = vld [vmem:[%s287 + $0x158] sm:$0xff]
        %v370 = vld [vmem:[%s287 + $0x160] sm:$0xff]
        %v371 = vld [vmem:[%s287 + $0x168] sm:$0xff]
        %v372 = vld [vmem:[%s287 + $0x170] sm:$0xff]
        %v373 = vld [vmem:[%s287 + $0x178] sm:$0xff]
        %v374 = vld [vmem:[%s287 + $0x180] sm:$0xff]
        %v375 = vld [vmem:[%s287 + $0x188] sm:$0xff]
        %v376 = vld [vmem:[%s287 + $0x190] sm:$0xff]
        %v377 = vld [vmem:[%s287 + $0x198] sm:$0xff]
        %v378 = vld [vmem:[%s287 + $0x1a0] sm:$0xff]
        %v379 = vld [vmem:[%s287 + $0x1a8] sm:$0xff]
        %v380 = vld [vmem:[%s287 + $0x1b0] sm:$0xff]
        %v381 = vld [vmem:[%s287 + $0x1b8] sm:$0xff]
        %v382 = vld [vmem:[%s287 + $0x1c0] sm:$0xff]
        %v383 = vld [vmem:[%s287 + $0x1c8] sm:$0xff]
        %v384 = vld [vmem:[%s287 + $0x1d0] sm:$0xff]
        %v385 = vld [vmem:[%s287 + $0x1d8] sm:$0xff]
        %v386 = vld [vmem:[%s287 + $0x1e0] sm:$0xff]
        %v387 = vld [vmem:[%s287 + $0x1e8] sm:$0xff]
        %v388 = vld [vmem:[%s287 + $0x1f0] sm:$0xff]
        %v389 = vld [vmem:[%s287 + $0x1f8] sm:$0xff]
        %454 = vrot.lane.b32.xlu0 %v326, 64
        %v455 = vpop.permute.xlu0 %454
        %456 = vrot.lane.b32.xlu0 %v327, 64
        %v457 = vpop.permute.xlu0 %456
        %458 = vrot.lane.b32.xlu0 %v328, 64
        %v459 = vpop.permute.xlu0 %458
        %460 = vrot.lane.b32.xlu0 %v329, 64
        %v461 = vpop.permute.xlu0 %460
        %462 = vrot.lane.b32.xlu0 %v330, 64
        %v463 = vpop.permute.xlu0 %462
        %464 = vrot.lane.b32.xlu0 %v331, 64
        %v465 = vpop.permute.xlu0 %464
        %466 = vrot.lane.b32.xlu0 %v332, 64
        %v467 = vpop.permute.xlu0 %466
        %468 = vrot.lane.b32.xlu0 %v333, 64
        %v469 = vpop.permute.xlu0 %468
        %470 = vrot.lane.b32.xlu0 %v334, 64
        %v471 = vpop.permute.xlu0 %470
        %472 = vrot.lane.b32.xlu0 %v335, 64
        %v473 = vpop.permute.xlu0 %472
        %474 = vrot.lane.b32.xlu0 %v336, 64
        %v475 = vpop.permute.xlu0 %474
        %476 = vrot.lane.b32.xlu0 %v337, 64
        %v477 = vpop.permute.xlu0 %476
        %478 = vrot.lane.b32.xlu0 %v338, 64
        %v479 = vpop.permute.xlu0 %478
        %480 = vrot.lane.b32.xlu0 %v339, 64
        %v481 = vpop.permute.xlu0 %480
        %482 = vrot.lane.b32.xlu0 %v340, 64
        %v483 = vpop.permute.xlu0 %482
        %484 = vrot.lane.b32.xlu0 %v341, 64
        %v485 = vpop.permute.xlu0 %484
        %486 = vrot.lane.b32.xlu0 %v342, 64
        %v487 = vpop.permute.xlu0 %486
        %488 = vrot.lane.b32.xlu0 %v343, 64
        %v489 = vpop.permute.xlu0 %488
        %490 = vrot.lane.b32.xlu0 %v344, 64
        %v491 = vpop.permute.xlu0 %490
        %492 = vrot.lane.b32.xlu0 %v345, 64
        %v493 = vpop.permute.xlu0 %492
        %494 = vrot.lane.b32.xlu0 %v346, 64
        %v495 = vpop.permute.xlu0 %494
        %496 = vrot.lane.b32.xlu0 %v347, 64
        %v497 = vpop.permute.xlu0 %496
        %498 = vrot.lane.b32.xlu0 %v348, 64
        %v499 = vpop.permute.xlu0 %498
        %500 = vrot.lane.b32.xlu0 %v349, 64
        %v501 = vpop.permute.xlu0 %500
        %502 = vrot.lane.b32.xlu0 %v350, 64
        %v503 = vpop.permute.xlu0 %502
        %504 = vrot.lane.b32.xlu0 %v351, 64
        %v505 = vpop.permute.xlu0 %504
        %506 = vrot.lane.b32.xlu0 %v352, 64
        %v507 = vpop.permute.xlu0 %506
        %508 = vrot.lane.b32.xlu0 %v353, 64
        %v509 = vpop.permute.xlu0 %508
        %510 = vrot.lane.b32.xlu0 %v354, 64
        %v511 = vpop.permute.xlu0 %510
        %512 = vrot.lane.b32.xlu0 %v355, 64
        %v513 = vpop.permute.xlu0 %512
        %514 = vrot.lane.b32.xlu0 %v356, 64
        %v515 = vpop.permute.xlu0 %514
        %516 = vrot.lane.b32.xlu0 %v357, 64
        %v517 = vpop.permute.xlu0 %516
        %518 = vrot.lane.b32.xlu0 %v358, 64
        %v519 = vpop.permute.xlu0 %518
        %520 = vrot.lane.b32.xlu0 %v359, 64
        %v521 = vpop.permute.xlu0 %520
        %522 = vrot.lane.b32.xlu0 %v360, 64
        %v523 = vpop.permute.xlu0 %522
        %524 = vrot.lane.b32.xlu0 %v361, 64
        %v525 = vpop.permute.xlu0 %524
        %526 = vrot.lane.b32.xlu0 %v362, 64
        %v527 = vpop.permute.xlu0 %526
        %528 = vrot.lane.b32.xlu0 %v363, 64
        %v529 = vpop.permute.xlu0 %528
        %530 = vrot.lane.b32.xlu0 %v364, 64
        %v531 = vpop.permute.xlu0 %530
        %532 = vrot.lane.b32.xlu0 %v365, 64
        %v533 = vpop.permute.xlu0 %532
        %534 = vrot.lane.b32.xlu0 %v366, 64
        %v535 = vpop.permute.xlu0 %534
        %536 = vrot.lane.b32.xlu0 %v367, 64
        %v537 = vpop.permute.xlu0 %536
        %538 = vrot.lane.b32.xlu0 %v368, 64
        %v539 = vpop.permute.xlu0 %538
        %540 = vrot.lane.b32.xlu0 %v369, 64
        %v541 = vpop.permute.xlu0 %540
        %542 = vrot.lane.b32.xlu0 %v370, 64
        %v543 = vpop.permute.xlu0 %542
        %544 = vrot.lane.b32.xlu0 %v371, 64
        %v545 = vpop.permute.xlu0 %544
        %546 = vrot.lane.b32.xlu0 %v372, 64
        %v547 = vpop.permute.xlu0 %546
        %548 = vrot.lane.b32.xlu0 %v373, 64
        %v549 = vpop.permute.xlu0 %548
        %550 = vrot.lane.b32.xlu0 %v374, 64
        %v551 = vpop.permute.xlu0 %550
        %552 = vrot.lane.b32.xlu0 %v375, 64
        %v553 = vpop.permute.xlu0 %552
        %554 = vrot.lane.b32.xlu0 %v376, 64
        %v555 = vpop.permute.xlu0 %554
        %556 = vrot.lane.b32.xlu0 %v377, 64
        %v557 = vpop.permute.xlu0 %556
        %558 = vrot.lane.b32.xlu0 %v378, 64
        %v559 = vpop.permute.xlu0 %558
        %560 = vrot.lane.b32.xlu0 %v379, 64
        %v561 = vpop.permute.xlu0 %560
        %562 = vrot.lane.b32.xlu0 %v380, 64
        %v563 = vpop.permute.xlu0 %562
        %564 = vrot.lane.b32.xlu0 %v381, 64
        %v565 = vpop.permute.xlu0 %564
        %566 = vrot.lane.b32.xlu0 %v382, 64
        %v567 = vpop.permute.xlu0 %566
        %568 = vrot.lane.b32.xlu0 %v383, 64
        %v569 = vpop.permute.xlu0 %568
        %570 = vrot.lane.b32.xlu0 %v384, 64
        %v571 = vpop.permute.xlu0 %570
        %572 = vrot.lane.b32.xlu0 %v385, 64
        %v573 = vpop.permute.xlu0 %572
        %574 = vrot.lane.b32.xlu0 %v386, 64
        %v575 = vpop.permute.xlu0 %574
        %576 = vrot.lane.b32.xlu0 %v387, 64
        %v577 = vpop.permute.xlu0 %576
        %578 = vrot.lane.b32.xlu0 %v388, 64
        %v579 = vpop.permute.xlu0 %578
        %580 = vrot.lane.b32.xlu0 %v389, 64
        %v581 = vpop.permute.xlu0 %580
        %v646 = vmax.f32 %v326, %v455
        %v647 = vmax.f32 %v327, %v457
        %v648 = vmax.f32 %v328, %v459
        %v649 = vmax.f32 %v329, %v461
        %v650 = vmax.f32 %v330, %v463
        %v651 = vmax.f32 %v331, %v465
        %v652 = vmax.f32 %v332, %v467
        %v653 = vmax.f32 %v333, %v469
        %v654 = vmax.f32 %v334, %v471
        %v655 = vmax.f32 %v335, %v473
        %v656 = vmax.f32 %v336, %v475
        %v657 = vmax.f32 %v337, %v477
        %v658 = vmax.f32 %v338, %v479
        %v659 = vmax.f32 %v339, %v481
        %v660 = vmax.f32 %v340, %v483
        %v661 = vmax.f32 %v341, %v485
        %v662 = vmax.f32 %v342, %v487
        %v663 = vmax.f32 %v343, %v489
        %v664 = vmax.f32 %v344, %v491
        %v665 = vmax.f32 %v345, %v493
        %v666 = vmax.f32 %v346, %v495
        %v667 = vmax.f32 %v347, %v497
        %v668 = vmax.f32 %v348, %v499
        %v669 = vmax.f32 %v349, %v501
        %v670 = vmax.f32 %v350, %v503
        %v671 = vmax.f32 %v351, %v505
        %v672 = vmax.f32 %v352, %v507
        %v673 = vmax.f32 %v353, %v509
        %v674 = vmax.f32 %v354, %v511
        %v675 = vmax.f32 %v355, %v513
        %v676 = vmax.f32 %v356, %v515
        %v677 = vmax.f32 %v357, %v517
        %v678 = vmax.f32 %v358, %v519
        %v679 = vmax.f32 %v359, %v521
        %v680 = vmax.f32 %v360, %v523
        %v681 = vmax.f32 %v361, %v525
        %v682 = vmax.f32 %v362, %v527
        %v683 = vmax.f32 %v363, %v529
        %v684 = vmax.f32 %v364, %v531
        %v685 = vmax.f32 %v365, %v533
        %v686 = vmax.f32 %v366, %v535
        %v687 = vmax.f32 %v367, %v537
        %v688 = vmax.f32 %v368, %v539
        %v689 = vmax.f32 %v369, %v541
        %v690 = vmax.f32 %v370, %v543
        %v691 = vmax.f32 %v371, %v545
        %v692 = vmax.f32 %v372, %v547
        %v693 = vmax.f32 %v373, %v549
        %v694 = vmax.f32 %v374, %v551
        %v695 = vmax.f32 %v375, %v553
        %v696 = vmax.f32 %v376, %v555
        %v697 = vmax.f32 %v377, %v557
        %v698 = vmax.f32 %v378, %v559
        %v699 = vmax.f32 %v379, %v561
        %v700 = vmax.f32 %v380, %v563
        %v701 = vmax.f32 %v381, %v565
        %v702 = vmax.f32 %v382, %v567
        %v703 = vmax.f32 %v383, %v569
        %v704 = vmax.f32 %v384, %v571
        %v705 = vmax.f32 %v385, %v573
        %v706 = vmax.f32 %v386, %v575
        %v707 = vmax.f32 %v387, %v577
        %v708 = vmax.f32 %v388, %v579
        %v709 = vmax.f32 %v389, %v581
        %v710 = vmax.f32 %v646, %v648
        %v711 = vmax.f32 %v647, %v649
        %v712 = vmax.f32 %v650, %v652
        %v713 = vmax.f32 %v651, %v653
        %v714 = vmax.f32 %v654, %v656
        %v715 = vmax.f32 %v655, %v657
        %v716 = vmax.f32 %v658, %v660
        %v717 = vmax.f32 %v659, %v661
        %v718 = vmax.f32 %v662, %v664
        %v719 = vmax.f32 %v663, %v665
        %v720 = vmax.f32 %v666, %v668
        %v721 = vmax.f32 %v667, %v669
        %v722 = vmax.f32 %v670, %v672
        %v723 = vmax.f32 %v671, %v673
        %v724 = vmax.f32 %v674, %v676
        %v725 = vmax.f32 %v675, %v677
        %v726 = vmax.f32 %v678, %v680
        %v727 = vmax.f32 %v679, %v681
        %v728 = vmax.f32 %v682, %v684
        %v729 = vmax.f32 %v683, %v685
        %v730 = vmax.f32 %v686, %v688
        %v731 = vmax.f32 %v687, %v689
        %v732 = vmax.f32 %v690, %v692
        %v733 = vmax.f32 %v691, %v693
        %v734 = vmax.f32 %v694, %v696
        %v735 = vmax.f32 %v695, %v697
        %v736 = vmax.f32 %v698, %v700
        %v737 = vmax.f32 %v699, %v701
        %v738 = vmax.f32 %v702, %v704
        %v739 = vmax.f32 %v703, %v705
        %v740 = vmax.f32 %v706, %v708
        %v741 = vmax.f32 %v707, %v709
        %v742 = vld [vmem:[%s2] sm:$0x1]
        %v743 = vld [vmem:[%s3] sm:$0x1]
        %v744 = vld [vmem:[%s5] sm:$0x1]
        %v745 = vld [vmem:[%s6] sm:$0x1]
        %v746 = vld [vmem:[#allocation5] sm:$0xff]
        %v747 = vld [vmem:[#allocation5 + $0x8] sm:$0xff]
        %v748 = vld [vmem:[#allocation5 + $0x10] sm:$0xff]
        %v749 = vld [vmem:[#allocation5 + $0x18] sm:$0xff]
        %v750 = vld [vmem:[#allocation5 + $0x20] sm:$0xff]
        %v751 = vld [vmem:[#allocation5 + $0x28] sm:$0xff]
        %v752 = vld [vmem:[#allocation5 + $0x30] sm:$0xff]
        %v753 = vld [vmem:[#allocation5 + $0x38] sm:$0xff]
        %v754 = vld [vmem:[#allocation5 + $0x40] sm:$0xff]
        %v755 = vld [vmem:[#allocation5 + $0x48] sm:$0xff]
        %v756 = vld [vmem:[#allocation5 + $0x50] sm:$0xff]
        %v757 = vld [vmem:[#allocation5 + $0x58] sm:$0xff]
        %v758 = vld [vmem:[#allocation5 + $0x60] sm:$0xff]
        %v759 = vld [vmem:[#allocation5 + $0x68] sm:$0xff]
        %v760 = vld [vmem:[#allocation5 + $0x70] sm:$0xff]
        %v761 = vld [vmem:[#allocation5 + $0x78] sm:$0xff]
        %v762 = vld [vmem:[#allocation5 + $0x80] sm:$0xff]
        %v763 = vld [vmem:[#allocation5 + $0x88] sm:$0xff]
        %v764 = vld [vmem:[#allocation5 + $0x90] sm:$0xff]
        %v765 = vld [vmem:[#allocation5 + $0x98] sm:$0xff]
        %v766 = vld [vmem:[#allocation5 + $0xa0] sm:$0xff]
        %v767 = vld [vmem:[#allocation5 + $0xa8] sm:$0xff]
        %v768 = vld [vmem:[#allocation5 + $0xb0] sm:$0xff]
        %v769 = vld [vmem:[#allocation5 + $0xb8] sm:$0xff]
        %v770 = vld [vmem:[#allocation5 + $0xc0] sm:$0xff]
        %v771 = vld [vmem:[#allocation5 + $0xc8] sm:$0xff]
        %v772 = vld [vmem:[#allocation5 + $0xd0] sm:$0xff]
        %v773 = vld [vmem:[#allocation5 + $0xd8] sm:$0xff]
        %v774 = vld [vmem:[#allocation5 + $0xe0] sm:$0xff]
        %v775 = vld [vmem:[#allocation5 + $0xe8] sm:$0xff]
        %v776 = vld [vmem:[#allocation5 + $0xf0] sm:$0xff]
        %v777 = vld [vmem:[#allocation5 + $0xf8] sm:$0xff]
        %v778 = vld [vmem:[#allocation5 + $0x100] sm:$0xff]
        %v779 = vld [vmem:[#allocation5 + $0x108] sm:$0xff]
        %v780 = vld [vmem:[#allocation5 + $0x110] sm:$0xff]
        %v781 = vld [vmem:[#allocation5 + $0x118] sm:$0xff]
        %v782 = vld [vmem:[#allocation5 + $0x120] sm:$0xff]
        %v783 = vld [vmem:[#allocation5 + $0x128] sm:$0xff]
        %v784 = vld [vmem:[#allocation5 + $0x130] sm:$0xff]
        %v785 = vld [vmem:[#allocation5 + $0x138] sm:$0xff]
        %v786 = vld [vmem:[#allocation5 + $0x140] sm:$0xff]
        %v787 = vld [vmem:[#allocation5 + $0x148] sm:$0xff]
        %v788 = vld [vmem:[#allocation5 + $0x150] sm:$0xff]
        %v789 = vld [vmem:[#allocation5 + $0x158] sm:$0xff]
        %v790 = vld [vmem:[#allocation5 + $0x160] sm:$0xff]
        %v791 = vld [vmem:[#allocation5 + $0x168] sm:$0xff]
        %v792 = vld [vmem:[#allocation5 + $0x170] sm:$0xff]
        %v793 = vld [vmem:[#allocation5 + $0x178] sm:$0xff]
        %v794 = vld [vmem:[#allocation5 + $0x180] sm:$0xff]
        %v795 = vld [vmem:[#allocation5 + $0x188] sm:$0xff]
        %v796 = vld [vmem:[#allocation5 + $0x190] sm:$0xff]
        %v797 = vld [vmem:[#allocation5 + $0x198] sm:$0xff]
        %v798 = vld [vmem:[#allocation5 + $0x1a0] sm:$0xff]
        %v799 = vld [vmem:[#allocation5 + $0x1a8] sm:$0xff]
        %v800 = vld [vmem:[#allocation5 + $0x1b0] sm:$0xff]
        %v801 = vld [vmem:[#allocation5 + $0x1b8] sm:$0xff]
        %v802 = vld [vmem:[#allocation5 + $0x1c0] sm:$0xff]
        %v803 = vld [vmem:[#allocation5 + $0x1c8] sm:$0xff]
        %v804 = vld [vmem:[#allocation5 + $0x1d0] sm:$0xff]
        %v805 = vld [vmem:[#allocation5 + $0x1d8] sm:$0xff]
        %v806 = vld [vmem:[#allocation5 + $0x1e0] sm:$0xff]
        %v807 = vld [vmem:[#allocation5 + $0x1e8] sm:$0xff]
        %v808 = vld [vmem:[#allocation5 + $0x1f0] sm:$0xff]
        %v809 = vld [vmem:[#allocation5 + $0x1f8] sm:$0xff]
        %v810 = vld [vmem:[#allocation5 + $0x200] sm:$0xff]
        %v811 = vld [vmem:[#allocation5 + $0x208] sm:$0xff]
        %v812 = vld [vmem:[#allocation5 + $0x210] sm:$0xff]
        %v813 = vld [vmem:[#allocation5 + $0x218] sm:$0xff]
        %v814 = vld [vmem:[#allocation5 + $0x220] sm:$0xff]
        %v815 = vld [vmem:[#allocation5 + $0x228] sm:$0xff]
        %v816 = vld [vmem:[#allocation5 + $0x230] sm:$0xff]
        %v817 = vld [vmem:[#allocation5 + $0x238] sm:$0xff]
        %vm850 = vcmask 1040384
        %v851 = vrot.slane %v710, 7
        %v852 = vrot.slane %v711, 7
        %v853 = vsel %vm850, %v851, %v852
        %v854 = vrot.slane %v712, 7
        %v855 = vrot.slane %v713, 7
        %v856 = vsel %vm850, %v854, %v855
        %v857 = vrot.slane %v714, 7
        %v858 = vrot.slane %v715, 7
        %v859 = vsel %vm850, %v857, %v858
        %v860 = vrot.slane %v716, 7
        %v861 = vrot.slane %v717, 7
        %v862 = vsel %vm850, %v860, %v861
        %v863 = vrot.slane %v718, 7
        %v864 = vrot.slane %v719, 7
        %v865 = vsel %vm850, %v863, %v864
        %v866 = vrot.slane %v720, 7
        %v867 = vrot.slane %v721, 7
        %v868 = vsel %vm850, %v866, %v867
        %v869 = vrot.slane %v722, 7
        %v870 = vrot.slane %v723, 7
        %v871 = vsel %vm850, %v869, %v870
        %v872 = vrot.slane %v724, 7
        %v873 = vrot.slane %v725, 7
        %v874 = vsel %vm850, %v872, %v873
        %v875 = vrot.slane %v726, 7
        %v876 = vrot.slane %v727, 7
        %v877 = vsel %vm850, %v875, %v876
        %v878 = vrot.slane %v728, 7
        %v879 = vrot.slane %v729, 7
        %v880 = vsel %vm850, %v878, %v879
        %v881 = vrot.slane %v730, 7
        %v882 = vrot.slane %v731, 7
        %v883 = vsel %vm850, %v881, %v882
        %v884 = vrot.slane %v732, 7
        %v885 = vrot.slane %v733, 7
        %v886 = vsel %vm850, %v884, %v885
        %v887 = vrot.slane %v734, 7
        %v888 = vrot.slane %v735, 7
        %v889 = vsel %vm850, %v887, %v888
        %v890 = vrot.slane %v736, 7
        %v891 = vrot.slane %v737, 7
        %v892 = vsel %vm850, %v890, %v891
        %v893 = vrot.slane %v738, 7
        %v894 = vrot.slane %v739, 7
        %v895 = vsel %vm850, %v893, %v894
        %v896 = vrot.slane %v740, 7
        %v897 = vrot.slane %v741, 7
        %v898 = vsel %vm850, %v896, %v897
        %v947 = vsel %vm850, 0.0, %v851
        %v948 = vsel %vm850, 0.0, %v854
        %v949 = vsel %vm850, 0.0, %v857
        %v950 = vsel %vm850, 0.0, %v860
        %v951 = vsel %vm850, 0.0, %v863
        %v952 = vsel %vm850, 0.0, %v866
        %v953 = vsel %vm850, 0.0, %v869
        %v954 = vsel %vm850, 0.0, %v872
        %v955 = vsel %vm850, 0.0, %v875
        %v956 = vsel %vm850, 0.0, %v878
        %v957 = vsel %vm850, 0.0, %v881
        %v958 = vsel %vm850, 0.0, %v884
        %v959 = vsel %vm850, 0.0, %v887
        %v960 = vsel %vm850, 0.0, %v890
        %v961 = vsel %vm850, 0.0, %v893
        %v962 = vsel %vm850, 0.0, %v896
        %v963 = vsel %vm850, %v852, 0.0
        %v964 = vsel %vm850, %v855, 0.0
        %v965 = vsel %vm850, %v858, 0.0
        %v966 = vsel %vm850, %v861, 0.0
        %v967 = vsel %vm850, %v864, 0.0
        %v968 = vsel %vm850, %v867, 0.0
        %v969 = vsel %vm850, %v870, 0.0
        %v970 = vsel %vm850, %v873, 0.0
        %v971 = vsel %vm850, %v876, 0.0
        %v972 = vsel %vm850, %v879, 0.0
        %v973 = vsel %vm850, %v882, 0.0
        %v974 = vsel %vm850, %v885, 0.0
        %v975 = vsel %vm850, %v888, 0.0
        %v976 = vsel %vm850, %v891, 0.0
        %v977 = vsel %vm850, %v894, 0.0
        %v978 = vsel %vm850, %v897, 0.0
        %vm1010 = vcmask 1046528
        %v1011 = vrot.slane 0.0, 1
        %v1012 = vsel %vm1010, %v1011, %v1011
        %v1013 = vrot.slane %v947, 1
        %v1014 = vrot.slane %v853, 1
        %v1015 = vsel %vm1010, %v1013, %v1014
        %v1016 = vrot.slane %v963, 1
        %v1017 = vsel %vm1010, %v1014, %v1016
        %v1018 = vrot.slane %v948, 1
        %v1019 = vrot.slane %v856, 1
        %v1020 = vsel %vm1010, %v1018, %v1019
        %v1021 = vrot.slane %v964, 1
        %v1022 = vsel %vm1010, %v1019, %v1021
        %v1023 = vrot.slane %v949, 1
        %v1024 = vrot.slane %v859, 1
        %v1025 = vsel %vm1010, %v1023, %v1024
        %v1026 = vrot.slane %v965, 1
        %v1027 = vsel %vm1010, %v1024, %v1026
        %v1028 = vrot.slane %v950, 1
        %v1029 = vrot.slane %v862, 1
        %v1030 = vsel %vm1010, %v1028, %v1029
        %v1031 = vrot.slane %v966, 1
        %v1032 = vsel %vm1010, %v1029, %v1031
        %v1033 = vrot.slane %v951, 1
        %v1034 = vrot.slane %v865, 1
        %v1035 = vsel %vm1010, %v1033, %v1034
        %v1036 = vrot.slane %v967, 1
        %v1037 = vsel %vm1010, %v1034, %v1036
        %v1038 = vrot.slane %v952, 1
        %v1039 = vrot.slane %v868, 1
        %v1040 = vsel %vm1010, %v1038, %v1039
        %v1041 = vrot.slane %v968, 1
        %v1042 = vsel %vm1010, %v1039, %v1041
        %v1043 = vrot.slane %v953, 1
        %v1044 = vrot.slane %v871, 1
        %v1045 = vsel %vm1010, %v1043, %v1044
        %v1046 = vrot.slane %v969, 1
        %v1047 = vsel %vm1010, %v1044, %v1046
        %v1048 = vrot.slane %v954, 1
        %v1049 = vrot.slane %v874, 1
        %v1050 = vsel %vm1010, %v1048, %v1049
        %v1051 = vrot.slane %v970, 1
        %v1052 = vsel %vm1010, %v1049, %v1051
        %v1053 = vrot.slane %v955, 1
        %v1054 = vrot.slane %v877, 1
        %v1055 = vsel %vm1010, %v1053, %v1054
        %v1056 = vrot.slane %v971, 1
        %v1057 = vsel %vm1010, %v1054, %v1056
        %v1058 = vrot.slane %v956, 1
        %v1059 = vrot.slane %v880, 1
        %v1060 = vsel %vm1010, %v1058, %v1059
        %v1061 = vrot.slane %v972, 1
        %v1062 = vsel %vm1010, %v1059, %v1061
        %v1063 = vrot.slane %v957, 1
        %v1064 = vrot.slane %v883, 1
        %v1065 = vsel %vm1010, %v1063, %v1064
        %v1066 = vrot.slane %v973, 1
        %v1067 = vsel %vm1010, %v1064, %v1066
        %v1068 = vrot.slane %v958, 1
        %v1069 = vrot.slane %v886, 1
        %v1070 = vsel %vm1010, %v1068, %v1069
        %v1071 = vrot.slane %v974, 1
        %v1072 = vsel %vm1010, %v1069, %v1071
        %v1073 = vrot.slane %v959, 1
        %v1074 = vrot.slane %v889, 1
        %v1075 = vsel %vm1010, %v1073, %v1074
        %v1076 = vrot.slane %v975, 1
        %v1077 = vsel %vm1010, %v1074, %v1076
        %v1078 = vrot.slane %v960, 1
        %v1079 = vrot.slane %v892, 1
        %v1080 = vsel %vm1010, %v1078, %v1079
        %v1081 = vrot.slane %v976, 1
        %v1082 = vsel %vm1010, %v1079, %v1081
        %v1083 = vrot.slane %v961, 1
        %v1084 = vrot.slane %v895, 1
        %v1085 = vsel %vm1010, %v1083, %v1084
        %v1086 = vrot.slane %v977, 1
        %v1087 = vsel %vm1010, %v1084, %v1086
        %1088 = vrot.lane.b32.xlu0 %v1012, 64
        %v1089 = vpop.permute.xlu0 %1088
        %1090 = vrot.lane.b32.xlu0 %v1015, 64
        %v1091 = vpop.permute.xlu0 %1090
        %1092 = vrot.lane.b32.xlu0 %v1017, 64
        %v1093 = vpop.permute.xlu0 %1092
        %1094 = vrot.lane.b32.xlu0 %v1020, 64
        %v1095 = vpop.permute.xlu0 %1094
        %1096 = vrot.lane.b32.xlu0 %v1022, 64
        %v1097 = vpop.permute.xlu0 %1096
        %1098 = vrot.lane.b32.xlu0 %v1025, 64
        %v1099 = vpop.permute.xlu0 %1098
        %1100 = vrot.lane.b32.xlu0 %v1027, 64
        %v1101 = vpop.permute.xlu0 %1100
        %1102 = vrot.lane.b32.xlu0 %v1030, 64
        %v1103 = vpop.permute.xlu0 %1102
        %1104 = vrot.lane.b32.xlu0 %v1032, 64
        %v1105 = vpop.permute.xlu0 %1104
        %1106 = vrot.lane.b32.xlu0 %v1035, 64
        %v1107 = vpop.permute.xlu0 %1106
        %1108 = vrot.lane.b32.xlu0 %v1037, 64
        %v1109 = vpop.permute.xlu0 %1108
        %1110 = vrot.lane.b32.xlu0 %v1040, 64
        %v1111 = vpop.permute.xlu0 %1110
        %1112 = vrot.lane.b32.xlu0 %v1042, 64
        %v1113 = vpop.permute.xlu0 %1112
        %1114 = vrot.lane.b32.xlu0 %v1045, 64
        %v1115 = vpop.permute.xlu0 %1114
        %1116 = vrot.lane.b32.xlu0 %v1047, 64
        %v1117 = vpop.permute.xlu0 %1116
        %1118 = vrot.lane.b32.xlu0 %v1050, 64
        %v1119 = vpop.permute.xlu0 %1118
        %1120 = vrot.lane.b32.xlu0 %v1052, 64
        %v1121 = vpop.permute.xlu0 %1120
        %1122 = vrot.lane.b32.xlu0 %v1055, 64
        %v1123 = vpop.permute.xlu0 %1122
        %1124 = vrot.lane.b32.xlu0 %v1057, 64
        %v1125 = vpop.permute.xlu0 %1124
        %1126 = vrot.lane.b32.xlu0 %v1060, 64
        %v1127 = vpop.permute.xlu0 %1126
        %1128 = vrot.lane.b32.xlu0 %v1062, 64
        %v1129 = vpop.permute.xlu0 %1128
        %1130 = vrot.lane.b32.xlu0 %v1065, 64
        %v1131 = vpop.permute.xlu0 %1130
        %1132 = vrot.lane.b32.xlu0 %v1067, 64
        %v1133 = vpop.permute.xlu0 %1132
        %1134 = vrot.lane.b32.xlu0 %v1070, 64
        %v1135 = vpop.permute.xlu0 %1134
        %1136 = vrot.lane.b32.xlu0 %v1072, 64
        %v1137 = vpop.permute.xlu0 %1136
        %1138 = vrot.lane.b32.xlu0 %v1075, 64
        %v1139 = vpop.permute.xlu0 %1138
        %1140 = vrot.lane.b32.xlu0 %v1077, 64
        %v1141 = vpop.permute.xlu0 %1140
        %1142 = vrot.lane.b32.xlu0 %v1080, 64
        %v1143 = vpop.permute.xlu0 %1142
        %1144 = vrot.lane.b32.xlu0 %v1082, 64
        %v1145 = vpop.permute.xlu0 %1144
        %1146 = vrot.lane.b32.xlu0 %v1085, 64
        %v1147 = vpop.permute.xlu0 %1146
        %1148 = vrot.lane.b32.xlu0 %v1087, 64
        %v1149 = vpop.permute.xlu0 %1148
        %vm1181 = vcmask 1045504
        %v1182 = vrot.slane 0.0, 2
        %v1183 = vsel %vm1181, %v1182, %v1182
        %v1184 = vrot.slane %v947, 2
        %v1185 = vrot.slane %v853, 2
        %v1186 = vsel %vm1181, %v1184, %v1185
        %v1187 = vrot.slane %v963, 2
        %v1188 = vsel %vm1181, %v1185, %v1187
        %v1189 = vrot.slane %v948, 2
        %v1190 = vrot.slane %v856, 2
        %v1191 = vsel %vm1181, %v1189, %v1190
        %v1192 = vrot.slane %v964, 2
        %v1193 = vsel %vm1181, %v1190, %v1192
        %v1194 = vrot.slane %v949, 2
        %v1195 = vrot.slane %v859, 2
        %v1196 = vsel %vm1181, %v1194, %v1195
        %v1197 = vrot.slane %v965, 2
        %v1198 = vsel %vm1181, %v1195, %v1197
        %v1199 = vrot.slane %v950, 2
        %v1200 = vrot.slane %v862, 2
        %v1201 = vsel %vm1181, %v1199, %v1200
        %v1202 = vrot.slane %v966, 2
        %v1203 = vsel %vm1181, %v1200, %v1202
        %v1204 = vrot.slane %v951, 2
        %v1205 = vrot.slane %v865, 2
        %v1206 = vsel %vm1181, %v1204, %v1205
        %v1207 = vrot.slane %v967, 2
        %v1208 = vsel %vm1181, %v1205, %v1207
        %v1209 = vrot.slane %v952, 2
        %v1210 = vrot.slane %v868, 2
        %v1211 = vsel %vm1181, %v1209, %v1210
        %v1212 = vrot.slane %v968, 2
        %v1213 = vsel %vm1181, %v1210, %v1212
        %v1214 = vrot.slane %v953, 2
        %v1215 = vrot.slane %v871, 2
        %v1216 = vsel %vm1181, %v1214, %v1215
        %v1217 = vrot.slane %v969, 2
        %v1218 = vsel %vm1181, %v1215, %v1217
        %v1219 = vrot.slane %v954, 2
        %v1220 = vrot.slane %v874, 2
        %v1221 = vsel %vm1181, %v1219, %v1220
        %v1222 = vrot.slane %v970, 2
        %v1223 = vsel %vm1181, %v1220, %v1222
        %v1224 = vrot.slane %v955, 2
        %v1225 = vrot.slane %v877, 2
        %v1226 = vsel %vm1181, %v1224, %v1225
        %v1227 = vrot.slane %v971, 2
        %v1228 = vsel %vm1181, %v1225, %v1227
        %v1229 = vrot.slane %v956, 2
        %v1230 = vrot.slane %v880, 2
        %v1231 = vsel %vm1181, %v1229, %v1230
        %v1232 = vrot.slane %v972, 2
        %v1233 = vsel %vm1181, %v1230, %v1232
        %v1234 = vrot.slane %v957, 2
        %v1235 = vrot.slane %v883, 2
        %v1236 = vsel %vm1181, %v1234, %v1235
        %v1237 = vrot.slane %v973, 2
        %v1238 = vsel %vm1181, %v1235, %v1237
        %v1239 = vrot.slane %v958, 2
        %v1240 = vrot.slane %v886, 2
        %v1241 = vsel %vm1181, %v1239, %v1240
        %v1242 = vrot.slane %v974, 2
        %v1243 = vsel %vm1181, %v1240, %v1242
        %v1244 = vrot.slane %v959, 2
        %v1245 = vrot.slane %v889, 2
        %v1246 = vsel %vm1181, %v1244, %v1245
        %v1247 = vrot.slane %v975, 2
        %v1248 = vsel %vm1181, %v1245, %v1247
        %v1249 = vrot.slane %v960, 2
        %v1250 = vrot.slane %v892, 2
        %v1251 = vsel %vm1181, %v1249, %v1250
        %v1252 = vrot.slane %v976, 2
        %v1253 = vsel %vm1181, %v1250, %v1252
        %v1254 = vrot.slane %v961, 2
        %v1255 = vrot.slane %v895, 2
        %v1256 = vsel %vm1181, %v1254, %v1255
        %v1257 = vrot.slane %v977, 2
        %v1258 = vsel %vm1181, %v1255, %v1257
        %1291 = vrot.lane.b32.xlu0 %v947, 64
        %v1292 = vpop.permute.xlu0 %1291
        %1293 = vrot.lane.b32.xlu0 %v853, 64
        %v1294 = vpop.permute.xlu0 %1293
        %1295 = vrot.lane.b32.xlu0 %v948, 64
        %v1296 = vpop.permute.xlu0 %1295
        %1297 = vrot.lane.b32.xlu0 %v856, 64
        %v1298 = vpop.permute.xlu0 %1297
        %1299 = vrot.lane.b32.xlu0 %v949, 64
        %v1300 = vpop.permute.xlu0 %1299
        %1301 = vrot.lane.b32.xlu0 %v859, 64
        %v1302 = vpop.permute.xlu0 %1301
        %1303 = vrot.lane.b32.xlu0 %v950, 64
        %v1304 = vpop.permute.xlu0 %1303
        %1305 = vrot.lane.b32.xlu0 %v862, 64
        %v1306 = vpop.permute.xlu0 %1305
        %1307 = vrot.lane.b32.xlu0 %v951, 64
        %v1308 = vpop.permute.xlu0 %1307
        %1309 = vrot.lane.b32.xlu0 %v865, 64
        %v1310 = vpop.permute.xlu0 %1309
        %1311 = vrot.lane.b32.xlu0 %v952, 64
        %v1312 = vpop.permute.xlu0 %1311
        %1313 = vrot.lane.b32.xlu0 %v868, 64
        %v1314 = vpop.permute.xlu0 %1313
        %1315 = vrot.lane.b32.xlu0 %v953, 64
        %v1316 = vpop.permute.xlu0 %1315
        %1317 = vrot.lane.b32.xlu0 %v871, 64
        %v1318 = vpop.permute.xlu0 %1317
        %1319 = vrot.lane.b32.xlu0 %v954, 64
        %v1320 = vpop.permute.xlu0 %1319
        %1321 = vrot.lane.b32.xlu0 %v874, 64
        %v1322 = vpop.permute.xlu0 %1321
        %1323 = vrot.lane.b32.xlu0 %v955, 64
        %v1324 = vpop.permute.xlu0 %1323
        %1325 = vrot.lane.b32.xlu0 %v877, 64
        %v1326 = vpop.permute.xlu0 %1325
        %1327 = vrot.lane.b32.xlu0 %v956, 64
        %v1328 = vpop.permute.xlu0 %1327
        %1329 = vrot.lane.b32.xlu0 %v880, 64
        %v1330 = vpop.permute.xlu0 %1329
        %1331 = vrot.lane.b32.xlu0 %v957, 64
        %v1332 = vpop.permute.xlu0 %1331
        %1333 = vrot.lane.b32.xlu0 %v883, 64
        %v1334 = vpop.permute.xlu0 %1333
        %1335 = vrot.lane.b32.xlu0 %v958, 64
        %v1336 = vpop.permute.xlu0 %1335
        %1337 = vrot.lane.b32.xlu0 %v886, 64
        %v1338 = vpop.permute.xlu0 %1337
        %1339 = vrot.lane.b32.xlu0 %v959, 64
        %v1340 = vpop.permute.xlu0 %1339
        %1341 = vrot.lane.b32.xlu0 %v889, 64
        %v1342 = vpop.permute.xlu0 %1341
        %1343 = vrot.lane.b32.xlu0 %v960, 64
        %v1344 = vpop.permute.xlu0 %1343
        %1345 = vrot.lane.b32.xlu0 %v892, 64
        %v1346 = vpop.permute.xlu0 %1345
        %1347 = vrot.lane.b32.xlu0 %v961, 64
        %v1348 = vpop.permute.xlu0 %1347
        %1349 = vrot.lane.b32.xlu0 %v895, 64
        %v1350 = vpop.permute.xlu0 %1349
        %1351 = vrot.lane.b32.xlu0 %v962, 64
        %v1352 = vpop.permute.xlu0 %1351
        %1353 = vrot.lane.b32.xlu0 %v898, 64
        %v1354 = vpop.permute.xlu0 %1353
        %v1388 = vrot.slane %v962, 1
        %v1389 = vrot.slane %v898, 1
        %v1390 = vsel %vm1010, %v1388, %v1389
        %v1391 = vrot.slane %v978, 1
        %v1392 = vsel %vm1010, %v1389, %v1391
        %v1425 = vrot.slane %v962, 2
        %v1426 = vrot.slane %v898, 2
        %v1427 = vsel %vm1181, %v1425, %v1426
        %v1428 = vrot.slane %v978, 2
        %v1429 = vsel %vm1181, %v1426, %v1428
        %1430 = vrot.lane.b32.xlu0 %v1186, 64
        %v1431 = vpop.permute.xlu0 %1430
        %1432 = vrot.lane.b32.xlu0 %v1188, 64
        %v1433 = vpop.permute.xlu0 %1432
        %1434 = vrot.lane.b32.xlu0 %v1191, 64
        %v1435 = vpop.permute.xlu0 %1434
        %1436 = vrot.lane.b32.xlu0 %v1193, 64
        %v1437 = vpop.permute.xlu0 %1436
        %1438 = vrot.lane.b32.xlu0 %v1196, 64
        %v1439 = vpop.permute.xlu0 %1438
        %1440 = vrot.lane.b32.xlu0 %v1198, 64
        %v1441 = vpop.permute.xlu0 %1440
        %1442 = vrot.lane.b32.xlu0 %v1201, 64
        %v1443 = vpop.permute.xlu0 %1442
        %1444 = vrot.lane.b32.xlu0 %v1203, 64
        %v1445 = vpop.permute.xlu0 %1444
        %1446 = vrot.lane.b32.xlu0 %v1206, 64
        %v1447 = vpop.permute.xlu0 %1446
        %1448 = vrot.lane.b32.xlu0 %v1208, 64
        %v1449 = vpop.permute.xlu0 %1448
        %1450 = vrot.lane.b32.xlu0 %v1211, 64
        %v1451 = vpop.permute.xlu0 %1450
        %1452 = vrot.lane.b32.xlu0 %v1213, 64
        %v1453 = vpop.permute.xlu0 %1452
        %1454 = vrot.lane.b32.xlu0 %v1216, 64
        %v1455 = vpop.permute.xlu0 %1454
        %1456 = vrot.lane.b32.xlu0 %v1218, 64
        %v1457 = vpop.permute.xlu0 %1456
        %1458 = vrot.lane.b32.xlu0 %v1221, 64
        %v1459 = vpop.permute.xlu0 %1458
        %1460 = vrot.lane.b32.xlu0 %v1223, 64
        %v1461 = vpop.permute.xlu0 %1460
        %1462 = vrot.lane.b32.xlu0 %v1226, 64
        %v1463 = vpop.permute.xlu0 %1462
        %1464 = vrot.lane.b32.xlu0 %v1228, 64
        %v1465 = vpop.permute.xlu0 %1464
        %1466 = vrot.lane.b32.xlu0 %v1231, 64
        %v1467 = vpop.permute.xlu0 %1466
        %1468 = vrot.lane.b32.xlu0 %v1233, 64
        %v1469 = vpop.permute.xlu0 %1468
        %1470 = vrot.lane.b32.xlu0 %v1236, 64
        %v1471 = vpop.permute.xlu0 %1470
        %1472 = vrot.lane.b32.xlu0 %v1238, 64
        %v1473 = vpop.permute.xlu0 %1472
        %1474 = vrot.lane.b32.xlu0 %v1241, 64
        %v1475 = vpop.permute.xlu0 %1474
        %1476 = vrot.lane.b32.xlu0 %v1243, 64
        %v1477 = vpop.permute.xlu0 %1476
        %1478 = vrot.lane.b32.xlu0 %v1246, 64
        %v1479 = vpop.permute.xlu0 %1478
        %1480 = vrot.lane.b32.xlu0 %v1248, 64
        %v1481 = vpop.permute.xlu0 %1480
        %1482 = vrot.lane.b32.xlu0 %v1251, 64
        %v1483 = vpop.permute.xlu0 %1482
        %1484 = vrot.lane.b32.xlu0 %v1253, 64
        %v1485 = vpop.permute.xlu0 %1484
        %1486 = vrot.lane.b32.xlu0 %v1256, 64
        %v1487 = vpop.permute.xlu0 %1486
        %1488 = vrot.lane.b32.xlu0 %v1258, 64
        %v1489 = vpop.permute.xlu0 %1488
        %1490 = vrot.lane.b32.xlu0 %v1427, 64
        %v1491 = vpop.permute.xlu0 %1490
        %1492 = vrot.lane.b32.xlu0 %v1429, 64
        %v1493 = vpop.permute.xlu0 %1492
        %1526 = vrot.lane.b32.xlu0 %v1390, 64
        %v1527 = vpop.permute.xlu0 %1526
        %1528 = vrot.lane.b32.xlu0 %v1392, 64
        %v1529 = vpop.permute.xlu0 %1528
        %vm1532 = vcmask 523264
        %v1533 = vsel %vm1532, 0.0, %v1089
        %v1534 = vsel %vm1532, %v947, %v1091
        %v1535 = vsel %vm1532, %v853, %v1093
        %v1536 = vsel %vm1532, %v948, %v1095
        %v1537 = vsel %vm1532, %v856, %v1097
        %v1538 = vsel %vm1532, %v949, %v1099
        %v1539 = vsel %vm1532, %v859, %v1101
        %v1540 = vsel %vm1532, %v950, %v1103
        %v1541 = vsel %vm1532, %v862, %v1105
        %v1542 = vsel %vm1532, %v951, %v1107
        %v1543 = vsel %vm1532, %v865, %v1109
        %v1544 = vsel %vm1532, %v952, %v1111
        %v1545 = vsel %vm1532, %v868, %v1113
        %v1546 = vsel %vm1532, %v953, %v1115
        %v1547 = vsel %vm1532, %v871, %v1117
        %v1548 = vsel %vm1532, %v954, %v1119
        %v1549 = vsel %vm1532, %v874, %v1121
        %v1550 = vsel %vm1532, %v955, %v1123
        %v1551 = vsel %vm1532, %v877, %v1125
        %v1552 = vsel %vm1532, %v956, %v1127
        %v1553 = vsel %vm1532, %v880, %v1129
        %v1554 = vsel %vm1532, %v957, %v1131
        %v1555 = vsel %vm1532, %v883, %v1133
        %v1556 = vsel %vm1532, %v958, %v1135
        %v1557 = vsel %vm1532, %v886, %v1137
        %v1558 = vsel %vm1532, %v959, %v1139
        %v1559 = vsel %vm1532, %v889, %v1141
        %v1560 = vsel %vm1532, %v960, %v1143
        %v1561 = vsel %vm1532, %v892, %v1145
        %v1562 = vsel %vm1532, %v961, %v1147
        %v1563 = vsel %vm1532, %v895, %v1149
        %v1564 = vsel %vm1532, %v1183, %v1292
        %v1565 = vsel %vm1532, %v1183, %v1294
        %v1566 = vsel %vm1532, %v1186, %v1296
        %v1567 = vsel %vm1532, %v1188, %v1298
        %v1568 = vsel %vm1532, %v1191, %v1300
        %v1569 = vsel %vm1532, %v1193, %v1302
        %v1570 = vsel %vm1532, %v1196, %v1304
        %v1571 = vsel %vm1532, %v1198, %v1306
        %v1572 = vsel %vm1532, %v1201, %v1308
        %v1573 = vsel %vm1532, %v1203, %v1310
        %v1574 = vsel %vm1532, %v1206, %v1312
        %v1575 = vsel %vm1532, %v1208, %v1314
        %v1576 = vsel %vm1532, %v1211, %v1316
        %v1577 = vsel %vm1532, %v1213, %v1318
        %v1578 = vsel %vm1532, %v1216, %v1320
        %v1579 = vsel %vm1532, %v1218, %v1322
        %v1580 = vsel %vm1532, %v1221, %v1324
        %v1581 = vsel %vm1532, %v1223, %v1326
        %v1582 = vsel %vm1532, %v1226, %v1328
        %v1583 = vsel %vm1532, %v1228, %v1330
        %v1584 = vsel %vm1532, %v1231, %v1332
        %v1585 = vsel %vm1532, %v1233, %v1334
        %v1586 = vsel %vm1532, %v1236, %v1336
        %v1587 = vsel %vm1532, %v1238, %v1338
        %v1588 = vsel %vm1532, %v1241, %v1340
        %v1589 = vsel %vm1532, %v1243, %v1342
        %v1590 = vsel %vm1532, %v1246, %v1344
        %v1591 = vsel %vm1532, %v1248, %v1346
        %v1592 = vsel %vm1532, %v1251, %v1348
        %v1593 = vsel %vm1532, %v1253, %v1350
        %v1594 = vsel %vm1532, %v1256, %v1352
        %v1595 = vsel %vm1532, %v1258, %v1354
        %v1596 = vsel %vm1532, %v1015, %v1431
        %v1597 = vsel %vm1532, %v1017, %v1433
        %v1598 = vsel %vm1532, %v1020, %v1435
        %v1599 = vsel %vm1532, %v1022, %v1437
        %v1600 = vsel %vm1532, %v1025, %v1439
        %v1601 = vsel %vm1532, %v1027, %v1441
        %v1602 = vsel %vm1532, %v1030, %v1443
        %v1603 = vsel %vm1532, %v1032, %v1445
        %v1604 = vsel %vm1532, %v1035, %v1447
        %v1605 = vsel %vm1532, %v1037, %v1449
        %v1606 = vsel %vm1532, %v1040, %v1451
        %v1607 = vsel %vm1532, %v1042, %v1453
        %v1608 = vsel %vm1532, %v1045, %v1455
        %v1609 = vsel %vm1532, %v1047, %v1457
        %v1610 = vsel %vm1532, %v1050, %v1459
        %v1611 = vsel %vm1532, %v1052, %v1461
        %v1612 = vsel %vm1532, %v1055, %v1463
        %v1613 = vsel %vm1532, %v1057, %v1465
        %v1614 = vsel %vm1532, %v1060, %v1467
        %v1615 = vsel %vm1532, %v1062, %v1469
        %v1616 = vsel %vm1532, %v1065, %v1471
        %v1617 = vsel %vm1532, %v1067, %v1473
        %v1618 = vsel %vm1532, %v1070, %v1475
        %v1619 = vsel %vm1532, %v1072, %v1477
        %v1620 = vsel %vm1532, %v1075, %v1479
        %v1621 = vsel %vm1532, %v1077, %v1481
        %v1622 = vsel %vm1532, %v1080, %v1483
        %v1623 = vsel %vm1532, %v1082, %v1485
        %v1624 = vsel %vm1532, %v1085, %v1487
        %v1625 = vsel %vm1532, %v1087, %v1489
        %v1626 = vsel %vm1532, %v1390, %v1491
        %v1627 = vsel %vm1532, %v1392, %v1493
        %v1628 = vsel %vm1532, %v962, %v1527
        %v1629 = vsel %vm1532, %v898, %v1529
        %v1630 = vsel %vm1532, %v1191, 0
        %v1632 = vsel %vm1532, %v1193, 0
        %v1634 = vsel %vm1532, %v1196, 0
        %v1636 = vsel %vm1532, %v1198, 0
        %v1638 = vsel %vm1532, %v1201, 0
        %v1640 = vsel %vm1532, %v1203, 0
        %v1642 = vsel %vm1532, %v1206, 0
        %v1644 = vsel %vm1532, %v1208, 0
        %v1646 = vsel %vm1532, %v1211, 0
        %v1648 = vsel %vm1532, %v1213, 0
        %v1650 = vsel %vm1532, %v1216, 0
        %v1652 = vsel %vm1532, %v1218, 0
        %v1654 = vsel %vm1532, %v1221, 0
        %v1656 = vsel %vm1532, %v1223, 0
        %v1658 = vsel %vm1532, %v1226, 0
        %v1660 = vsel %vm1532, %v1228, 0
        %v1662 = vsel %vm1532, %v1231, 0
        %v1664 = vsel %vm1532, %v1233, 0
        %v1666 = vsel %vm1532, %v1236, 0
        %v1668 = vsel %vm1532, %v1238, 0
        %v1670 = vsel %vm1532, %v1241, 0
        %v1672 = vsel %vm1532, %v1243, 0
        %v1674 = vsel %vm1532, %v1246, 0
        %v1676 = vsel %vm1532, %v1248, 0
        %v1678 = vsel %vm1532, %v1251, 0
        %v1680 = vsel %vm1532, %v1253, 0
        %v1682 = vsel %vm1532, %v1256, 0
        %v1684 = vsel %vm1532, %v1258, 0
        %v1686 = vsel %vm1532, %v1427, 0
        %v1688 = vsel %vm1532, %v1429, 0
        %v1690 = vsel %vm1532, %v1183, 0
        %1692 = vmatprep.subr.mxu0 0.0
        %1693 = vmatpush1.msra.mxu0 %v761
        %1694 = vmatprep.subr.mxu0 0.0
        %1695 = vmatpush1.msra.mxu0 %v760
        %1696 = vmatprep.subr.mxu0 0.0
        %1697 = vmatpush1.msra.mxu0 %v759
        %1698 = vmatprep.subr.mxu0 0.0
        %1699 = vmatpush1.msra.mxu0 %v758
        %1700 = vmatprep.subr.mxu0 0.0
        %1701 = vmatpush1.msra.mxu0 %v757
        %1702 = vmatprep.subr.mxu0 0.0
        %1703 = vmatpush1.msra.mxu0 %v756
        %1704 = vmatprep.subr.mxu0 0.0
        %1705 = vmatpush1.msra.mxu0 %v755
        %1706 = vmatprep.subr.mxu0 0.0
        %1707 = vmatpush1.msra.mxu0 %v754
        %1708 = vmatprep.subr.mxu0 0.0
        %1709 = vmatpush1.msra.mxu0 %v753
        %1710 = vmatprep.subr.mxu0 0.0
        %1711 = vmatpush1.msra.mxu0 %v752
        %1712 = vmatprep.subr.mxu0 0.0
        %1713 = vmatpush1.msra.mxu0 %v751
        %1714 = vmatprep.subr.mxu0 0.0
        %1715 = vmatpush1.msra.mxu0 %v750
        %1716 = vmatprep.subr.mxu0 0.0
        %1717 = vmatpush1.msra.mxu0 %v749
        %1718 = vmatprep.subr.mxu0 0.0
        %1719 = vmatpush1.msra.mxu0 %v748
        %1720 = vmatprep.subr.mxu0 0.0
        %1721 = vmatpush1.msra.mxu0 %v747
        %1722 = vmatprep.subr.mxu0 0.0
        %1723 = vmatpush1.msra.mxu0 %v746
        %1724 = vmatprep.subr.mxu0 0.0
        %1725 = vmatpush2.msra.mxu0 %v777
        %1726 = vmatprep.subr.mxu0 0.0
        %1727 = vmatpush2.msra.mxu0 %v776
        %1728 = vmatprep.subr.mxu0 0.0
        %1729 = vmatpush2.msra.mxu0 %v775
        %1730 = vmatprep.subr.mxu0 0.0
        %1731 = vmatpush2.msra.mxu0 %v774
        %1732 = vmatprep.subr.mxu0 0.0
        %1733 = vmatpush2.msra.mxu0 %v773
        %1734 = vmatprep.subr.mxu0 0.0
        %1735 = vmatpush2.msra.mxu0 %v772
        %1736 = vmatprep.subr.mxu0 0.0
        %1737 = vmatpush2.msra.mxu0 %v771
        %1738 = vmatprep.subr.mxu0 0.0
        %1739 = vmatpush2.msra.mxu0 %v770
        %1740 = vmatprep.subr.mxu0 0.0
        %1741 = vmatpush2.msra.mxu0 %v769
        %1742 = vmatprep.subr.mxu0 0.0
        %1743 = vmatpush2.msra.mxu0 %v768
        %1744 = vmatprep.subr.mxu0 0.0
        %1745 = vmatpush2.msra.mxu0 %v767
        %1746 = vmatprep.subr.mxu0 0.0
        %1747 = vmatpush2.msra.mxu0 %v766
        %1748 = vmatprep.subr.mxu0 0.0
        %1749 = vmatpush2.msra.mxu0 %v765
        %1750 = vmatprep.subr.mxu0 0.0
        %1751 = vmatpush2.msra.mxu0 %v764
        %1752 = vmatprep.subr.mxu0 0.0
        %1753 = vmatpush2.msra.mxu0 %v763
        %1754 = vmatprep.subr.mxu0 0.0
        %1755 = vmatpush2.msra.mxu0 %v762
        %1756 = vmatprep.mubr.f32.mxu0 %v1564
        %1757 = vmatmul.mubr.f32.gmra.mxu0 %v1533
        %v1758 = vpop.f32.mrf.mxu0
        %v1759 = vadd.f32 0.0, %v1758
        %v1760 = vpop.f32.mrf.mxu0
        %1761 = vmatprep.mubr.f32.mxu0 %v1565
        %1762 = vmatmul.mubr.f32.gmra.mxu0 %v1533
        %v1763 = vpop.f32.mrf.mxu0
        %v1764 = vadd.f32 0.0, %v1763
        %v1765 = vpop.f32.mrf.mxu0
        %1766 = vmatprep.mubr.f32.mxu0 %v1566
        %1767 = vmatmul.mubr.f32.gmra.mxu0 %v1534
        %v1768 = vpop.f32.mrf.mxu0
        %v1769 = vadd.f32 0.0, %v1768
        %v1770 = vpop.f32.mrf.mxu0
        %1771 = vmatprep.mubr.f32.mxu0 %v1567
        %1772 = vmatmul.mubr.f32.gmra.mxu0 %v1535
        %v1773 = vpop.f32.mrf.mxu0
        %v1774 = vadd.f32 0.0, %v1773
        %v1775 = vpop.f32.mrf.mxu0
        %1776 = vmatprep.mubr.f32.mxu0 %v1568
        %1777 = vmatmul.mubr.f32.gmra.mxu0 %v1536
        %v1778 = vpop.f32.mrf.mxu0
        %v1779 = vadd.f32 0.0, %v1778
        %v1780 = vpop.f32.mrf.mxu0
        %1781 = vmatprep.mubr.f32.mxu0 %v1569
        %1782 = vmatmul.mubr.f32.gmra.mxu0 %v1537
        %v1783 = vpop.f32.mrf.mxu0
        %v1784 = vadd.f32 0.0, %v1783
        %v1785 = vpop.f32.mrf.mxu0
        %1786 = vmatprep.mubr.f32.mxu0 %v1570
        %1787 = vmatmul.mubr.f32.gmra.mxu0 %v1538
        %v1788 = vpop.f32.mrf.mxu0
        %v1789 = vadd.f32 0.0, %v1788
        %v1790 = vpop.f32.mrf.mxu0
        %1791 = vmatprep.mubr.f32.mxu0 %v1571
        %1792 = vmatmul.mubr.f32.gmra.mxu0 %v1539
        %v1793 = vpop.f32.mrf.mxu0
        %v1794 = vadd.f32 0.0, %v1793
        %v1795 = vpop.f32.mrf.mxu0
        %1796 = vmatprep.mubr.f32.mxu0 %v1572
        %1797 = vmatmul.mubr.f32.gmra.mxu0 %v1540
        %v1798 = vpop.f32.mrf.mxu0
        %v1799 = vadd.f32 0.0, %v1798
        %v1800 = vpop.f32.mrf.mxu0
        %1801 = vmatprep.mubr.f32.mxu0 %v1573
        %1802 = vmatmul.mubr.f32.gmra.mxu0 %v1541
        %v1803 = vpop.f32.mrf.mxu0
        %v1804 = vadd.f32 0.0, %v1803
        %v1805 = vpop.f32.mrf.mxu0
        %1806 = vmatprep.mubr.f32.mxu0 %v1574
        %1807 = vmatmul.mubr.f32.gmra.mxu0 %v1542
        %v1808 = vpop.f32.mrf.mxu0
        %v1809 = vadd.f32 0.0, %v1808
        %v1810 = vpop.f32.mrf.mxu0
        %1811 = vmatprep.mubr.f32.mxu0 %v1575
        %1812 = vmatmul.mubr.f32.gmra.mxu0 %v1543
        %v1813 = vpop.f32.mrf.mxu0
        %v1814 = vadd.f32 0.0, %v1813
        %v1815 = vpop.f32.mrf.mxu0
        %1816 = vmatprep.mubr.f32.mxu0 %v1576
        %1817 = vmatmul.mubr.f32.gmra.mxu0 %v1544
        %v1818 = vpop.f32.mrf.mxu0
        %v1819 = vadd.f32 0.0, %v1818
        %v1820 = vpop.f32.mrf.mxu0
        %1821 = vmatprep.mubr.f32.mxu0 %v1577
        %1822 = vmatmul.mubr.f32.gmra.mxu0 %v1545
        %v1823 = vpop.f32.mrf.mxu0
        %v1824 = vadd.f32 0.0, %v1823
        %v1825 = vpop.f32.mrf.mxu0
        %1826 = vmatprep.mubr.f32.mxu0 %v1578
        %1827 = vmatmul.mubr.f32.gmra.mxu0 %v1546
        %v1828 = vpop.f32.mrf.mxu0
        %v1829 = vadd.f32 0.0, %v1828
        %v1830 = vpop.f32.mrf.mxu0
        %1831 = vmatprep.mubr.f32.mxu0 %v1579
        %1832 = vmatmul.mubr.f32.gmra.mxu0 %v1547
        %v1833 = vpop.f32.mrf.mxu0
        %v1834 = vadd.f32 0.0, %v1833
        %v1835 = vpop.f32.mrf.mxu0
        %1836 = vmatprep.mubr.f32.mxu0 %v1580
        %1837 = vmatmul.mubr.f32.gmra.mxu0 %v1548
        %v1838 = vpop.f32.mrf.mxu0
        %v1839 = vadd.f32 0.0, %v1838
        %v1840 = vpop.f32.mrf.mxu0
        %1841 = vmatprep.mubr.f32.mxu0 %v1581
        %1842 = vmatmul.mubr.f32.gmra.mxu0 %v1549
        %v1843 = vpop.f32.mrf.mxu0
        %v1844 = vadd.f32 0.0, %v1843
        %v1845 = vpop.f32.mrf.mxu0
        %1846 = vmatprep.mubr.f32.mxu0 %v1582
        %1847 = vmatmul.mubr.f32.gmra.mxu0 %v1550
        %v1848 = vpop.f32.mrf.mxu0
        %v1849 = vadd.f32 0.0, %v1848
        %v1850 = vpop.f32.mrf.mxu0
        %1851 = vmatprep.mubr.f32.mxu0 %v1583
        %1852 = vmatmul.mubr.f32.gmra.mxu0 %v1551
        %v1853 = vpop.f32.mrf.mxu0
        %v1854 = vadd.f32 0.0, %v1853
        %v1855 = vpop.f32.mrf.mxu0
        %1856 = vmatprep.mubr.f32.mxu0 %v1584
        %1857 = vmatmul.mubr.f32.gmra.mxu0 %v1552
        %v1858 = vpop.f32.mrf.mxu0
        %v1859 = vadd.f32 0.0, %v1858
        %v1860 = vpop.f32.mrf.mxu0
        %1861 = vmatprep.mubr.f32.mxu0 %v1585
        %1862 = vmatmul.mubr.f32.gmra.mxu0 %v1553
        %v1863 = vpop.f32.mrf.mxu0
        %v1864 = vadd.f32 0.0, %v1863
        %v1865 = vpop.f32.mrf.mxu0
        %1866 = vmatprep.mubr.f32.mxu0 %v1586
        %1867 = vmatmul.mubr.f32.gmra.mxu0 %v1554
        %v1868 = vpop.f32.mrf.mxu0
        %v1869 = vadd.f32 0.0, %v1868
        %v1870 = vpop.f32.mrf.mxu0
        %1871 = vmatprep.mubr.f32.mxu0 %v1587
        %1872 = vmatmul.mubr.f32.gmra.mxu0 %v1555
        %v1873 = vpop.f32.mrf.mxu0
        %v1874 = vadd.f32 0.0, %v1873
        %v1875 = vpop.f32.mrf.mxu0
        %1876 = vmatprep.mubr.f32.mxu0 %v1588
        %1877 = vmatmul.mubr.f32.gmra.mxu0 %v1556
        %v1878 = vpop.f32.mrf.mxu0
        %v1879 = vadd.f32 0.0, %v1878
        %v1880 = vpop.f32.mrf.mxu0
        %1881 = vmatprep.mubr.f32.mxu0 %v1589
        %1882 = vmatmul.mubr.f32.gmra.mxu0 %v1557
        %v1883 = vpop.f32.mrf.mxu0
        %v1884 = vadd.f32 0.0, %v1883
        %v1885 = vpop.f32.mrf.mxu0
        %1886 = vmatprep.mubr.f32.mxu0 %v1590
        %1887 = vmatmul.mubr.f32.gmra.mxu0 %v1558
        %v1888 = vpop.f32.mrf.mxu0
        %v1889 = vadd.f32 0.0, %v1888
        %v1890 = vpop.f32.mrf.mxu0
        %1891 = vmatprep.mubr.f32.mxu0 %v1591
        %1892 = vmatmul.mubr.f32.gmra.mxu0 %v1559
        %v1893 = vpop.f32.mrf.mxu0
        %v1894 = vadd.f32 0.0, %v1893
        %v1895 = vpop.f32.mrf.mxu0
        %1896 = vmatprep.mubr.f32.mxu0 %v1592
        %1897 = vmatmul.mubr.f32.gmra.mxu0 %v1560
        %v1898 = vpop.f32.mrf.mxu0
        %v1899 = vadd.f32 0.0, %v1898
        %v1900 = vpop.f32.mrf.mxu0
        %1901 = vmatprep.mubr.f32.mxu0 %v1593
        %1902 = vmatmul.mubr.f32.gmra.mxu0 %v1561
        %v1903 = vpop.f32.mrf.mxu0
        %v1904 = vadd.f32 0.0, %v1903
        %v1905 = vpop.f32.mrf.mxu0
        %1906 = vmatprep.mubr.f32.mxu0 %v1594
        %1907 = vmatmul.mubr.f32.gmra.mxu0 %v1562
        %v1908 = vpop.f32.mrf.mxu0
        %v1909 = vadd.f32 0.0, %v1908
        %v1910 = vpop.f32.mrf.mxu0
        %1911 = vmatprep.mubr.f32.mxu0 %v1595
        %1912 = vmatmul.mubr.f32.gmra.mxu0 %v1563
        %v1913 = vpop.f32.mrf.mxu0
        %v1914 = vadd.f32 0.0, %v1913
        %v1915 = vpop.f32.mrf.mxu0
        %1916 = vdwg.mxu0
        %1917 = vmatprep.subr.mxu0 0.0
        %1918 = vmatpush1.msra.mxu0 %v793
        %1919 = vmatprep.subr.mxu0 0.0
        %1920 = vmatpush1.msra.mxu0 %v792
        %1921 = vmatprep.subr.mxu0 0.0
        %1922 = vmatpush1.msra.mxu0 %v791
        %1923 = vmatprep.subr.mxu0 0.0
        %1924 = vmatpush1.msra.mxu0 %v790
        %1925 = vmatprep.subr.mxu0 0.0
        %1926 = vmatpush1.msra.mxu0 %v789
        %1927 = vmatprep.subr.mxu0 0.0
        %1928 = vmatpush1.msra.mxu0 %v788
        %1929 = vmatprep.subr.mxu0 0.0
        %1930 = vmatpush1.msra.mxu0 %v787
        %1931 = vmatprep.subr.mxu0 0.0
        %1932 = vmatpush1.msra.mxu0 %v786
        %1933 = vmatprep.subr.mxu0 0.0
        %1934 = vmatpush1.msra.mxu0 %v785
        %1935 = vmatprep.subr.mxu0 0.0
        %1936 = vmatpush1.msra.mxu0 %v784
        %1937 = vmatprep.subr.mxu0 0.0
        %1938 = vmatpush1.msra.mxu0 %v783
        %1939 = vmatprep.subr.mxu0 0.0
        %1940 = vmatpush1.msra.mxu0 %v782
        %1941 = vmatprep.subr.mxu0 0.0
        %1942 = vmatpush1.msra.mxu0 %v781
        %1943 = vmatprep.subr.mxu0 0.0
        %1944 = vmatpush1.msra.mxu0 %v780
        %1945 = vmatprep.subr.mxu0 0.0
        %1946 = vmatpush1.msra.mxu0 %v779
        %1947 = vmatprep.subr.mxu0 0.0
        %1948 = vmatpush1.msra.mxu0 %v778
        %1949 = vmatprep.subr.mxu0 0.0
        %1950 = vmatpush2.msra.mxu0 %v809
        %1951 = vmatprep.subr.mxu0 0.0
        %1952 = vmatpush2.msra.mxu0 %v808
        %1953 = vmatprep.subr.mxu0 0.0
        %1954 = vmatpush2.msra.mxu0 %v807
        %1955 = vmatprep.subr.mxu0 0.0
        %1956 = vmatpush2.msra.mxu0 %v806
        %1957 = vmatprep.subr.mxu0 0.0
        %1958 = vmatpush2.msra.mxu0 %v805
        %1959 = vmatprep.subr.mxu0 0.0
        %1960 = vmatpush2.msra.mxu0 %v804
        %1961 = vmatprep.subr.mxu0 0.0
        %1962 = vmatpush2.msra.mxu0 %v803
        %1963 = vmatprep.subr.mxu0 0.0
        %1964 = vmatpush2.msra.mxu0 %v802
        %1965 = vmatprep.subr.mxu0 0.0
        %1966 = vmatpush2.msra.mxu0 %v801
        %1967 = vmatprep.subr.mxu0 0.0
        %1968 = vmatpush2.msra.mxu0 %v800
        %1969 = vmatprep.subr.mxu0 0.0
        %1970 = vmatpush2.msra.mxu0 %v799
        %1971 = vmatprep.subr.mxu0 0.0
        %1972 = vmatpush2.msra.mxu0 %v798
        %1973 = vmatprep.subr.mxu0 0.0
        %1974 = vmatpush2.msra.mxu0 %v797
        %1975 = vmatprep.subr.mxu0 0.0
        %1976 = vmatpush2.msra.mxu0 %v796
        %1977 = vmatprep.subr.mxu0 0.0
        %1978 = vmatpush2.msra.mxu0 %v795
        %1979 = vmatprep.subr.mxu0 0.0
        %1980 = vmatpush2.msra.mxu0 %v794
        %1981 = vmatprep.mubr.f32.mxu0 %v1536
        %1982 = vmatmul.mubr.f32.gmra.mxu0 %v1596
        %v1983 = vpop.f32.mrf.mxu0
        %v1984 = vadd.f32 %v1759, %v1983
        %v1985 = vpop.f32.mrf.mxu0
        %1986 = vmatprep.mubr.f32.mxu0 %v1537
        %1987 = vmatmul.mubr.f32.gmra.mxu0 %v1597
        %v1988 = vpop.f32.mrf.mxu0
        %v1989 = vadd.f32 %v1764, %v1988
        %v1990 = vpop.f32.mrf.mxu0
        %1991 = vmatprep.mubr.f32.mxu0 %v1538
        %1992 = vmatmul.mubr.f32.gmra.mxu0 %v1598
        %v1993 = vpop.f32.mrf.mxu0
        %v1994 = vadd.f32 %v1769, %v1993
        %v1995 = vpop.f32.mrf.mxu0
        %1996 = vmatprep.mubr.f32.mxu0 %v1539
        %1997 = vmatmul.mubr.f32.gmra.mxu0 %v1599
        %v1998 = vpop.f32.mrf.mxu0
        %v1999 = vadd.f32 %v1774, %v1998
        %v2000 = vpop.f32.mrf.mxu0
        %2001 = vmatprep.mubr.f32.mxu0 %v1540
        %2002 = vmatmul.mubr.f32.gmra.mxu0 %v1600
        %v2003 = vpop.f32.mrf.mxu0
        %v2004 = vadd.f32 %v1779, %v2003
        %v2005 = vpop.f32.mrf.mxu0
        %2006 = vmatprep.mubr.f32.mxu0 %v1541
        %2007 = vmatmul.mubr.f32.gmra.mxu0 %v1601
        %v2008 = vpop.f32.mrf.mxu0
        %v2009 = vadd.f32 %v1784, %v2008
        %v2010 = vpop.f32.mrf.mxu0
        %2011 = vmatprep.mubr.f32.mxu0 %v1542
        %2012 = vmatmul.mubr.f32.gmra.mxu0 %v1602
        %v2013 = vpop.f32.mrf.mxu0
        %v2014 = vadd.f32 %v1789, %v2013
        %v2015 = vpop.f32.mrf.mxu0
        %2016 = vmatprep.mubr.f32.mxu0 %v1543
        %2017 = vmatmul.mubr.f32.gmra.mxu0 %v1603
        %v2018 = vpop.f32.mrf.mxu0
        %v2019 = vadd.f32 %v1794, %v2018
        %v2020 = vpop.f32.mrf.mxu0
        %2021 = vmatprep.mubr.f32.mxu0 %v1544
        %2022 = vmatmul.mubr.f32.gmra.mxu0 %v1604
        %v2023 = vpop.f32.mrf.mxu0
        %v2024 = vadd.f32 %v1799, %v2023
        %v2025 = vpop.f32.mrf.mxu0
        %2026 = vmatprep.mubr.f32.mxu0 %v1545
        %2027 = vmatmul.mubr.f32.gmra.mxu0 %v1605
        %v2028 = vpop.f32.mrf.mxu0
        %v2029 = vadd.f32 %v1804, %v2028
        %v2030 = vpop.f32.mrf.mxu0
        %2031 = vmatprep.mubr.f32.mxu0 %v1546
        %2032 = vmatmul.mubr.f32.gmra.mxu0 %v1606
        %v2033 = vpop.f32.mrf.mxu0
        %v2034 = vadd.f32 %v1809, %v2033
        %v2035 = vpop.f32.mrf.mxu0
        %2036 = vmatprep.mubr.f32.mxu0 %v1547
        %2037 = vmatmul.mubr.f32.gmra.mxu0 %v1607
        %v2038 = vpop.f32.mrf.mxu0
        %v2039 = vadd.f32 %v1814, %v2038
        %v2040 = vpop.f32.mrf.mxu0
        %2041 = vmatprep.mubr.f32.mxu0 %v1548
        %2042 = vmatmul.mubr.f32.gmra.mxu0 %v1608
        %v2043 = vpop.f32.mrf.mxu0
        %v2044 = vadd.f32 %v1819, %v2043
        %v2045 = vpop.f32.mrf.mxu0
        %2046 = vmatprep.mubr.f32.mxu0 %v1549
        %2047 = vmatmul.mubr.f32.gmra.mxu0 %v1609
        %v2048 = vpop.f32.mrf.mxu0
        %v2049 = vadd.f32 %v1824, %v2048
        %v2050 = vpop.f32.mrf.mxu0
        %2051 = vmatprep.mubr.f32.mxu0 %v1550
        %2052 = vmatmul.mubr.f32.gmra.mxu0 %v1610
        %v2053 = vpop.f32.mrf.mxu0
        %v2054 = vadd.f32 %v1829, %v2053
        %v2055 = vpop.f32.mrf.mxu0
        %2056 = vmatprep.mubr.f32.mxu0 %v1551
        %2057 = vmatmul.mubr.f32.gmra.mxu0 %v1611
        %v2058 = vpop.f32.mrf.mxu0
        %v2059 = vadd.f32 %v1834, %v2058
        %v2060 = vpop.f32.mrf.mxu0
        %2061 = vmatprep.mubr.f32.mxu0 %v1552
        %2062 = vmatmul.mubr.f32.gmra.mxu0 %v1612
        %v2063 = vpop.f32.mrf.mxu0
        %v2064 = vadd.f32 %v1839, %v2063
        %v2065 = vpop.f32.mrf.mxu0
        %2066 = vmatprep.mubr.f32.mxu0 %v1553
        %2067 = vmatmul.mubr.f32.gmra.mxu0 %v1613
        %v2068 = vpop.f32.mrf.mxu0
        %v2069 = vadd.f32 %v1844, %v2068
        %v2070 = vpop.f32.mrf.mxu0
        %2071 = vmatprep.mubr.f32.mxu0 %v1554
        %2072 = vmatmul.mubr.f32.gmra.mxu0 %v1614
        %v2073 = vpop.f32.mrf.mxu0
        %v2074 = vadd.f32 %v1849, %v2073
        %v2075 = vpop.f32.mrf.mxu0
        %2076 = vmatprep.mubr.f32.mxu0 %v1555
        %2077 = vmatmul.mubr.f32.gmra.mxu0 %v1615
        %v2078 = vpop.f32.mrf.mxu0
        %v2079 = vadd.f32 %v1854, %v2078
        %v2080 = vpop.f32.mrf.mxu0
        %2081 = vmatprep.mubr.f32.mxu0 %v1556
        %2082 = vmatmul.mubr.f32.gmra.mxu0 %v1616
        %v2083 = vpop.f32.mrf.mxu0
        %v2084 = vadd.f32 %v1859, %v2083
        %v2085 = vpop.f32.mrf.mxu0
        %2086 = vmatprep.mubr.f32.mxu0 %v1557
        %2087 = vmatmul.mubr.f32.gmra.mxu0 %v1617
        %v2088 = vpop.f32.mrf.mxu0
        %v2089 = vadd.f32 %v1864, %v2088
        %v2090 = vpop.f32.mrf.mxu0
        %2091 = vmatprep.mubr.f32.mxu0 %v1558
        %2092 = vmatmul.mubr.f32.gmra.mxu0 %v1618
        %v2093 = vpop.f32.mrf.mxu0
        %v2094 = vadd.f32 %v1869, %v2093
        %v2095 = vpop.f32.mrf.mxu0
        %2096 = vmatprep.mubr.f32.mxu0 %v1559
        %2097 = vmatmul.mubr.f32.gmra.mxu0 %v1619
        %v2098 = vpop.f32.mrf.mxu0
        %v2099 = vadd.f32 %v1874, %v2098
        %v2100 = vpop.f32.mrf.mxu0
        %2101 = vmatprep.mubr.f32.mxu0 %v1560
        %2102 = vmatmul.mubr.f32.gmra.mxu0 %v1620
        %v2103 = vpop.f32.mrf.mxu0
        %v2104 = vadd.f32 %v1879, %v2103
        %v2105 = vpop.f32.mrf.mxu0
        %2106 = vmatprep.mubr.f32.mxu0 %v1561
        %2107 = vmatmul.mubr.f32.gmra.mxu0 %v1621
        %v2108 = vpop.f32.mrf.mxu0
        %v2109 = vadd.f32 %v1884, %v2108
        %v2110 = vpop.f32.mrf.mxu0
        %2111 = vmatprep.mubr.f32.mxu0 %v1562
        %2112 = vmatmul.mubr.f32.gmra.mxu0 %v1622
        %v2113 = vpop.f32.mrf.mxu0
        %v2114 = vadd.f32 %v1889, %v2113
        %v2115 = vpop.f32.mrf.mxu0
        %2116 = vmatprep.mubr.f32.mxu0 %v1563
        %2117 = vmatmul.mubr.f32.gmra.mxu0 %v1623
        %v2118 = vpop.f32.mrf.mxu0
        %v2119 = vadd.f32 %v1894, %v2118
        %v2120 = vpop.f32.mrf.mxu0
        %2121 = vmatprep.mubr.f32.mxu0 %v1628
        %2122 = vmatmul.mubr.f32.gmra.mxu0 %v1624
        %v2123 = vpop.f32.mrf.mxu0
        %v2124 = vadd.f32 %v1899, %v2123
        %v2125 = vpop.f32.mrf.mxu0
        %2126 = vmatprep.mubr.f32.mxu0 %v1629
        %2127 = vmatmul.mubr.f32.gmra.mxu0 %v1625
        %v2128 = vpop.f32.mrf.mxu0
        %v2129 = vadd.f32 %v1904, %v2128
        %v2130 = vpop.f32.mrf.mxu0
        %2131 = vmatprep.mubr.f32.mxu0 %v1533
        %2132 = vmatmul.mubr.f32.gmra.mxu0 %v1626
        %v2133 = vpop.f32.mrf.mxu0
        %v2134 = vadd.f32 %v1909, %v2133
        %v2135 = vpop.f32.mrf.mxu0
        %2136 = vmatprep.mubr.f32.mxu0 %v1533
        %2137 = vmatmul.mubr.f32.gmra.mxu0 %v1627
        %v2138 = vpop.f32.mrf.mxu0
        %v2139 = vadd.f32 %v1914, %v2138
        %v2140 = vpop.f32.mrf.mxu0
        %2141 = vdwg.mxu0
        %2142 = vmatprep.subr.mxu0 0.0
        %2143 = vmatpush1.msra.mxu0 0.0
        %2144 = vmatprep.subr.mxu0 0.0
        %2145 = vmatpush1.msra.mxu0 0.0
        %2146 = vmatprep.subr.mxu0 0.0
        %2147 = vmatpush1.msra.mxu0 0.0
        %2148 = vmatprep.subr.mxu0 0.0
        %2149 = vmatpush1.msra.mxu0 0.0
        %2150 = vmatprep.subr.mxu0 0.0
        %2151 = vmatpush1.msra.mxu0 0.0
        %2152 = vmatprep.subr.mxu0 0.0
        %2153 = vmatpush1.msra.mxu0 0.0
        %2154 = vmatprep.subr.mxu0 0.0
        %2155 = vmatpush1.msra.mxu0 0.0
        %2156 = vmatprep.subr.mxu0 0.0
        %2157 = vmatpush1.msra.mxu0 0.0
        %2158 = vmatprep.subr.mxu0 0.0
        %2159 = vmatpush1.msra.mxu0 %v817
        %2160 = vmatprep.subr.mxu0 0.0
        %2161 = vmatpush1.msra.mxu0 %v816
        %2162 = vmatprep.subr.mxu0 0.0
        %2163 = vmatpush1.msra.mxu0 %v815
        %2164 = vmatprep.subr.mxu0 0.0
        %2165 = vmatpush1.msra.mxu0 %v814
        %2166 = vmatprep.subr.mxu0 0.0
        %2167 = vmatpush1.msra.mxu0 %v813
        %2168 = vmatprep.subr.mxu0 0.0
        %2169 = vmatpush1.msra.mxu0 %v812
        %2170 = vmatprep.subr.mxu0 0.0
        %2171 = vmatpush1.msra.mxu0 %v811
        %2172 = vmatprep.subr.mxu0 0.0
        %2173 = vmatpush1.msra.mxu0 %v810
        %2174 = vmatprep.subr.mxu0 0.0
        %2175 = vmatpush2.msra.mxu0 0.0
        %2176 = vmatprep.subr.mxu0 0.0
        %2177 = vmatpush2.msra.mxu0 0.0
        %2178 = vmatprep.subr.mxu0 0.0
        %2179 = vmatpush2.msra.mxu0 0.0
        %2180 = vmatprep.subr.mxu0 0.0
        %2181 = vmatpush2.msra.mxu0 0.0
        %2182 = vmatprep.subr.mxu0 0.0
        %2183 = vmatpush2.msra.mxu0 0.0
        %2184 = vmatprep.subr.mxu0 0.0
        %2185 = vmatpush2.msra.mxu0 0.0
        %2186 = vmatprep.subr.mxu0 0.0
        %2187 = vmatpush2.msra.mxu0 0.0
        %2188 = vmatprep.subr.mxu0 0.0
        %2189 = vmatpush2.msra.mxu0 0.0
        %2190 = vmatprep.subr.mxu0 0.0
        %2191 = vmatpush2.msra.mxu0 0.0
        %2192 = vmatprep.subr.mxu0 0.0
        %2193 = vmatpush2.msra.mxu0 0.0
        %2194 = vmatprep.subr.mxu0 0.0
        %2195 = vmatpush2.msra.mxu0 0.0
        %2196 = vmatprep.subr.mxu0 0.0
        %2197 = vmatpush2.msra.mxu0 0.0
        %2198 = vmatprep.subr.mxu0 0.0
        %2199 = vmatpush2.msra.mxu0 0.0
        %2200 = vmatprep.subr.mxu0 0.0
        %2201 = vmatpush2.msra.mxu0 0.0
        %2202 = vmatprep.subr.mxu0 0.0
        %2203 = vmatpush2.msra.mxu0 0.0
        %2204 = vmatprep.subr.mxu0 0.0
        %2205 = vmatpush2.msra.mxu0 0.0
        %2206 = vmatprep.mubr.f32.mxu0 0.0
        %2207 = vmatmul.mubr.f32.gmra.mxu0 %v1630
        %v2208 = vpop.f32.mrf.mxu0
        %v2209 = vadd.f32 %v1984, %v2208
        %v2210 = vpop.f32.mrf.mxu0
        %2211 = vmatprep.mubr.f32.mxu0 0.0
        %2212 = vmatmul.mubr.f32.gmra.mxu0 %v1632
        %v2213 = vpop.f32.mrf.mxu0
        %v2214 = vadd.f32 %v1989, %v2213
        %v2215 = vpop.f32.mrf.mxu0
        %2216 = vmatprep.mubr.f32.mxu0 0.0
        %2217 = vmatmul.mubr.f32.gmra.mxu0 %v1634
        %v2218 = vpop.f32.mrf.mxu0
        %v2219 = vadd.f32 %v1994, %v2218
        %v2220 = vpop.f32.mrf.mxu0
        %2221 = vmatprep.mubr.f32.mxu0 0.0
        %2222 = vmatmul.mubr.f32.gmra.mxu0 %v1636
        %v2223 = vpop.f32.mrf.mxu0
        %v2224 = vadd.f32 %v1999, %v2223
        %v2225 = vpop.f32.mrf.mxu0
        %2226 = vmatprep.mubr.f32.mxu0 0.0
        %2227 = vmatmul.mubr.f32.gmra.mxu0 %v1638
        %v2228 = vpop.f32.mrf.mxu0
        %v2229 = vadd.f32 %v2004, %v2228
        %v2230 = vpop.f32.mrf.mxu0
        %2231 = vmatprep.mubr.f32.mxu0 0.0
        %2232 = vmatmul.mubr.f32.gmra.mxu0 %v1640
        %v2233 = vpop.f32.mrf.mxu0
        %v2234 = vadd.f32 %v2009, %v2233
        %v2235 = vpop.f32.mrf.mxu0
        %2236 = vmatprep.mubr.f32.mxu0 0.0
        %2237 = vmatmul.mubr.f32.gmra.mxu0 %v1642
        %v2238 = vpop.f32.mrf.mxu0
        %v2239 = vadd.f32 %v2014, %v2238
        %v2240 = vpop.f32.mrf.mxu0
        %2241 = vmatprep.mubr.f32.mxu0 0.0
        %2242 = vmatmul.mubr.f32.gmra.mxu0 %v1644
        %v2243 = vpop.f32.mrf.mxu0
        %v2244 = vadd.f32 %v2019, %v2243
        %v2245 = vpop.f32.mrf.mxu0
        %2246 = vmatprep.mubr.f32.mxu0 0.0
        %2247 = vmatmul.mubr.f32.gmra.mxu0 %v1646
        %v2248 = vpop.f32.mrf.mxu0
        %v2249 = vadd.f32 %v2024, %v2248
        %v2250 = vpop.f32.mrf.mxu0
        %2251 = vmatprep.mubr.f32.mxu0 0.0
        %2252 = vmatmul.mubr.f32.gmra.mxu0 %v1648
        %v2253 = vpop.f32.mrf.mxu0
        %v2254 = vadd.f32 %v2029, %v2253
        %v2255 = vpop.f32.mrf.mxu0
        %2256 = vmatprep.mubr.f32.mxu0 0.0
        %2257 = vmatmul.mubr.f32.gmra.mxu0 %v1650
        %v2258 = vpop.f32.mrf.mxu0
        %v2259 = vadd.f32 %v2034, %v2258
        %v2260 = vpop.f32.mrf.mxu0
        %2261 = vmatprep.mubr.f32.mxu0 0.0
        %2262 = vmatmul.mubr.f32.gmra.mxu0 %v1652
        %v2263 = vpop.f32.mrf.mxu0
        %v2264 = vadd.f32 %v2039, %v2263
        %v2265 = vpop.f32.mrf.mxu0
        %2266 = vmatprep.mubr.f32.mxu0 0.0
        %2267 = vmatmul.mubr.f32.gmra.mxu0 %v1654
        %v2268 = vpop.f32.mrf.mxu0
        %v2269 = vadd.f32 %v2044, %v2268
        %v2270 = vpop.f32.mrf.mxu0
        %2271 = vmatprep.mubr.f32.mxu0 0.0
        %2272 = vmatmul.mubr.f32.gmra.mxu0 %v1656
        %v2273 = vpop.f32.mrf.mxu0
        %v2274 = vadd.f32 %v2049, %v2273
        %v2275 = vpop.f32.mrf.mxu0
        %2276 = vmatprep.mubr.f32.mxu0 0.0
        %2277 = vmatmul.mubr.f32.gmra.mxu0 %v1658
        %v2278 = vpop.f32.mrf.mxu0
        %v2279 = vadd.f32 %v2054, %v2278
        %v2280 = vpop.f32.mrf.mxu0
        %2281 = vmatprep.mubr.f32.mxu0 0.0
        %2282 = vmatmul.mubr.f32.gmra.mxu0 %v1660
        %v2283 = vpop.f32.mrf.mxu0
        %v2284 = vadd.f32 %v2059, %v2283
        %v2285 = vpop.f32.mrf.mxu0
        %2286 = vmatprep.mubr.f32.mxu0 0.0
        %2287 = vmatmul.mubr.f32.gmra.mxu0 %v1662
        %v2288 = vpop.f32.mrf.mxu0
        %v2289 = vadd.f32 %v2064, %v2288
        %v2290 = vpop.f32.mrf.mxu0
        %2291 = vmatprep.mubr.f32.mxu0 0.0
        %2292 = vmatmul.mubr.f32.gmra.mxu0 %v1664
        %v2293 = vpop.f32.mrf.mxu0
        %v2294 = vadd.f32 %v2069, %v2293
        %v2295 = vpop.f32.mrf.mxu0
        %2296 = vmatprep.mubr.f32.mxu0 0.0
        %2297 = vmatmul.mubr.f32.gmra.mxu0 %v1666
        %v2298 = vpop.f32.mrf.mxu0
        %v2299 = vadd.f32 %v2074, %v2298
        %v2300 = vpop.f32.mrf.mxu0
        %2301 = vmatprep.mubr.f32.mxu0 0.0
        %2302 = vmatmul.mubr.f32.gmra.mxu0 %v1668
        %v2303 = vpop.f32.mrf.mxu0
        %v2304 = vadd.f32 %v2079, %v2303
        %v2305 = vpop.f32.mrf.mxu0
        %2306 = vmatprep.mubr.f32.mxu0 0.0
        %2307 = vmatmul.mubr.f32.gmra.mxu0 %v1670
        %v2308 = vpop.f32.mrf.mxu0
        %v2309 = vadd.f32 %v2084, %v2308
        %v2310 = vpop.f32.mrf.mxu0
        %2311 = vmatprep.mubr.f32.mxu0 0.0
        %2312 = vmatmul.mubr.f32.gmra.mxu0 %v1672
        %v2313 = vpop.f32.mrf.mxu0
        %v2314 = vadd.f32 %v2089, %v2313
        %v2315 = vpop.f32.mrf.mxu0
        %2316 = vmatprep.mubr.f32.mxu0 0.0
        %2317 = vmatmul.mubr.f32.gmra.mxu0 %v1674
        %v2318 = vpop.f32.mrf.mxu0
        %v2319 = vadd.f32 %v2094, %v2318
        %v2320 = vpop.f32.mrf.mxu0
        %2321 = vmatprep.mubr.f32.mxu0 0.0
        %2322 = vmatmul.mubr.f32.gmra.mxu0 %v1676
        %v2323 = vpop.f32.mrf.mxu0
        %v2324 = vadd.f32 %v2099, %v2323
        %v2325 = vpop.f32.mrf.mxu0
        %2326 = vmatprep.mubr.f32.mxu0 0.0
        %2327 = vmatmul.mubr.f32.gmra.mxu0 %v1678
        %v2328 = vpop.f32.mrf.mxu0
        %v2329 = vadd.f32 %v2104, %v2328
        %v2330 = vpop.f32.mrf.mxu0
        %2331 = vmatprep.mubr.f32.mxu0 0.0
        %2332 = vmatmul.mubr.f32.gmra.mxu0 %v1680
        %v2333 = vpop.f32.mrf.mxu0
        %v2334 = vadd.f32 %v2109, %v2333
        %v2335 = vpop.f32.mrf.mxu0
        %2336 = vmatprep.mubr.f32.mxu0 0.0
        %2337 = vmatmul.mubr.f32.gmra.mxu0 %v1682
        %v2338 = vpop.f32.mrf.mxu0
        %v2339 = vadd.f32 %v2114, %v2338
        %v2340 = vpop.f32.mrf.mxu0
        %2341 = vmatprep.mubr.f32.mxu0 0.0
        %2342 = vmatmul.mubr.f32.gmra.mxu0 %v1684
        %v2343 = vpop.f32.mrf.mxu0
        %v2344 = vadd.f32 %v2119, %v2343
        %v2345 = vpop.f32.mrf.mxu0
        %2346 = vmatprep.mubr.f32.mxu0 0.0
        %2347 = vmatmul.mubr.f32.gmra.mxu0 %v1686
        %v2348 = vpop.f32.mrf.mxu0
        %v2349 = vadd.f32 %v2124, %v2348
        %v2350 = vpop.f32.mrf.mxu0
        %2351 = vmatprep.mubr.f32.mxu0 0.0
        %2352 = vmatmul.mubr.f32.gmra.mxu0 %v1688
        %v2353 = vpop.f32.mrf.mxu0
        %v2354 = vadd.f32 %v2129, %v2353
        %v2355 = vpop.f32.mrf.mxu0
        %2356 = vmatprep.mubr.f32.mxu0 0.0
        %2357 = vmatmul.mubr.f32.gmra.mxu0 %v1690
        %v2358 = vpop.f32.mrf.mxu0
        %v2359 = vadd.f32 %v2134, %v2358
        %v2360 = vpop.f32.mrf.mxu0
        %2361 = vmatprep.mubr.f32.mxu0 0.0
        %2362 = vmatmul.mubr.f32.gmra.mxu0 %v1690
        %v2363 = vpop.f32.mrf.mxu0
        %v2364 = vadd.f32 %v2139, %v2363
        %v2365 = vpop.f32.mrf.mxu0
        %2366 = vdwg.mxu0
        %v2368 = vlaneseq
        %v2369 = vshrl.u32 %v2368, 7
        %v2370 = vsub.s32 0, %v2369
        %v2371 = vrot.slane %v742, %v2370
        %v2373 = vmul.f32 %v2209, %v2371
        %v2374 = vmul.f32 %v2214, %v2371
        %v2375 = vmul.f32 %v2219, %v2371
        %v2376 = vmul.f32 %v2224, %v2371
        %v2377 = vmul.f32 %v2229, %v2371
        %v2378 = vmul.f32 %v2234, %v2371
        %v2379 = vmul.f32 %v2239, %v2371
        %v2380 = vmul.f32 %v2244, %v2371
        %v2381 = vmul.f32 %v2249, %v2371
        %v2382 = vmul.f32 %v2254, %v2371
        %v2383 = vmul.f32 %v2259, %v2371
        %v2384 = vmul.f32 %v2264, %v2371
        %v2385 = vmul.f32 %v2269, %v2371
        %v2386 = vmul.f32 %v2274, %v2371
        %v2387 = vmul.f32 %v2279, %v2371
        %v2388 = vmul.f32 %v2284, %v2371
        %v2389 = vmul.f32 %v2289, %v2371
        %v2390 = vmul.f32 %v2294, %v2371
        %v2391 = vmul.f32 %v2299, %v2371
        %v2392 = vmul.f32 %v2304, %v2371
        %v2393 = vmul.f32 %v2309, %v2371
        %v2394 = vmul.f32 %v2314, %v2371
        %v2395 = vmul.f32 %v2319, %v2371
        %v2396 = vmul.f32 %v2324, %v2371
        %v2397 = vmul.f32 %v2329, %v2371
        %v2398 = vmul.f32 %v2334, %v2371
        %v2399 = vmul.f32 %v2339, %v2371
        %v2400 = vmul.f32 %v2344, %v2371
        %v2401 = vmul.f32 %v2349, %v2371
        %v2402 = vmul.f32 %v2354, %v2371
        %v2403 = vmul.f32 %v2359, %v2371
        %v2404 = vmul.f32 %v2364, %v2371
        %v2406 = vlaneseq
        %v2407 = vshrl.u32 %v2406, 7
        %v2408 = vsub.s32 0, %v2407
        %v2409 = vrot.slane %v743, %v2408
        %v2411 = vadd.f32 %v2373, %v2409
        %v2412 = vadd.f32 %v2374, %v2409
        %v2413 = vadd.f32 %v2375, %v2409
        %v2414 = vadd.f32 %v2376, %v2409
        %v2415 = vadd.f32 %v2377, %v2409
        %v2416 = vadd.f32 %v2378, %v2409
        %v2417 = vadd.f32 %v2379, %v2409
        %v2418 = vadd.f32 %v2380, %v2409
        %v2419 = vadd.f32 %v2381, %v2409
        %v2420 = vadd.f32 %v2382, %v2409
        %v2421 = vadd.f32 %v2383, %v2409
        %v2422 = vadd.f32 %v2384, %v2409
        %v2423 = vadd.f32 %v2385, %v2409
        %v2424 = vadd.f32 %v2386, %v2409
        %v2425 = vadd.f32 %v2387, %v2409
        %v2426 = vadd.f32 %v2388, %v2409
        %v2427 = vadd.f32 %v2389, %v2409
        %v2428 = vadd.f32 %v2390, %v2409
        %v2429 = vadd.f32 %v2391, %v2409
        %v2430 = vadd.f32 %v2392, %v2409
        %v2431 = vadd.f32 %v2393, %v2409
        %v2432 = vadd.f32 %v2394, %v2409
        %v2433 = vadd.f32 %v2395, %v2409
        %v2434 = vadd.f32 %v2396, %v2409
        %v2435 = vadd.f32 %v2397, %v2409
        %v2436 = vadd.f32 %v2398, %v2409
        %v2437 = vadd.f32 %v2399, %v2409
        %v2438 = vadd.f32 %v2400, %v2409
        %v2439 = vadd.f32 %v2401, %v2409
        %v2440 = vadd.f32 %v2402, %v2409
        %v2441 = vadd.f32 %v2403, %v2409
        %v2442 = vadd.f32 %v2404, %v2409
        %v2443 = vmax.f32 %v2411, 0.0
        %v2444 = vmax.f32 %v2412, 0.0
        %v2445 = vmax.f32 %v2413, 0.0
        %v2446 = vmax.f32 %v2414, 0.0
        %v2447 = vmax.f32 %v2415, 0.0
        %v2448 = vmax.f32 %v2416, 0.0
        %v2449 = vmax.f32 %v2417, 0.0
        %v2450 = vmax.f32 %v2418, 0.0
        %v2451 = vmax.f32 %v2419, 0.0
        %v2452 = vmax.f32 %v2420, 0.0
        %v2453 = vmax.f32 %v2421, 0.0
        %v2454 = vmax.f32 %v2422, 0.0
        %v2455 = vmax.f32 %v2423, 0.0
        %v2456 = vmax.f32 %v2424, 0.0
        %v2457 = vmax.f32 %v2425, 0.0
        %v2458 = vmax.f32 %v2426, 0.0
        %v2459 = vmax.f32 %v2427, 0.0
        %v2460 = vmax.f32 %v2428, 0.0
        %v2461 = vmax.f32 %v2429, 0.0
        %v2462 = vmax.f32 %v2430, 0.0
        %v2463 = vmax.f32 %v2431, 0.0
        %v2464 = vmax.f32 %v2432, 0.0
        %v2465 = vmax.f32 %v2433, 0.0
        %v2466 = vmax.f32 %v2434, 0.0
        %v2467 = vmax.f32 %v2435, 0.0
        %v2468 = vmax.f32 %v2436, 0.0
        %v2469 = vmax.f32 %v2437, 0.0
        %v2470 = vmax.f32 %v2438, 0.0
        %v2471 = vmax.f32 %v2439, 0.0
        %v2472 = vmax.f32 %v2440, 0.0
        %v2473 = vmax.f32 %v2441, 0.0
        %v2474 = vmax.f32 %v2442, 0.0
        %v2475 = vld [vmem:[#allocation7] sm:$0xff]
        %v2476 = vld [vmem:[#allocation7 + $0x8] sm:$0xff]
        %v2477 = vld [vmem:[#allocation7 + $0x10] sm:$0xff]
        %v2478 = vld [vmem:[#allocation7 + $0x18] sm:$0xff]
        %v2479 = vld [vmem:[#allocation7 + $0x20] sm:$0xff]
        %v2480 = vld [vmem:[#allocation7 + $0x28] sm:$0xff]
        %v2481 = vld [vmem:[#allocation7 + $0x30] sm:$0xff]
        %v2482 = vld [vmem:[#allocation7 + $0x38] sm:$0xff]
        %v2483 = vld [vmem:[#allocation7 + $0x40] sm:$0xff]
        %v2484 = vld [vmem:[#allocation7 + $0x48] sm:$0xff]
        %v2485 = vld [vmem:[#allocation7 + $0x50] sm:$0xff]
        %v2486 = vld [vmem:[#allocation7 + $0x58] sm:$0xff]
        %v2487 = vld [vmem:[#allocation7 + $0x60] sm:$0xff]
        %v2488 = vld [vmem:[#allocation7 + $0x68] sm:$0xff]
        %v2489 = vld [vmem:[#allocation7 + $0x70] sm:$0xff]
        %v2490 = vld [vmem:[#allocation7 + $0x78] sm:$0xff]
        %v2491 = vld [vmem:[#allocation7 + $0x80] sm:$0xff]
        %v2492 = vld [vmem:[#allocation7 + $0x88] sm:$0xff]
        %v2493 = vld [vmem:[#allocation7 + $0x90] sm:$0xff]
        %v2494 = vld [vmem:[#allocation7 + $0x98] sm:$0xff]
        %v2495 = vld [vmem:[#allocation7 + $0xa0] sm:$0xff]
        %v2496 = vld [vmem:[#allocation7 + $0xa8] sm:$0xff]
        %v2497 = vld [vmem:[#allocation7 + $0xb0] sm:$0xff]
        %v2498 = vld [vmem:[#allocation7 + $0xb8] sm:$0xff]
        %v2499 = vld [vmem:[#allocation7 + $0xc0] sm:$0xff]
        %v2500 = vld [vmem:[#allocation7 + $0xc8] sm:$0xff]
        %v2501 = vld [vmem:[#allocation7 + $0xd0] sm:$0xff]
        %v2502 = vld [vmem:[#allocation7 + $0xd8] sm:$0xff]
        %v2503 = vld [vmem:[#allocation7 + $0xe0] sm:$0xff]
        %v2504 = vld [vmem:[#allocation7 + $0xe8] sm:$0xff]
        %v2505 = vld [vmem:[#allocation7 + $0xf0] sm:$0xff]
        %v2506 = vld [vmem:[#allocation7 + $0xf8] sm:$0xff]
        %v2507 = vld [vmem:[#allocation7 + $0x100] sm:$0xff]
        %v2508 = vld [vmem:[#allocation7 + $0x108] sm:$0xff]
        %v2509 = vld [vmem:[#allocation7 + $0x110] sm:$0xff]
        %v2510 = vld [vmem:[#allocation7 + $0x118] sm:$0xff]
        %v2511 = vld [vmem:[#allocation7 + $0x120] sm:$0xff]
        %v2512 = vld [vmem:[#allocation7 + $0x128] sm:$0xff]
        %v2513 = vld [vmem:[#allocation7 + $0x130] sm:$0xff]
        %v2514 = vld [vmem:[#allocation7 + $0x138] sm:$0xff]
        %v2515 = vld [vmem:[#allocation7 + $0x140] sm:$0xff]
        %v2516 = vld [vmem:[#allocation7 + $0x148] sm:$0xff]
        %v2517 = vld [vmem:[#allocation7 + $0x150] sm:$0xff]
        %v2518 = vld [vmem:[#allocation7 + $0x158] sm:$0xff]
        %v2519 = vld [vmem:[#allocation7 + $0x160] sm:$0xff]
        %v2520 = vld [vmem:[#allocation7 + $0x168] sm:$0xff]
        %v2521 = vld [vmem:[#allocation7 + $0x170] sm:$0xff]
        %v2522 = vld [vmem:[#allocation7 + $0x178] sm:$0xff]
        %v2523 = vld [vmem:[#allocation7 + $0x180] sm:$0xff]
        %v2524 = vld [vmem:[#allocation7 + $0x188] sm:$0xff]
        %v2525 = vld [vmem:[#allocation7 + $0x190] sm:$0xff]
        %v2526 = vld [vmem:[#allocation7 + $0x198] sm:$0xff]
        %v2527 = vld [vmem:[#allocation7 + $0x1a0] sm:$0xff]
        %v2528 = vld [vmem:[#allocation7 + $0x1a8] sm:$0xff]
        %v2529 = vld [vmem:[#allocation7 + $0x1b0] sm:$0xff]
        %v2530 = vld [vmem:[#allocation7 + $0x1b8] sm:$0xff]
        %v2531 = vld [vmem:[#allocation7 + $0x1c0] sm:$0xff]
        %v2532 = vld [vmem:[#allocation7 + $0x1c8] sm:$0xff]
        %v2533 = vld [vmem:[#allocation7 + $0x1d0] sm:$0xff]
        %v2534 = vld [vmem:[#allocation7 + $0x1d8] sm:$0xff]
        %v2535 = vld [vmem:[#allocation7 + $0x1e0] sm:$0xff]
        %v2536 = vld [vmem:[#allocation7 + $0x1e8] sm:$0xff]
        %v2537 = vld [vmem:[#allocation7 + $0x1f0] sm:$0xff]
        %v2538 = vld [vmem:[#allocation7 + $0x1f8] sm:$0xff]
        %v2539 = vld [vmem:[#allocation7 + $0x200] sm:$0xff]
        %v2540 = vld [vmem:[#allocation7 + $0x208] sm:$0xff]
        %v2541 = vld [vmem:[#allocation7 + $0x210] sm:$0xff]
        %v2542 = vld [vmem:[#allocation7 + $0x218] sm:$0xff]
        %v2543 = vld [vmem:[#allocation7 + $0x220] sm:$0xff]
        %v2544 = vld [vmem:[#allocation7 + $0x228] sm:$0xff]
        %v2545 = vld [vmem:[#allocation7 + $0x230] sm:$0xff]
        %v2546 = vld [vmem:[#allocation7 + $0x238] sm:$0xff]
        %v2547 = vld [vmem:[#allocation7 + $0x240] sm:$0xff]
        %v2548 = vld [vmem:[#allocation7 + $0x248] sm:$0xff]
        %v2549 = vld [vmem:[#allocation7 + $0x250] sm:$0xff]
        %v2550 = vld [vmem:[#allocation7 + $0x258] sm:$0xff]
        %v2551 = vld [vmem:[#allocation7 + $0x260] sm:$0xff]
        %v2552 = vld [vmem:[#allocation7 + $0x268] sm:$0xff]
        %v2553 = vld [vmem:[#allocation7 + $0x270] sm:$0xff]
        %v2554 = vld [vmem:[#allocation7 + $0x278] sm:$0xff]
        %v2555 = vld [vmem:[#allocation7 + $0x280] sm:$0xff]
        %v2556 = vld [vmem:[#allocation7 + $0x288] sm:$0xff]
        %v2557 = vld [vmem:[#allocation7 + $0x290] sm:$0xff]
        %v2558 = vld [vmem:[#allocation7 + $0x298] sm:$0xff]
        %v2559 = vld [vmem:[#allocation7 + $0x2a0] sm:$0xff]
        %v2560 = vld [vmem:[#allocation7 + $0x2a8] sm:$0xff]
        %v2561 = vld [vmem:[#allocation7 + $0x2b0] sm:$0xff]
        %v2562 = vld [vmem:[#allocation7 + $0x2b8] sm:$0xff]
        %v2563 = vld [vmem:[#allocation7 + $0x2c0] sm:$0xff]
        %v2564 = vld [vmem:[#allocation7 + $0x2c8] sm:$0xff]
        %v2565 = vld [vmem:[#allocation7 + $0x2d0] sm:$0xff]
        %v2566 = vld [vmem:[#allocation7 + $0x2d8] sm:$0xff]
        %v2567 = vld [vmem:[#allocation7 + $0x2e0] sm:$0xff]
        %v2568 = vld [vmem:[#allocation7 + $0x2e8] sm:$0xff]
        %v2569 = vld [vmem:[#allocation7 + $0x2f0] sm:$0xff]
        %v2570 = vld [vmem:[#allocation7 + $0x2f8] sm:$0xff]
        %v2571 = vld [vmem:[#allocation7 + $0x300] sm:$0xff]
        %v2572 = vld [vmem:[#allocation7 + $0x308] sm:$0xff]
        %v2573 = vld [vmem:[#allocation7 + $0x310] sm:$0xff]
        %v2574 = vld [vmem:[#allocation7 + $0x318] sm:$0xff]
        %v2575 = vld [vmem:[#allocation7 + $0x320] sm:$0xff]
        %v2576 = vld [vmem:[#allocation7 + $0x328] sm:$0xff]
        %v2577 = vld [vmem:[#allocation7 + $0x330] sm:$0xff]
        %v2578 = vld [vmem:[#allocation7 + $0x338] sm:$0xff]
        %v2579 = vld [vmem:[#allocation7 + $0x340] sm:$0xff]
        %v2580 = vld [vmem:[#allocation7 + $0x348] sm:$0xff]
        %v2581 = vld [vmem:[#allocation7 + $0x350] sm:$0xff]
        %v2582 = vld [vmem:[#allocation7 + $0x358] sm:$0xff]
        %v2583 = vld [vmem:[#allocation7 + $0x360] sm:$0xff]
        %v2584 = vld [vmem:[#allocation7 + $0x368] sm:$0xff]
        %v2585 = vld [vmem:[#allocation7 + $0x370] sm:$0xff]
        %v2586 = vld [vmem:[#allocation7 + $0x378] sm:$0xff]
        %v2587 = vld [vmem:[#allocation7 + $0x380] sm:$0xff]
        %v2588 = vld [vmem:[#allocation7 + $0x388] sm:$0xff]
        %v2589 = vld [vmem:[#allocation7 + $0x390] sm:$0xff]
        %v2590 = vld [vmem:[#allocation7 + $0x398] sm:$0xff]
        %v2591 = vld [vmem:[#allocation7 + $0x3a0] sm:$0xff]
        %v2592 = vld [vmem:[#allocation7 + $0x3a8] sm:$0xff]
        %v2593 = vld [vmem:[#allocation7 + $0x3b0] sm:$0xff]
        %v2594 = vld [vmem:[#allocation7 + $0x3b8] sm:$0xff]
        %v2595 = vld [vmem:[#allocation7 + $0x3c0] sm:$0xff]
        %v2596 = vld [vmem:[#allocation7 + $0x3c8] sm:$0xff]
        %v2597 = vld [vmem:[#allocation7 + $0x3d0] sm:$0xff]
        %v2598 = vld [vmem:[#allocation7 + $0x3d8] sm:$0xff]
        %v2599 = vld [vmem:[#allocation7 + $0x3e0] sm:$0xff]
        %v2600 = vld [vmem:[#allocation7 + $0x3e8] sm:$0xff]
        %v2601 = vld [vmem:[#allocation7 + $0x3f0] sm:$0xff]
        %v2602 = vld [vmem:[#allocation7 + $0x3f8] sm:$0xff]
        %v2603 = vld [vmem:[#allocation7 + $0x400] sm:$0xff]
        %v2604 = vld [vmem:[#allocation7 + $0x408] sm:$0xff]
        %v2605 = vld [vmem:[#allocation7 + $0x410] sm:$0xff]
        %v2606 = vld [vmem:[#allocation7 + $0x418] sm:$0xff]
        %v2607 = vld [vmem:[#allocation7 + $0x420] sm:$0xff]
        %v2608 = vld [vmem:[#allocation7 + $0x428] sm:$0xff]
        %v2609 = vld [vmem:[#allocation7 + $0x430] sm:$0xff]
        %v2610 = vld [vmem:[#allocation7 + $0x438] sm:$0xff]
        %v2611 = vld [vmem:[#allocation7 + $0x440] sm:$0xff]
        %v2612 = vld [vmem:[#allocation7 + $0x448] sm:$0xff]
        %v2613 = vld [vmem:[#allocation7 + $0x450] sm:$0xff]
        %v2614 = vld [vmem:[#allocation7 + $0x458] sm:$0xff]
        %v2615 = vld [vmem:[#allocation7 + $0x460] sm:$0xff]
        %v2616 = vld [vmem:[#allocation7 + $0x468] sm:$0xff]
        %v2617 = vld [vmem:[#allocation7 + $0x470] sm:$0xff]
        %v2618 = vld [vmem:[#allocation7 + $0x478] sm:$0xff]
        %v2651 = vrot.slane %v2443, 7
        %v2652 = vrot.slane %v2444, 7
        %v2653 = vsel %vm850, %v2651, %v2652
        %v2654 = vrot.slane %v2445, 7
        %v2655 = vrot.slane %v2446, 7
        %v2656 = vsel %vm850, %v2654, %v2655
        %v2657 = vrot.slane %v2447, 7
        %v2658 = vrot.slane %v2448, 7
        %v2659 = vsel %vm850, %v2657, %v2658
        %v2660 = vrot.slane %v2449, 7
        %v2661 = vrot.slane %v2450, 7
        %v2662 = vsel %vm850, %v2660, %v2661
        %v2663 = vrot.slane %v2451, 7
        %v2664 = vrot.slane %v2452, 7
        %v2665 = vsel %vm850, %v2663, %v2664
        %v2666 = vrot.slane %v2453, 7
        %v2667 = vrot.slane %v2454, 7
        %v2668 = vsel %vm850, %v2666, %v2667
        %v2669 = vrot.slane %v2455, 7
        %v2670 = vrot.slane %v2456, 7
        %v2671 = vsel %vm850, %v2669, %v2670
        %v2672 = vrot.slane %v2457, 7
        %v2673 = vrot.slane %v2458, 7
        %v2674 = vsel %vm850, %v2672, %v2673
        %v2675 = vrot.slane %v2459, 7
        %v2676 = vrot.slane %v2460, 7
        %v2677 = vsel %vm850, %v2675, %v2676
        %v2678 = vrot.slane %v2461, 7
        %v2679 = vrot.slane %v2462, 7
        %v2680 = vsel %vm850, %v2678, %v2679
        %v2681 = vrot.slane %v2463, 7
        %v2682 = vrot.slane %v2464, 7
        %v2683 = vsel %vm850, %v2681, %v2682
        %v2684 = vrot.slane %v2465, 7
        %v2685 = vrot.slane %v2466, 7
        %v2686 = vsel %vm850, %v2684, %v2685
        %v2687 = vrot.slane %v2467, 7
        %v2688 = vrot.slane %v2468, 7
        %v2689 = vsel %vm850, %v2687, %v2688
        %v2690 = vrot.slane %v2469, 7
        %v2691 = vrot.slane %v2470, 7
        %v2692 = vsel %vm850, %v2690, %v2691
        %v2693 = vrot.slane %v2471, 7
        %v2694 = vrot.slane %v2472, 7
        %v2695 = vsel %vm850, %v2693, %v2694
        %v2696 = vrot.slane %v2473, 7
        %v2697 = vrot.slane %v2474, 7
        %v2698 = vsel %vm850, %v2696, %v2697
        %v2747 = vsel %vm850, 0.0, %v2651
        %v2748 = vsel %vm850, 0.0, %v2654
        %v2749 = vsel %vm850, 0.0, %v2657
        %v2750 = vsel %vm850, 0.0, %v2660
        %v2751 = vsel %vm850, 0.0, %v2663
        %v2752 = vsel %vm850, 0.0, %v2666
        %v2753 = vsel %vm850, 0.0, %v2669
        %v2754 = vsel %vm850, 0.0, %v2672
        %v2755 = vsel %vm850, 0.0, %v2675
        %v2756 = vsel %vm850, 0.0, %v2678
        %v2757 = vsel %vm850, 0.0, %v2681
        %v2758 = vsel %vm850, 0.0, %v2684
        %v2759 = vsel %vm850, 0.0, %v2687
        %v2760 = vsel %vm850, 0.0, %v2690
        %v2761 = vsel %vm850, 0.0, %v2693
        %v2762 = vsel %vm850, 0.0, %v2696
        %v2763 = vsel %vm850, %v2652, 0.0
        %v2764 = vsel %vm850, %v2655, 0.0
        %v2765 = vsel %vm850, %v2658, 0.0
        %v2766 = vsel %vm850, %v2661, 0.0
        %v2767 = vsel %vm850, %v2664, 0.0
        %v2768 = vsel %vm850, %v2667, 0.0
        %v2769 = vsel %vm850, %v2670, 0.0
        %v2770 = vsel %vm850, %v2673, 0.0
        %v2771 = vsel %vm850, %v2676, 0.0
        %v2772 = vsel %vm850, %v2679, 0.0
        %v2773 = vsel %vm850, %v2682, 0.0
        %v2774 = vsel %vm850, %v2685, 0.0
        %v2775 = vsel %vm850, %v2688, 0.0
        %v2776 = vsel %vm850, %v2691, 0.0
        %v2777 = vsel %vm850, %v2694, 0.0
        %v2778 = vsel %vm850, %v2697, 0.0
        %v2809 = vrot.slane %v2747, 1
        %v2810 = vrot.slane %v2653, 1
        %v2811 = vsel %vm1010, %v2809, %v2810
        %v2812 = vrot.slane %v2763, 1
        %v2813 = vsel %vm1010, %v2810, %v2812
        %v2814 = vrot.slane %v2748, 1
        %v2815 = vrot.slane %v2656, 1
        %v2816 = vsel %vm1010, %v2814, %v2815
        %v2817 = vrot.slane %v2764, 1
        %v2818 = vsel %vm1010, %v2815, %v2817
        %v2819 = vrot.slane %v2749, 1
        %v2820 = vrot.slane %v2659, 1
        %v2821 = vsel %vm1010, %v2819, %v2820
        %v2822 = vrot.slane %v2765, 1
        %v2823 = vsel %vm1010, %v2820, %v2822
        %v2824 = vrot.slane %v2750, 1
        %v2825 = vrot.slane %v2662, 1
        %v2826 = vsel %vm1010, %v2824, %v2825
        %v2827 = vrot.slane %v2766, 1
        %v2828 = vsel %vm1010, %v2825, %v2827
        %v2829 = vrot.slane %v2751, 1
        %v2830 = vrot.slane %v2665, 1
        %v2831 = vsel %vm1010, %v2829, %v2830
        %v2832 = vrot.slane %v2767, 1
        %v2833 = vsel %vm1010, %v2830, %v2832
        %v2834 = vrot.slane %v2752, 1
        %v2835 = vrot.slane %v2668, 1
        %v2836 = vsel %vm1010, %v2834, %v2835
        %v2837 = vrot.slane %v2768, 1
        %v2838 = vsel %vm1010, %v2835, %v2837
        %v2839 = vrot.slane %v2753, 1
        %v2840 = vrot.slane %v2671, 1
        %v2841 = vsel %vm1010, %v2839, %v2840
        %v2842 = vrot.slane %v2769, 1
        %v2843 = vsel %vm1010, %v2840, %v2842
        %v2844 = vrot.slane %v2754, 1
        %v2845 = vrot.slane %v2674, 1
        %v2846 = vsel %vm1010, %v2844, %v2845
        %v2847 = vrot.slane %v2770, 1
        %v2848 = vsel %vm1010, %v2845, %v2847
        %v2849 = vrot.slane %v2755, 1
        %v2850 = vrot.slane %v2677, 1
        %v2851 = vsel %vm1010, %v2849, %v2850
        %v2852 = vrot.slane %v2771, 1
        %v2853 = vsel %vm1010, %v2850, %v2852
        %v2854 = vrot.slane %v2756, 1
        %v2855 = vrot.slane %v2680, 1
        %v2856 = vsel %vm1010, %v2854, %v2855
        %v2857 = vrot.slane %v2772, 1
        %v2858 = vsel %vm1010, %v2855, %v2857
        %v2859 = vrot.slane %v2757, 1
        %v2860 = vrot.slane %v2683, 1
        %v2861 = vsel %vm1010, %v2859, %v2860
        %v2862 = vrot.slane %v2773, 1
        %v2863 = vsel %vm1010, %v2860, %v2862
        %v2864 = vrot.slane %v2758, 1
        %v2865 = vrot.slane %v2686, 1
        %v2866 = vsel %vm1010, %v2864, %v2865
        %v2867 = vrot.slane %v2774, 1
        %v2868 = vsel %vm1010, %v2865, %v2867
        %v2869 = vrot.slane %v2759, 1
        %v2870 = vrot.slane %v2689, 1
        %v2871 = vsel %vm1010, %v2869, %v2870
        %v2872 = vrot.slane %v2775, 1
        %v2873 = vsel %vm1010, %v2870, %v2872
        %v2874 = vrot.slane %v2760, 1
        %v2875 = vrot.slane %v2692, 1
        %v2876 = vsel %vm1010, %v2874, %v2875
        %v2877 = vrot.slane %v2776, 1
        %v2878 = vsel %vm1010, %v2875, %v2877
        %v2879 = vrot.slane %v2761, 1
        %v2880 = vrot.slane %v2695, 1
        %v2881 = vsel %vm1010, %v2879, %v2880
        %v2882 = vrot.slane %v2777, 1
        %v2883 = vsel %vm1010, %v2880, %v2882
        %v2915 = vrot.slane %v2747, 2
        %v2916 = vrot.slane %v2653, 2
        %v2917 = vsel %vm1181, %v2915, %v2916
        %v2918 = vrot.slane %v2763, 2
        %v2919 = vsel %vm1181, %v2916, %v2918
        %v2920 = vrot.slane %v2748, 2
        %v2921 = vrot.slane %v2656, 2
        %v2922 = vsel %vm1181, %v2920, %v2921
        %v2923 = vrot.slane %v2764, 2
        %v2924 = vsel %vm1181, %v2921, %v2923
        %v2925 = vrot.slane %v2749, 2
        %v2926 = vrot.slane %v2659, 2
        %v2927 = vsel %vm1181, %v2925, %v2926
        %v2928 = vrot.slane %v2765, 2
        %v2929 = vsel %vm1181, %v2926, %v2928
        %v2930 = vrot.slane %v2750, 2
        %v2931 = vrot.slane %v2662, 2
        %v2932 = vsel %vm1181, %v2930, %v2931
        %v2933 = vrot.slane %v2766, 2
        %v2934 = vsel %vm1181, %v2931, %v2933
        %v2935 = vrot.slane %v2751, 2
        %v2936 = vrot.slane %v2665, 2
        %v2937 = vsel %vm1181, %v2935, %v2936
        %v2938 = vrot.slane %v2767, 2
        %v2939 = vsel %vm1181, %v2936, %v2938
        %v2940 = vrot.slane %v2752, 2
        %v2941 = vrot.slane %v2668, 2
        %v2942 = vsel %vm1181, %v2940, %v2941
        %v2943 = vrot.slane %v2768, 2
        %v2944 = vsel %vm1181, %v2941, %v2943
        %v2945 = vrot.slane %v2753, 2
        %v2946 = vrot.slane %v2671, 2
        %v2947 = vsel %vm1181, %v2945, %v2946
        %v2948 = vrot.slane %v2769, 2
        %v2949 = vsel %vm1181, %v2946, %v2948
        %v2950 = vrot.slane %v2754, 2
        %v2951 = vrot.slane %v2674, 2
        %v2952 = vsel %vm1181, %v2950, %v2951
        %v2953 = vrot.slane %v2770, 2
        %v2954 = vsel %vm1181, %v2951, %v2953
        %v2955 = vrot.slane %v2755, 2
        %v2956 = vrot.slane %v2677, 2
        %v2957 = vsel %vm1181, %v2955, %v2956
        %v2958 = vrot.slane %v2771, 2
        %v2959 = vsel %vm1181, %v2956, %v2958
        %v2960 = vrot.slane %v2756, 2
        %v2961 = vrot.slane %v2680, 2
        %v2962 = vsel %vm1181, %v2960, %v2961
        %v2963 = vrot.slane %v2772, 2
        %v2964 = vsel %vm1181, %v2961, %v2963
        %v2965 = vrot.slane %v2757, 2
        %v2966 = vrot.slane %v2683, 2
        %v2967 = vsel %vm1181, %v2965, %v2966
        %v2968 = vrot.slane %v2773, 2
        %v2969 = vsel %vm1181, %v2966, %v2968
        %v2970 = vrot.slane %v2758, 2
        %v2971 = vrot.slane %v2686, 2
        %v2972 = vsel %vm1181, %v2970, %v2971
        %v2973 = vrot.slane %v2774, 2
        %v2974 = vsel %vm1181, %v2971, %v2973
        %v2975 = vrot.slane %v2759, 2
        %v2976 = vrot.slane %v2689, 2
        %v2977 = vsel %vm1181, %v2975, %v2976
        %v2978 = vrot.slane %v2775, 2
        %v2979 = vsel %vm1181, %v2976, %v2978
        %v2980 = vrot.slane %v2760, 2
        %v2981 = vrot.slane %v2692, 2
        %v2982 = vsel %vm1181, %v2980, %v2981
        %v2983 = vrot.slane %v2776, 2
        %v2984 = vsel %vm1181, %v2981, %v2983
        %v2985 = vrot.slane %v2761, 2
        %v2986 = vrot.slane %v2695, 2
        %v2987 = vsel %vm1181, %v2985, %v2986
        %v2988 = vrot.slane %v2777, 2
        %v2989 = vsel %vm1181, %v2986, %v2988
        %v3022 = vrot.slane %v2762, 1
        %v3023 = vrot.slane %v2698, 1
        %v3024 = vsel %vm1010, %v3022, %v3023
        %v3025 = vrot.slane %v2778, 1
        %v3026 = vsel %vm1010, %v3023, %v3025
        %v3029 = vrot.slane %v2762, 2
        %v3030 = vrot.slane %v2698, 2
        %v3031 = vsel %vm1181, %v3029, %v3030
        %v3032 = vrot.slane %v2778, 2
        %v3033 = vsel %vm1181, %v3030, %v3032
        %3036 = vmatprep.subr.mxu0 0.0
        %3037 = vmatpush1.msra.mxu0 %v2490
        %3038 = vmatprep.subr.mxu0 0.0
        %3039 = vmatpush1.msra.mxu0 %v2489
        %3040 = vmatprep.subr.mxu0 0.0
        %3041 = vmatpush1.msra.mxu0 %v2488
        %3042 = vmatprep.subr.mxu0 0.0
        %3043 = vmatpush1.msra.mxu0 %v2487
        %3044 = vmatprep.subr.mxu0 0.0
        %3045 = vmatpush1.msra.mxu0 %v2486
        %3046 = vmatprep.subr.mxu0 0.0
        %3047 = vmatpush1.msra.mxu0 %v2485
        %3048 = vmatprep.subr.mxu0 0.0
        %3049 = vmatpush1.msra.mxu0 %v2484
        %3050 = vmatprep.subr.mxu0 0.0
        %3051 = vmatpush1.msra.mxu0 %v2483
        %3052 = vmatprep.subr.mxu0 0.0
        %3053 = vmatpush1.msra.mxu0 %v2482
        %3054 = vmatprep.subr.mxu0 0.0
        %3055 = vmatpush1.msra.mxu0 %v2481
        %3056 = vmatprep.subr.mxu0 0.0
        %3057 = vmatpush1.msra.mxu0 %v2480
        %3058 = vmatprep.subr.mxu0 0.0
        %3059 = vmatpush1.msra.mxu0 %v2479
        %3060 = vmatprep.subr.mxu0 0.0
        %3061 = vmatpush1.msra.mxu0 %v2478
        %3062 = vmatprep.subr.mxu0 0.0
        %3063 = vmatpush1.msra.mxu0 %v2477
        %3064 = vmatprep.subr.mxu0 0.0
        %3065 = vmatpush1.msra.mxu0 %v2476
        %3066 = vmatprep.subr.mxu0 0.0
        %3067 = vmatpush1.msra.mxu0 %v2475
        %3068 = vmatprep.subr.mxu0 0.0
        %3069 = vmatpush2.msra.mxu0 %v2506
        %3070 = vmatprep.subr.mxu0 0.0
        %3071 = vmatpush2.msra.mxu0 %v2505
        %3072 = vmatprep.subr.mxu0 0.0
        %3073 = vmatpush2.msra.mxu0 %v2504
        %3074 = vmatprep.subr.mxu0 0.0
        %3075 = vmatpush2.msra.mxu0 %v2503
        %3076 = vmatprep.subr.mxu0 0.0
        %3077 = vmatpush2.msra.mxu0 %v2502
        %3078 = vmatprep.subr.mxu0 0.0
        %3079 = vmatpush2.msra.mxu0 %v2501
        %3080 = vmatprep.subr.mxu0 0.0
        %3081 = vmatpush2.msra.mxu0 %v2500
        %3082 = vmatprep.subr.mxu0 0.0
        %3083 = vmatpush2.msra.mxu0 %v2499
        %3084 = vmatprep.subr.mxu0 0.0
        %3085 = vmatpush2.msra.mxu0 %v2498
        %3086 = vmatprep.subr.mxu0 0.0
        %3087 = vmatpush2.msra.mxu0 %v2497
        %3088 = vmatprep.subr.mxu0 0.0
        %3089 = vmatpush2.msra.mxu0 %v2496
        %3090 = vmatprep.subr.mxu0 0.0
        %3091 = vmatpush2.msra.mxu0 %v2495
        %3092 = vmatprep.subr.mxu0 0.0
        %3093 = vmatpush2.msra.mxu0 %v2494
        %3094 = vmatprep.subr.mxu0 0.0
        %3095 = vmatpush2.msra.mxu0 %v2493
        %3096 = vmatprep.subr.mxu0 0.0
        %3097 = vmatpush2.msra.mxu0 %v2492
        %3098 = vmatprep.subr.mxu0 0.0
        %3099 = vmatpush2.msra.mxu0 %v2491
        %3100 = vmatprep.mubr.f32.mxu0 %v1012
        %3101 = vmatmul.mubr.f32.gmra.mxu0 0.0
        %v3102 = vpop.f32.mrf.mxu0
        %v3103 = vadd.f32 0.0, %v3102
        %v3104 = vpop.f32.mrf.mxu0
        %3105 = vmatprep.mubr.f32.mxu0 %v1012
        %3106 = vmatmul.mubr.f32.gmra.mxu0 0.0
        %v3107 = vpop.f32.mrf.mxu0
        %v3108 = vadd.f32 0.0, %v3107
        %v3109 = vpop.f32.mrf.mxu0
        %3110 = vmatprep.mubr.f32.mxu0 %v2811
        %3111 = vmatmul.mubr.f32.gmra.mxu0 %v2747
        %v3112 = vpop.f32.mrf.mxu0
        %v3113 = vadd.f32 0.0, %v3112
        %v3114 = vpop.f32.mrf.mxu0
        %3115 = vmatprep.mubr.f32.mxu0 %v2813
        %3116 = vmatmul.mubr.f32.gmra.mxu0 %v2653
        %v3117 = vpop.f32.mrf.mxu0
        %v3118 = vadd.f32 0.0, %v3117
        %v3119 = vpop.f32.mrf.mxu0
        %3120 = vmatprep.mubr.f32.mxu0 %v2816
        %3121 = vmatmul.mubr.f32.gmra.mxu0 %v2748
        %v3122 = vpop.f32.mrf.mxu0
        %v3123 = vadd.f32 0.0, %v3122
        %v3124 = vpop.f32.mrf.mxu0
        %3125 = vmatprep.mubr.f32.mxu0 %v2818
        %3126 = vmatmul.mubr.f32.gmra.mxu0 %v2656
        %v3127 = vpop.f32.mrf.mxu0
        %v3128 = vadd.f32 0.0, %v3127
        %v3129 = vpop.f32.mrf.mxu0
        %3130 = vmatprep.mubr.f32.mxu0 %v2821
        %3131 = vmatmul.mubr.f32.gmra.mxu0 %v2749
        %v3132 = vpop.f32.mrf.mxu0
        %v3133 = vadd.f32 0.0, %v3132
        %v3134 = vpop.f32.mrf.mxu0
        %3135 = vmatprep.mubr.f32.mxu0 %v2823
        %3136 = vmatmul.mubr.f32.gmra.mxu0 %v2659
        %v3137 = vpop.f32.mrf.mxu0
        %v3138 = vadd.f32 0.0, %v3137
        %v3139 = vpop.f32.mrf.mxu0
        %3140 = vmatprep.mubr.f32.mxu0 %v2826
        %3141 = vmatmul.mubr.f32.gmra.mxu0 %v2750
        %v3142 = vpop.f32.mrf.mxu0
        %v3143 = vadd.f32 0.0, %v3142
        %v3144 = vpop.f32.mrf.mxu0
        %3145 = vmatprep.mubr.f32.mxu0 %v2828
        %3146 = vmatmul.mubr.f32.gmra.mxu0 %v2662
        %v3147 = vpop.f32.mrf.mxu0
        %v3148 = vadd.f32 0.0, %v3147
        %v3149 = vpop.f32.mrf.mxu0
        %3150 = vmatprep.mubr.f32.mxu0 %v2831
        %3151 = vmatmul.mubr.f32.gmra.mxu0 %v2751
        %v3152 = vpop.f32.mrf.mxu0
        %v3153 = vadd.f32 0.0, %v3152
        %v3154 = vpop.f32.mrf.mxu0
        %3155 = vmatprep.mubr.f32.mxu0 %v2833
        %3156 = vmatmul.mubr.f32.gmra.mxu0 %v2665
        %v3157 = vpop.f32.mrf.mxu0
        %v3158 = vadd.f32 0.0, %v3157
        %v3159 = vpop.f32.mrf.mxu0
        %3160 = vmatprep.mubr.f32.mxu0 %v2836
        %3161 = vmatmul.mubr.f32.gmra.mxu0 %v2752
        %v3162 = vpop.f32.mrf.mxu0
        %v3163 = vadd.f32 0.0, %v3162
        %v3164 = vpop.f32.mrf.mxu0
        %3165 = vmatprep.mubr.f32.mxu0 %v2838
        %3166 = vmatmul.mubr.f32.gmra.mxu0 %v2668
        %v3167 = vpop.f32.mrf.mxu0
        %v3168 = vadd.f32 0.0, %v3167
        %v3169 = vpop.f32.mrf.mxu0
        %3170 = vmatprep.mubr.f32.mxu0 %v2841
        %3171 = vmatmul.mubr.f32.gmra.mxu0 %v2753
        %v3172 = vpop.f32.mrf.mxu0
        %v3173 = vadd.f32 0.0, %v3172
        %v3174 = vpop.f32.mrf.mxu0
        %3175 = vmatprep.mubr.f32.mxu0 %v2843
        %3176 = vmatmul.mubr.f32.gmra.mxu0 %v2671
        %v3177 = vpop.f32.mrf.mxu0
        %v3178 = vadd.f32 0.0, %v3177
        %v3179 = vpop.f32.mrf.mxu0
        %3180 = vmatprep.mubr.f32.mxu0 %v2846
        %3181 = vmatmul.mubr.f32.gmra.mxu0 %v2754
        %v3182 = vpop.f32.mrf.mxu0
        %v3183 = vadd.f32 0.0, %v3182
        %v3184 = vpop.f32.mrf.mxu0
        %3185 = vmatprep.mubr.f32.mxu0 %v2848
        %3186 = vmatmul.mubr.f32.gmra.mxu0 %v2674
        %v3187 = vpop.f32.mrf.mxu0
        %v3188 = vadd.f32 0.0, %v3187
        %v3189 = vpop.f32.mrf.mxu0
        %3190 = vmatprep.mubr.f32.mxu0 %v2851
        %3191 = vmatmul.mubr.f32.gmra.mxu0 %v2755
        %v3192 = vpop.f32.mrf.mxu0
        %v3193 = vadd.f32 0.0, %v3192
        %v3194 = vpop.f32.mrf.mxu0
        %3195 = vmatprep.mubr.f32.mxu0 %v2853
        %3196 = vmatmul.mubr.f32.gmra.mxu0 %v2677
        %v3197 = vpop.f32.mrf.mxu0
        %v3198 = vadd.f32 0.0, %v3197
        %v3199 = vpop.f32.mrf.mxu0
        %3200 = vmatprep.mubr.f32.mxu0 %v2856
        %3201 = vmatmul.mubr.f32.gmra.mxu0 %v2756
        %v3202 = vpop.f32.mrf.mxu0
        %v3203 = vadd.f32 0.0, %v3202
        %v3204 = vpop.f32.mrf.mxu0
        %3205 = vmatprep.mubr.f32.mxu0 %v2858
        %3206 = vmatmul.mubr.f32.gmra.mxu0 %v2680
        %v3207 = vpop.f32.mrf.mxu0
        %v3208 = vadd.f32 0.0, %v3207
        %v3209 = vpop.f32.mrf.mxu0
        %3210 = vmatprep.mubr.f32.mxu0 %v2861
        %3211 = vmatmul.mubr.f32.gmra.mxu0 %v2757
        %v3212 = vpop.f32.mrf.mxu0
        %v3213 = vadd.f32 0.0, %v3212
        %v3214 = vpop.f32.mrf.mxu0
        %3215 = vmatprep.mubr.f32.mxu0 %v2863
        %3216 = vmatmul.mubr.f32.gmra.mxu0 %v2683
        %v3217 = vpop.f32.mrf.mxu0
        %v3218 = vadd.f32 0.0, %v3217
        %v3219 = vpop.f32.mrf.mxu0
        %3220 = vmatprep.mubr.f32.mxu0 %v2866
        %3221 = vmatmul.mubr.f32.gmra.mxu0 %v2758
        %v3222 = vpop.f32.mrf.mxu0
        %v3223 = vadd.f32 0.0, %v3222
        %v3224 = vpop.f32.mrf.mxu0
        %3225 = vmatprep.mubr.f32.mxu0 %v2868
        %3226 = vmatmul.mubr.f32.gmra.mxu0 %v2686
        %v3227 = vpop.f32.mrf.mxu0
        %v3228 = vadd.f32 0.0, %v3227
        %v3229 = vpop.f32.mrf.mxu0
        %3230 = vmatprep.mubr.f32.mxu0 %v2871
        %3231 = vmatmul.mubr.f32.gmra.mxu0 %v2759
        %v3232 = vpop.f32.mrf.mxu0
        %v3233 = vadd.f32 0.0, %v3232
        %v3234 = vpop.f32.mrf.mxu0
        %3235 = vmatprep.mubr.f32.mxu0 %v2873
        %3236 = vmatmul.mubr.f32.gmra.mxu0 %v2689
        %v3237 = vpop.f32.mrf.mxu0
        %v3238 = vadd.f32 0.0, %v3237
        %v3239 = vpop.f32.mrf.mxu0
        %3240 = vmatprep.mubr.f32.mxu0 %v2876
        %3241 = vmatmul.mubr.f32.gmra.mxu0 %v2760
        %v3242 = vpop.f32.mrf.mxu0
        %v3243 = vadd.f32 0.0, %v3242
        %v3244 = vpop.f32.mrf.mxu0
        %3245 = vmatprep.mubr.f32.mxu0 %v2878
        %3246 = vmatmul.mubr.f32.gmra.mxu0 %v2692
        %v3247 = vpop.f32.mrf.mxu0
        %v3248 = vadd.f32 0.0, %v3247
        %v3249 = vpop.f32.mrf.mxu0
        %3250 = vmatprep.mubr.f32.mxu0 %v2881
        %3251 = vmatmul.mubr.f32.gmra.mxu0 %v2761
        %v3252 = vpop.f32.mrf.mxu0
        %v3253 = vadd.f32 0.0, %v3252
        %v3254 = vpop.f32.mrf.mxu0
        %3255 = vmatprep.mubr.f32.mxu0 %v2883
        %3256 = vmatmul.mubr.f32.gmra.mxu0 %v2695
        %v3257 = vpop.f32.mrf.mxu0
        %v3258 = vadd.f32 0.0, %v3257
        %v3259 = vpop.f32.mrf.mxu0
        %3260 = vdwg.mxu0
        %3261 = vmatprep.subr.mxu0 0.0
        %3262 = vmatpush1.msra.mxu0 %v2522
        %3263 = vmatprep.subr.mxu0 0.0
        %3264 = vmatpush1.msra.mxu0 %v2521
        %3265 = vmatprep.subr.mxu0 0.0
        %3266 = vmatpush1.msra.mxu0 %v2520
        %3267 = vmatprep.subr.mxu0 0.0
        %3268 = vmatpush1.msra.mxu0 %v2519
        %3269 = vmatprep.subr.mxu0 0.0
        %3270 = vmatpush1.msra.mxu0 %v2518
        %3271 = vmatprep.subr.mxu0 0.0
        %3272 = vmatpush1.msra.mxu0 %v2517
        %3273 = vmatprep.subr.mxu0 0.0
        %3274 = vmatpush1.msra.mxu0 %v2516
        %3275 = vmatprep.subr.mxu0 0.0
        %3276 = vmatpush1.msra.mxu0 %v2515
        %3277 = vmatprep.subr.mxu0 0.0
        %3278 = vmatpush1.msra.mxu0 %v2514
        %3279 = vmatprep.subr.mxu0 0.0
        %3280 = vmatpush1.msra.mxu0 %v2513
        %3281 = vmatprep.subr.mxu0 0.0
        %3282 = vmatpush1.msra.mxu0 %v2512
        %3283 = vmatprep.subr.mxu0 0.0
        %3284 = vmatpush1.msra.mxu0 %v2511
        %3285 = vmatprep.subr.mxu0 0.0
        %3286 = vmatpush1.msra.mxu0 %v2510
        %3287 = vmatprep.subr.mxu0 0.0
        %3288 = vmatpush1.msra.mxu0 %v2509
        %3289 = vmatprep.subr.mxu0 0.0
        %3290 = vmatpush1.msra.mxu0 %v2508
        %3291 = vmatprep.subr.mxu0 0.0
        %3292 = vmatpush1.msra.mxu0 %v2507
        %3293 = vmatprep.subr.mxu0 0.0
        %3294 = vmatpush2.msra.mxu0 %v2538
        %3295 = vmatprep.subr.mxu0 0.0
        %3296 = vmatpush2.msra.mxu0 %v2537
        %3297 = vmatprep.subr.mxu0 0.0
        %3298 = vmatpush2.msra.mxu0 %v2536
        %3299 = vmatprep.subr.mxu0 0.0
        %3300 = vmatpush2.msra.mxu0 %v2535
        %3301 = vmatprep.subr.mxu0 0.0
        %3302 = vmatpush2.msra.mxu0 %v2534
        %3303 = vmatprep.subr.mxu0 0.0
        %3304 = vmatpush2.msra.mxu0 %v2533
        %3305 = vmatprep.subr.mxu0 0.0
        %3306 = vmatpush2.msra.mxu0 %v2532
        %3307 = vmatprep.subr.mxu0 0.0
        %3308 = vmatpush2.msra.mxu0 %v2531
        %3309 = vmatprep.subr.mxu0 0.0
        %3310 = vmatpush2.msra.mxu0 %v2530
        %3311 = vmatprep.subr.mxu0 0.0
        %3312 = vmatpush2.msra.mxu0 %v2529
        %3313 = vmatprep.subr.mxu0 0.0
        %3314 = vmatpush2.msra.mxu0 %v2528
        %3315 = vmatprep.subr.mxu0 0.0
        %3316 = vmatpush2.msra.mxu0 %v2527
        %3317 = vmatprep.subr.mxu0 0.0
        %3318 = vmatpush2.msra.mxu0 %v2526
        %3319 = vmatprep.subr.mxu0 0.0
        %3320 = vmatpush2.msra.mxu0 %v2525
        %3321 = vmatprep.subr.mxu0 0.0
        %3322 = vmatpush2.msra.mxu0 %v2524
        %3323 = vmatprep.subr.mxu0 0.0
        %3324 = vmatpush2.msra.mxu0 %v2523
        %3325 = vmatprep.mubr.f32.mxu0 %v2747
        %3326 = vmatmul.mubr.f32.gmra.mxu0 %v1183
        %v3327 = vpop.f32.mrf.mxu0
        %v3328 = vadd.f32 %v3103, %v3327
        %v3329 = vpop.f32.mrf.mxu0
        %3330 = vmatprep.mubr.f32.mxu0 %v2653
        %3331 = vmatmul.mubr.f32.gmra.mxu0 %v1183
        %v3332 = vpop.f32.mrf.mxu0
        %v3333 = vadd.f32 %v3108, %v3332
        %v3334 = vpop.f32.mrf.mxu0
        %3335 = vmatprep.mubr.f32.mxu0 %v2748
        %3336 = vmatmul.mubr.f32.gmra.mxu0 %v2917
        %v3337 = vpop.f32.mrf.mxu0
        %v3338 = vadd.f32 %v3113, %v3337
        %v3339 = vpop.f32.mrf.mxu0
        %3340 = vmatprep.mubr.f32.mxu0 %v2656
        %3341 = vmatmul.mubr.f32.gmra.mxu0 %v2919
        %v3342 = vpop.f32.mrf.mxu0
        %v3343 = vadd.f32 %v3118, %v3342
        %v3344 = vpop.f32.mrf.mxu0
        %3345 = vmatprep.mubr.f32.mxu0 %v2749
        %3346 = vmatmul.mubr.f32.gmra.mxu0 %v2922
        %v3347 = vpop.f32.mrf.mxu0
        %v3348 = vadd.f32 %v3123, %v3347
        %v3349 = vpop.f32.mrf.mxu0
        %3350 = vmatprep.mubr.f32.mxu0 %v2659
        %3351 = vmatmul.mubr.f32.gmra.mxu0 %v2924
        %v3352 = vpop.f32.mrf.mxu0
        %v3353 = vadd.f32 %v3128, %v3352
        %v3354 = vpop.f32.mrf.mxu0
        %3355 = vmatprep.mubr.f32.mxu0 %v2750
        %3356 = vmatmul.mubr.f32.gmra.mxu0 %v2927
        %v3357 = vpop.f32.mrf.mxu0
        %v3358 = vadd.f32 %v3133, %v3357
        %v3359 = vpop.f32.mrf.mxu0
        %3360 = vmatprep.mubr.f32.mxu0 %v2662
        %3361 = vmatmul.mubr.f32.gmra.mxu0 %v2929
        %v3362 = vpop.f32.mrf.mxu0
        %v3363 = vadd.f32 %v3138, %v3362
        %v3364 = vpop.f32.mrf.mxu0
        %3365 = vmatprep.mubr.f32.mxu0 %v2751
        %3366 = vmatmul.mubr.f32.gmra.mxu0 %v2932
        %v3367 = vpop.f32.mrf.mxu0
        %v3368 = vadd.f32 %v3143, %v3367
        %v3369 = vpop.f32.mrf.mxu0
        %3370 = vmatprep.mubr.f32.mxu0 %v2665
        %3371 = vmatmul.mubr.f32.gmra.mxu0 %v2934
        %v3372 = vpop.f32.mrf.mxu0
        %v3373 = vadd.f32 %v3148, %v3372
        %v3374 = vpop.f32.mrf.mxu0
        %3375 = vmatprep.mubr.f32.mxu0 %v2752
        %3376 = vmatmul.mubr.f32.gmra.mxu0 %v2937
        %v3377 = vpop.f32.mrf.mxu0
        %v3378 = vadd.f32 %v3153, %v3377
        %v3379 = vpop.f32.mrf.mxu0
        %3380 = vmatprep.mubr.f32.mxu0 %v2668
        %3381 = vmatmul.mubr.f32.gmra.mxu0 %v2939
        %v3382 = vpop.f32.mrf.mxu0
        %v3383 = vadd.f32 %v3158, %v3382
        %v3384 = vpop.f32.mrf.mxu0
        %3385 = vmatprep.mubr.f32.mxu0 %v2753
        %3386 = vmatmul.mubr.f32.gmra.mxu0 %v2942
        %v3387 = vpop.f32.mrf.mxu0
        %v3388 = vadd.f32 %v3163, %v3387
        %v3389 = vpop.f32.mrf.mxu0
        %3390 = vmatprep.mubr.f32.mxu0 %v2671
        %3391 = vmatmul.mubr.f32.gmra.mxu0 %v2944
        %v3392 = vpop.f32.mrf.mxu0
        %v3393 = vadd.f32 %v3168, %v3392
        %v3394 = vpop.f32.mrf.mxu0
        %3395 = vmatprep.mubr.f32.mxu0 %v2754
        %3396 = vmatmul.mubr.f32.gmra.mxu0 %v2947
        %v3397 = vpop.f32.mrf.mxu0
        %v3398 = vadd.f32 %v3173, %v3397
        %v3399 = vpop.f32.mrf.mxu0
        %3400 = vmatprep.mubr.f32.mxu0 %v2674
        %3401 = vmatmul.mubr.f32.gmra.mxu0 %v2949
        %v3402 = vpop.f32.mrf.mxu0
        %v3403 = vadd.f32 %v3178, %v3402
        %v3404 = vpop.f32.mrf.mxu0
        %3405 = vmatprep.mubr.f32.mxu0 %v2755
        %3406 = vmatmul.mubr.f32.gmra.mxu0 %v2952
        %v3407 = vpop.f32.mrf.mxu0
        %v3408 = vadd.f32 %v3183, %v3407
        %v3409 = vpop.f32.mrf.mxu0
        %3410 = vmatprep.mubr.f32.mxu0 %v2677
        %3411 = vmatmul.mubr.f32.gmra.mxu0 %v2954
        %v3412 = vpop.f32.mrf.mxu0
        %v3413 = vadd.f32 %v3188, %v3412
        %v3414 = vpop.f32.mrf.mxu0
        %3415 = vmatprep.mubr.f32.mxu0 %v2756
        %3416 = vmatmul.mubr.f32.gmra.mxu0 %v2957
        %v3417 = vpop.f32.mrf.mxu0
        %v3418 = vadd.f32 %v3193, %v3417
        %v3419 = vpop.f32.mrf.mxu0
        %3420 = vmatprep.mubr.f32.mxu0 %v2680
        %3421 = vmatmul.mubr.f32.gmra.mxu0 %v2959
        %v3422 = vpop.f32.mrf.mxu0
        %v3423 = vadd.f32 %v3198, %v3422
        %v3424 = vpop.f32.mrf.mxu0
        %3425 = vmatprep.mubr.f32.mxu0 %v2757
        %3426 = vmatmul.mubr.f32.gmra.mxu0 %v2962
        %v3427 = vpop.f32.mrf.mxu0
        %v3428 = vadd.f32 %v3203, %v3427
        %v3429 = vpop.f32.mrf.mxu0
        %3430 = vmatprep.mubr.f32.mxu0 %v2683
        %3431 = vmatmul.mubr.f32.gmra.mxu0 %v2964
        %v3432 = vpop.f32.mrf.mxu0
        %v3433 = vadd.f32 %v3208, %v3432
        %v3434 = vpop.f32.mrf.mxu0
        %3435 = vmatprep.mubr.f32.mxu0 %v2758
        %3436 = vmatmul.mubr.f32.gmra.mxu0 %v2967
        %v3437 = vpop.f32.mrf.mxu0
        %v3438 = vadd.f32 %v3213, %v3437
        %v3439 = vpop.f32.mrf.mxu0
        %3440 = vmatprep.mubr.f32.mxu0 %v2686
        %3441 = vmatmul.mubr.f32.gmra.mxu0 %v2969
        %v3442 = vpop.f32.mrf.mxu0
        %v3443 = vadd.f32 %v3218, %v3442
        %v3444 = vpop.f32.mrf.mxu0
        %3445 = vmatprep.mubr.f32.mxu0 %v2759
        %3446 = vmatmul.mubr.f32.gmra.mxu0 %v2972
        %v3447 = vpop.f32.mrf.mxu0
        %v3448 = vadd.f32 %v3223, %v3447
        %v3449 = vpop.f32.mrf.mxu0
        %3450 = vmatprep.mubr.f32.mxu0 %v2689
        %3451 = vmatmul.mubr.f32.gmra.mxu0 %v2974
        %v3452 = vpop.f32.mrf.mxu0
        %v3453 = vadd.f32 %v3228, %v3452
        %v3454 = vpop.f32.mrf.mxu0
        %3455 = vmatprep.mubr.f32.mxu0 %v2760
        %3456 = vmatmul.mubr.f32.gmra.mxu0 %v2977
        %v3457 = vpop.f32.mrf.mxu0
        %v3458 = vadd.f32 %v3233, %v3457
        %v3459 = vpop.f32.mrf.mxu0
        %3460 = vmatprep.mubr.f32.mxu0 %v2692
        %3461 = vmatmul.mubr.f32.gmra.mxu0 %v2979
        %v3462 = vpop.f32.mrf.mxu0
        %v3463 = vadd.f32 %v3238, %v3462
        %v3464 = vpop.f32.mrf.mxu0
        %3465 = vmatprep.mubr.f32.mxu0 %v2761
        %3466 = vmatmul.mubr.f32.gmra.mxu0 %v2982
        %v3467 = vpop.f32.mrf.mxu0
        %v3468 = vadd.f32 %v3243, %v3467
        %v3469 = vpop.f32.mrf.mxu0
        %3470 = vmatprep.mubr.f32.mxu0 %v2695
        %3471 = vmatmul.mubr.f32.gmra.mxu0 %v2984
        %v3472 = vpop.f32.mrf.mxu0
        %v3473 = vadd.f32 %v3248, %v3472
        %v3474 = vpop.f32.mrf.mxu0
        %3475 = vmatprep.mubr.f32.mxu0 %v2762
        %3476 = vmatmul.mubr.f32.gmra.mxu0 %v2987
        %v3477 = vpop.f32.mrf.mxu0
        %v3478 = vadd.f32 %v3253, %v3477
        %v3479 = vpop.f32.mrf.mxu0
        %3480 = vmatprep.mubr.f32.mxu0 %v2698
        %3481 = vmatmul.mubr.f32.gmra.mxu0 %v2989
        %v3482 = vpop.f32.mrf.mxu0
        %v3483 = vadd.f32 %v3258, %v3482
        %v3484 = vpop.f32.mrf.mxu0
        %3485 = vdwg.mxu0
        %3486 = vmatprep.subr.mxu0 0.0
        %3487 = vmatpush1.msra.mxu0 %v2554
        %3488 = vmatprep.subr.mxu0 0.0
        %3489 = vmatpush1.msra.mxu0 %v2553
        %3490 = vmatprep.subr.mxu0 0.0
        %3491 = vmatpush1.msra.mxu0 %v2552
        %3492 = vmatprep.subr.mxu0 0.0
        %3493 = vmatpush1.msra.mxu0 %v2551
        %3494 = vmatprep.subr.mxu0 0.0
        %3495 = vmatpush1.msra.mxu0 %v2550
        %3496 = vmatprep.subr.mxu0 0.0
        %3497 = vmatpush1.msra.mxu0 %v2549
        %3498 = vmatprep.subr.mxu0 0.0
        %3499 = vmatpush1.msra.mxu0 %v2548
        %3500 = vmatprep.subr.mxu0 0.0
        %3501 = vmatpush1.msra.mxu0 %v2547
        %3502 = vmatprep.subr.mxu0 0.0
        %3503 = vmatpush1.msra.mxu0 %v2546
        %3504 = vmatprep.subr.mxu0 0.0
        %3505 = vmatpush1.msra.mxu0 %v2545
        %3506 = vmatprep.subr.mxu0 0.0
        %3507 = vmatpush1.msra.mxu0 %v2544
        %3508 = vmatprep.subr.mxu0 0.0
        %3509 = vmatpush1.msra.mxu0 %v2543
        %3510 = vmatprep.subr.mxu0 0.0
        %3511 = vmatpush1.msra.mxu0 %v2542
        %3512 = vmatprep.subr.mxu0 0.0
        %3513 = vmatpush1.msra.mxu0 %v2541
        %3514 = vmatprep.subr.mxu0 0.0
        %3515 = vmatpush1.msra.mxu0 %v2540
        %3516 = vmatprep.subr.mxu0 0.0
        %3517 = vmatpush1.msra.mxu0 %v2539
        %3518 = vmatprep.subr.mxu0 0.0
        %3519 = vmatpush2.msra.mxu0 %v2570
        %3520 = vmatprep.subr.mxu0 0.0
        %3521 = vmatpush2.msra.mxu0 %v2569
        %3522 = vmatprep.subr.mxu0 0.0
        %3523 = vmatpush2.msra.mxu0 %v2568
        %3524 = vmatprep.subr.mxu0 0.0
        %3525 = vmatpush2.msra.mxu0 %v2567
        %3526 = vmatprep.subr.mxu0 0.0
        %3527 = vmatpush2.msra.mxu0 %v2566
        %3528 = vmatprep.subr.mxu0 0.0
        %3529 = vmatpush2.msra.mxu0 %v2565
        %3530 = vmatprep.subr.mxu0 0.0
        %3531 = vmatpush2.msra.mxu0 %v2564
        %3532 = vmatprep.subr.mxu0 0.0
        %3533 = vmatpush2.msra.mxu0 %v2563
        %3534 = vmatprep.subr.mxu0 0.0
        %3535 = vmatpush2.msra.mxu0 %v2562
        %3536 = vmatprep.subr.mxu0 0.0
        %3537 = vmatpush2.msra.mxu0 %v2561
        %3538 = vmatprep.subr.mxu0 0.0
        %3539 = vmatpush2.msra.mxu0 %v2560
        %3540 = vmatprep.subr.mxu0 0.0
        %3541 = vmatpush2.msra.mxu0 %v2559
        %3542 = vmatprep.subr.mxu0 0.0
        %3543 = vmatpush2.msra.mxu0 %v2558
        %3544 = vmatprep.subr.mxu0 0.0
        %3545 = vmatpush2.msra.mxu0 %v2557
        %3546 = vmatprep.subr.mxu0 0.0
        %3547 = vmatpush2.msra.mxu0 %v2556
        %3548 = vmatprep.subr.mxu0 0.0
        %3549 = vmatpush2.msra.mxu0 %v2555
        %3550 = vmatprep.mubr.f32.mxu0 %v2917
        %3551 = vmatmul.mubr.f32.gmra.mxu0 %v2811
        %v3552 = vpop.f32.mrf.mxu0
        %v3553 = vadd.f32 %v3328, %v3552
        %v3554 = vpop.f32.mrf.mxu0
        %3555 = vmatprep.mubr.f32.mxu0 %v2919
        %3556 = vmatmul.mubr.f32.gmra.mxu0 %v2813
        %v3557 = vpop.f32.mrf.mxu0
        %v3558 = vadd.f32 %v3333, %v3557
        %v3559 = vpop.f32.mrf.mxu0
        %3560 = vmatprep.mubr.f32.mxu0 %v2922
        %3561 = vmatmul.mubr.f32.gmra.mxu0 %v2816
        %v3562 = vpop.f32.mrf.mxu0
        %v3563 = vadd.f32 %v3338, %v3562
        %v3564 = vpop.f32.mrf.mxu0
        %3565 = vmatprep.mubr.f32.mxu0 %v2924
        %3566 = vmatmul.mubr.f32.gmra.mxu0 %v2818
        %v3567 = vpop.f32.mrf.mxu0
        %v3568 = vadd.f32 %v3343, %v3567
        %v3569 = vpop.f32.mrf.mxu0
        %3570 = vmatprep.mubr.f32.mxu0 %v2927
        %3571 = vmatmul.mubr.f32.gmra.mxu0 %v2821
        %v3572 = vpop.f32.mrf.mxu0
        %v3573 = vadd.f32 %v3348, %v3572
        %v3574 = vpop.f32.mrf.mxu0
        %3575 = vmatprep.mubr.f32.mxu0 %v2929
        %3576 = vmatmul.mubr.f32.gmra.mxu0 %v2823
        %v3577 = vpop.f32.mrf.mxu0
        %v3578 = vadd.f32 %v3353, %v3577
        %v3579 = vpop.f32.mrf.mxu0
        %3580 = vmatprep.mubr.f32.mxu0 %v2932
        %3581 = vmatmul.mubr.f32.gmra.mxu0 %v2826
        %v3582 = vpop.f32.mrf.mxu0
        %v3583 = vadd.f32 %v3358, %v3582
        %v3584 = vpop.f32.mrf.mxu0
        %3585 = vmatprep.mubr.f32.mxu0 %v2934
        %3586 = vmatmul.mubr.f32.gmra.mxu0 %v2828
        %v3587 = vpop.f32.mrf.mxu0
        %v3588 = vadd.f32 %v3363, %v3587
        %v3589 = vpop.f32.mrf.mxu0
        %3590 = vmatprep.mubr.f32.mxu0 %v2937
        %3591 = vmatmul.mubr.f32.gmra.mxu0 %v2831
        %v3592 = vpop.f32.mrf.mxu0
        %v3593 = vadd.f32 %v3368, %v3592
        %v3594 = vpop.f32.mrf.mxu0
        %3595 = vmatprep.mubr.f32.mxu0 %v2939
        %3596 = vmatmul.mubr.f32.gmra.mxu0 %v2833
        %v3597 = vpop.f32.mrf.mxu0
        %v3598 = vadd.f32 %v3373, %v3597
        %v3599 = vpop.f32.mrf.mxu0
        %3600 = vmatprep.mubr.f32.mxu0 %v2942
        %3601 = vmatmul.mubr.f32.gmra.mxu0 %v2836
        %v3602 = vpop.f32.mrf.mxu0
        %v3603 = vadd.f32 %v3378, %v3602
        %v3604 = vpop.f32.mrf.mxu0
        %3605 = vmatprep.mubr.f32.mxu0 %v2944
        %3606 = vmatmul.mubr.f32.gmra.mxu0 %v2838
        %v3607 = vpop.f32.mrf.mxu0
        %v3608 = vadd.f32 %v3383, %v3607
        %v3609 = vpop.f32.mrf.mxu0
        %3610 = vmatprep.mubr.f32.mxu0 %v2947
        %3611 = vmatmul.mubr.f32.gmra.mxu0 %v2841
        %v3612 = vpop.f32.mrf.mxu0
        %v3613 = vadd.f32 %v3388, %v3612
        %v3614 = vpop.f32.mrf.mxu0
        %3615 = vmatprep.mubr.f32.mxu0 %v2949
        %3616 = vmatmul.mubr.f32.gmra.mxu0 %v2843
        %v3617 = vpop.f32.mrf.mxu0
        %v3618 = vadd.f32 %v3393, %v3617
        %v3619 = vpop.f32.mrf.mxu0
        %3620 = vmatprep.mubr.f32.mxu0 %v2952
        %3621 = vmatmul.mubr.f32.gmra.mxu0 %v2846
        %v3622 = vpop.f32.mrf.mxu0
        %v3623 = vadd.f32 %v3398, %v3622
        %v3624 = vpop.f32.mrf.mxu0
        %3625 = vmatprep.mubr.f32.mxu0 %v2954
        %3626 = vmatmul.mubr.f32.gmra.mxu0 %v2848
        %v3627 = vpop.f32.mrf.mxu0
        %v3628 = vadd.f32 %v3403, %v3627
        %v3629 = vpop.f32.mrf.mxu0
        %3630 = vmatprep.mubr.f32.mxu0 %v2957
        %3631 = vmatmul.mubr.f32.gmra.mxu0 %v2851
        %v3632 = vpop.f32.mrf.mxu0
        %v3633 = vadd.f32 %v3408, %v3632
        %v3634 = vpop.f32.mrf.mxu0
        %3635 = vmatprep.mubr.f32.mxu0 %v2959
        %3636 = vmatmul.mubr.f32.gmra.mxu0 %v2853
        %v3637 = vpop.f32.mrf.mxu0
        %v3638 = vadd.f32 %v3413, %v3637
        %v3639 = vpop.f32.mrf.mxu0
        %3640 = vmatprep.mubr.f32.mxu0 %v2962
        %3641 = vmatmul.mubr.f32.gmra.mxu0 %v2856
        %v3642 = vpop.f32.mrf.mxu0
        %v3643 = vadd.f32 %v3418, %v3642
        %v3644 = vpop.f32.mrf.mxu0
        %3645 = vmatprep.mubr.f32.mxu0 %v2964
        %3646 = vmatmul.mubr.f32.gmra.mxu0 %v2858
        %v3647 = vpop.f32.mrf.mxu0
        %v3648 = vadd.f32 %v3423, %v3647
        %v3649 = vpop.f32.mrf.mxu0
        %3650 = vmatprep.mubr.f32.mxu0 %v2967
        %3651 = vmatmul.mubr.f32.gmra.mxu0 %v2861
        %v3652 = vpop.f32.mrf.mxu0
        %v3653 = vadd.f32 %v3428, %v3652
        %v3654 = vpop.f32.mrf.mxu0
        %3655 = vmatprep.mubr.f32.mxu0 %v2969
        %3656 = vmatmul.mubr.f32.gmra.mxu0 %v2863
        %v3657 = vpop.f32.mrf.mxu0
        %v3658 = vadd.f32 %v3433, %v3657
        %v3659 = vpop.f32.mrf.mxu0
        %3660 = vmatprep.mubr.f32.mxu0 %v2972
        %3661 = vmatmul.mubr.f32.gmra.mxu0 %v2866
        %v3662 = vpop.f32.mrf.mxu0
        %v3663 = vadd.f32 %v3438, %v3662
        %v3664 = vpop.f32.mrf.mxu0
        %3665 = vmatprep.mubr.f32.mxu0 %v2974
        %3666 = vmatmul.mubr.f32.gmra.mxu0 %v2868
        %v3667 = vpop.f32.mrf.mxu0
        %v3668 = vadd.f32 %v3443, %v3667
        %v3669 = vpop.f32.mrf.mxu0
        %3670 = vmatprep.mubr.f32.mxu0 %v2977
        %3671 = vmatmul.mubr.f32.gmra.mxu0 %v2871
        %v3672 = vpop.f32.mrf.mxu0
        %v3673 = vadd.f32 %v3448, %v3672
        %v3674 = vpop.f32.mrf.mxu0
        %3675 = vmatprep.mubr.f32.mxu0 %v2979
        %3676 = vmatmul.mubr.f32.gmra.mxu0 %v2873
        %v3677 = vpop.f32.mrf.mxu0
        %v3678 = vadd.f32 %v3453, %v3677
        %v3679 = vpop.f32.mrf.mxu0
        %3680 = vmatprep.mubr.f32.mxu0 %v2982
        %3681 = vmatmul.mubr.f32.gmra.mxu0 %v2876
        %v3682 = vpop.f32.mrf.mxu0
        %v3683 = vadd.f32 %v3458, %v3682
        %v3684 = vpop.f32.mrf.mxu0
        %3685 = vmatprep.mubr.f32.mxu0 %v2984
        %3686 = vmatmul.mubr.f32.gmra.mxu0 %v2878
        %v3687 = vpop.f32.mrf.mxu0
        %v3688 = vadd.f32 %v3463, %v3687
        %v3689 = vpop.f32.mrf.mxu0
        %3690 = vmatprep.mubr.f32.mxu0 %v2987
        %3691 = vmatmul.mubr.f32.gmra.mxu0 %v2881
        %v3692 = vpop.f32.mrf.mxu0
        %v3693 = vadd.f32 %v3468, %v3692
        %v3694 = vpop.f32.mrf.mxu0
        %3695 = vmatprep.mubr.f32.mxu0 %v2989
        %3696 = vmatmul.mubr.f32.gmra.mxu0 %v2883
        %v3697 = vpop.f32.mrf.mxu0
        %v3698 = vadd.f32 %v3473, %v3697
        %v3699 = vpop.f32.mrf.mxu0
        %3700 = vmatprep.mubr.f32.mxu0 %v3031
        %3701 = vmatmul.mubr.f32.gmra.mxu0 %v3024
        %v3702 = vpop.f32.mrf.mxu0
        %v3703 = vadd.f32 %v3478, %v3702
        %v3704 = vpop.f32.mrf.mxu0
        %3705 = vmatprep.mubr.f32.mxu0 %v3033
        %3706 = vmatmul.mubr.f32.gmra.mxu0 %v3026
        %v3707 = vpop.f32.mrf.mxu0
        %v3708 = vadd.f32 %v3483, %v3707
        %v3709 = vpop.f32.mrf.mxu0
        %3710 = vdwg.mxu0
        %3711 = vmatprep.subr.mxu0 0.0
        %3712 = vmatpush1.msra.mxu0 %v2586
        %3713 = vmatprep.subr.mxu0 0.0
        %3714 = vmatpush1.msra.mxu0 %v2585
        %3715 = vmatprep.subr.mxu0 0.0
        %3716 = vmatpush1.msra.mxu0 %v2584
        %3717 = vmatprep.subr.mxu0 0.0
        %3718 = vmatpush1.msra.mxu0 %v2583
        %3719 = vmatprep.subr.mxu0 0.0
        %3720 = vmatpush1.msra.mxu0 %v2582
        %3721 = vmatprep.subr.mxu0 0.0
        %3722 = vmatpush1.msra.mxu0 %v2581
        %3723 = vmatprep.subr.mxu0 0.0
        %3724 = vmatpush1.msra.mxu0 %v2580
        %3725 = vmatprep.subr.mxu0 0.0
        %3726 = vmatpush1.msra.mxu0 %v2579
        %3727 = vmatprep.subr.mxu0 0.0
        %3728 = vmatpush1.msra.mxu0 %v2578
        %3729 = vmatprep.subr.mxu0 0.0
        %3730 = vmatpush1.msra.mxu0 %v2577
        %3731 = vmatprep.subr.mxu0 0.0
        %3732 = vmatpush1.msra.mxu0 %v2576
        %3733 = vmatprep.subr.mxu0 0.0
        %3734 = vmatpush1.msra.mxu0 %v2575
        %3735 = vmatprep.subr.mxu0 0.0
        %3736 = vmatpush1.msra.mxu0 %v2574
        %3737 = vmatprep.subr.mxu0 0.0
        %3738 = vmatpush1.msra.mxu0 %v2573
        %3739 = vmatprep.subr.mxu0 0.0
        %3740 = vmatpush1.msra.mxu0 %v2572
        %3741 = vmatprep.subr.mxu0 0.0
        %3742 = vmatpush1.msra.mxu0 %v2571
        %3743 = vmatprep.subr.mxu0 0.0
        %3744 = vmatpush2.msra.mxu0 %v2602
        %3745 = vmatprep.subr.mxu0 0.0
        %3746 = vmatpush2.msra.mxu0 %v2601
        %3747 = vmatprep.subr.mxu0 0.0
        %3748 = vmatpush2.msra.mxu0 %v2600
        %3749 = vmatprep.subr.mxu0 0.0
        %3750 = vmatpush2.msra.mxu0 %v2599
        %3751 = vmatprep.subr.mxu0 0.0
        %3752 = vmatpush2.msra.mxu0 %v2598
        %3753 = vmatprep.subr.mxu0 0.0
        %3754 = vmatpush2.msra.mxu0 %v2597
        %3755 = vmatprep.subr.mxu0 0.0
        %3756 = vmatpush2.msra.mxu0 %v2596
        %3757 = vmatprep.subr.mxu0 0.0
        %3758 = vmatpush2.msra.mxu0 %v2595
        %3759 = vmatprep.subr.mxu0 0.0
        %3760 = vmatpush2.msra.mxu0 %v2594
        %3761 = vmatprep.subr.mxu0 0.0
        %3762 = vmatpush2.msra.mxu0 %v2593
        %3763 = vmatprep.subr.mxu0 0.0
        %3764 = vmatpush2.msra.mxu0 %v2592
        %3765 = vmatprep.subr.mxu0 0.0
        %3766 = vmatpush2.msra.mxu0 %v2591
        %3767 = vmatprep.subr.mxu0 0.0
        %3768 = vmatpush2.msra.mxu0 %v2590
        %3769 = vmatprep.subr.mxu0 0.0
        %3770 = vmatpush2.msra.mxu0 %v2589
        %3771 = vmatprep.subr.mxu0 0.0
        %3772 = vmatpush2.msra.mxu0 %v2588
        %3773 = vmatprep.subr.mxu0 0.0
        %3774 = vmatpush2.msra.mxu0 %v2587
        %3775 = vmatprep.mubr.f32.mxu0 %v2816
        %3776 = vmatmul.mubr.f32.gmra.mxu0 %v2748
        %v3777 = vpop.f32.mrf.mxu0
        %v3778 = vadd.f32 %v3553, %v3777
        %v3779 = vpop.f32.mrf.mxu0
        %3780 = vmatprep.mubr.f32.mxu0 %v2818
        %3781 = vmatmul.mubr.f32.gmra.mxu0 %v2656
        %v3782 = vpop.f32.mrf.mxu0
        %v3783 = vadd.f32 %v3558, %v3782
        %v3784 = vpop.f32.mrf.mxu0
        %3785 = vmatprep.mubr.f32.mxu0 %v2821
        %3786 = vmatmul.mubr.f32.gmra.mxu0 %v2749
        %v3787 = vpop.f32.mrf.mxu0
        %v3788 = vadd.f32 %v3563, %v3787
        %v3789 = vpop.f32.mrf.mxu0
        %3790 = vmatprep.mubr.f32.mxu0 %v2823
        %3791 = vmatmul.mubr.f32.gmra.mxu0 %v2659
        %v3792 = vpop.f32.mrf.mxu0
        %v3793 = vadd.f32 %v3568, %v3792
        %v3794 = vpop.f32.mrf.mxu0
        %3795 = vmatprep.mubr.f32.mxu0 %v2826
        %3796 = vmatmul.mubr.f32.gmra.mxu0 %v2750
        %v3797 = vpop.f32.mrf.mxu0
        %v3798 = vadd.f32 %v3573, %v3797
        %v3799 = vpop.f32.mrf.mxu0
        %3800 = vmatprep.mubr.f32.mxu0 %v2828
        %3801 = vmatmul.mubr.f32.gmra.mxu0 %v2662
        %v3802 = vpop.f32.mrf.mxu0
        %v3803 = vadd.f32 %v3578, %v3802
        %v3804 = vpop.f32.mrf.mxu0
        %3805 = vmatprep.mubr.f32.mxu0 %v2831
        %3806 = vmatmul.mubr.f32.gmra.mxu0 %v2751
        %v3807 = vpop.f32.mrf.mxu0
        %v3808 = vadd.f32 %v3583, %v3807
        %v3809 = vpop.f32.mrf.mxu0
        %3810 = vmatprep.mubr.f32.mxu0 %v2833
        %3811 = vmatmul.mubr.f32.gmra.mxu0 %v2665
        %v3812 = vpop.f32.mrf.mxu0
        %v3813 = vadd.f32 %v3588, %v3812
        %v3814 = vpop.f32.mrf.mxu0
        %3815 = vmatprep.mubr.f32.mxu0 %v2836
        %3816 = vmatmul.mubr.f32.gmra.mxu0 %v2752
        %v3817 = vpop.f32.mrf.mxu0
        %v3818 = vadd.f32 %v3593, %v3817
        %v3819 = vpop.f32.mrf.mxu0
        %3820 = vmatprep.mubr.f32.mxu0 %v2838
        %3821 = vmatmul.mubr.f32.gmra.mxu0 %v2668
        %v3822 = vpop.f32.mrf.mxu0
        %v3823 = vadd.f32 %v3598, %v3822
        %v3824 = vpop.f32.mrf.mxu0
        %3825 = vmatprep.mubr.f32.mxu0 %v2841
        %3826 = vmatmul.mubr.f32.gmra.mxu0 %v2753
        %v3827 = vpop.f32.mrf.mxu0
        %v3828 = vadd.f32 %v3603, %v3827
        %v3829 = vpop.f32.mrf.mxu0
        %3830 = vmatprep.mubr.f32.mxu0 %v2843
        %3831 = vmatmul.mubr.f32.gmra.mxu0 %v2671
        %v3832 = vpop.f32.mrf.mxu0
        %v3833 = vadd.f32 %v3608, %v3832
        %v3834 = vpop.f32.mrf.mxu0
        %3835 = vmatprep.mubr.f32.mxu0 %v2846
        %3836 = vmatmul.mubr.f32.gmra.mxu0 %v2754
        %v3837 = vpop.f32.mrf.mxu0
        %v3838 = vadd.f32 %v3613, %v3837
        %v3839 = vpop.f32.mrf.mxu0
        %3840 = vmatprep.mubr.f32.mxu0 %v2848
        %3841 = vmatmul.mubr.f32.gmra.mxu0 %v2674
        %v3842 = vpop.f32.mrf.mxu0
        %v3843 = vadd.f32 %v3618, %v3842
        %v3844 = vpop.f32.mrf.mxu0
        %3845 = vmatprep.mubr.f32.mxu0 %v2851
        %3846 = vmatmul.mubr.f32.gmra.mxu0 %v2755
        %v3847 = vpop.f32.mrf.mxu0
        %v3848 = vadd.f32 %v3623, %v3847
        %v3849 = vpop.f32.mrf.mxu0
        %3850 = vmatprep.mubr.f32.mxu0 %v2853
        %3851 = vmatmul.mubr.f32.gmra.mxu0 %v2677
        %v3852 = vpop.f32.mrf.mxu0
        %v3853 = vadd.f32 %v3628, %v3852
        %v3854 = vpop.f32.mrf.mxu0
        %3855 = vmatprep.mubr.f32.mxu0 %v2856
        %3856 = vmatmul.mubr.f32.gmra.mxu0 %v2756
        %v3857 = vpop.f32.mrf.mxu0
        %v3858 = vadd.f32 %v3633, %v3857
        %v3859 = vpop.f32.mrf.mxu0
        %3860 = vmatprep.mubr.f32.mxu0 %v2858
        %3861 = vmatmul.mubr.f32.gmra.mxu0 %v2680
        %v3862 = vpop.f32.mrf.mxu0
        %v3863 = vadd.f32 %v3638, %v3862
        %v3864 = vpop.f32.mrf.mxu0
        %3865 = vmatprep.mubr.f32.mxu0 %v2861
        %3866 = vmatmul.mubr.f32.gmra.mxu0 %v2757
        %v3867 = vpop.f32.mrf.mxu0
        %v3868 = vadd.f32 %v3643, %v3867
        %v3869 = vpop.f32.mrf.mxu0
        %3870 = vmatprep.mubr.f32.mxu0 %v2863
        %3871 = vmatmul.mubr.f32.gmra.mxu0 %v2683
        %v3872 = vpop.f32.mrf.mxu0
        %v3873 = vadd.f32 %v3648, %v3872
        %v3874 = vpop.f32.mrf.mxu0
        %3875 = vmatprep.mubr.f32.mxu0 %v2866
        %3876 = vmatmul.mubr.f32.gmra.mxu0 %v2758
        %v3877 = vpop.f32.mrf.mxu0
        %v3878 = vadd.f32 %v3653, %v3877
        %v3879 = vpop.f32.mrf.mxu0
        %3880 = vmatprep.mubr.f32.mxu0 %v2868
        %3881 = vmatmul.mubr.f32.gmra.mxu0 %v2686
        %v3882 = vpop.f32.mrf.mxu0
        %v3883 = vadd.f32 %v3658, %v3882
        %v3884 = vpop.f32.mrf.mxu0
        %3885 = vmatprep.mubr.f32.mxu0 %v2871
        %3886 = vmatmul.mubr.f32.gmra.mxu0 %v2759
        %v3887 = vpop.f32.mrf.mxu0
        %v3888 = vadd.f32 %v3663, %v3887
        %v3889 = vpop.f32.mrf.mxu0
        %3890 = vmatprep.mubr.f32.mxu0 %v2873
        %3891 = vmatmul.mubr.f32.gmra.mxu0 %v2689
        %v3892 = vpop.f32.mrf.mxu0
        %v3893 = vadd.f32 %v3668, %v3892
        %v3894 = vpop.f32.mrf.mxu0
        %3895 = vmatprep.mubr.f32.mxu0 %v2876
        %3896 = vmatmul.mubr.f32.gmra.mxu0 %v2760
        %v3897 = vpop.f32.mrf.mxu0
        %v3898 = vadd.f32 %v3673, %v3897
        %v3899 = vpop.f32.mrf.mxu0
        %3900 = vmatprep.mubr.f32.mxu0 %v2878
        %3901 = vmatmul.mubr.f32.gmra.mxu0 %v2692
        %v3902 = vpop.f32.mrf.mxu0
        %v3903 = vadd.f32 %v3678, %v3902
        %v3904 = vpop.f32.mrf.mxu0
        %3905 = vmatprep.mubr.f32.mxu0 %v2881
        %3906 = vmatmul.mubr.f32.gmra.mxu0 %v2761
        %v3907 = vpop.f32.mrf.mxu0
        %v3908 = vadd.f32 %v3683, %v3907
        %v3909 = vpop.f32.mrf.mxu0
        %3910 = vmatprep.mubr.f32.mxu0 %v2883
        %3911 = vmatmul.mubr.f32.gmra.mxu0 %v2695
        %v3912 = vpop.f32.mrf.mxu0
        %v3913 = vadd.f32 %v3688, %v3912
        %v3914 = vpop.f32.mrf.mxu0
        %3915 = vmatprep.mubr.f32.mxu0 %v3024
        %3916 = vmatmul.mubr.f32.gmra.mxu0 %v2762
        %v3917 = vpop.f32.mrf.mxu0
        %v3918 = vadd.f32 %v3693, %v3917
        %v3919 = vpop.f32.mrf.mxu0
        %3920 = vmatprep.mubr.f32.mxu0 %v3026
        %3921 = vmatmul.mubr.f32.gmra.mxu0 %v2698
        %v3922 = vpop.f32.mrf.mxu0
        %v3923 = vadd.f32 %v3698, %v3922
        %v3924 = vpop.f32.mrf.mxu0
        %3925 = vmatprep.mubr.f32.mxu0 %v1012
        %3926 = vmatmul.mubr.f32.gmra.mxu0 0.0
        %v3927 = vpop.f32.mrf.mxu0
        %v3928 = vadd.f32 %v3703, %v3927
        %v3929 = vpop.f32.mrf.mxu0
        %3930 = vmatprep.mubr.f32.mxu0 %v1012
        %3931 = vmatmul.mubr.f32.gmra.mxu0 0.0
        %v3932 = vpop.f32.mrf.mxu0
        %v3933 = vadd.f32 %v3708, %v3932
        %v3934 = vpop.f32.mrf.mxu0
        %3935 = vdwg.mxu0
        %3936 = vmatprep.subr.mxu0 0.0
        %3937 = vmatpush1.msra.mxu0 %v2618
        %3938 = vmatprep.subr.mxu0 0.0
        %3939 = vmatpush1.msra.mxu0 %v2617
        %3940 = vmatprep.subr.mxu0 0.0
        %3941 = vmatpush1.msra.mxu0 %v2616
        %3942 = vmatprep.subr.mxu0 0.0
        %3943 = vmatpush1.msra.mxu0 %v2615
        %3944 = vmatprep.subr.mxu0 0.0
        %3945 = vmatpush1.msra.mxu0 %v2614
        %3946 = vmatprep.subr.mxu0 0.0
        %3947 = vmatpush1.msra.mxu0 %v2613
        %3948 = vmatprep.subr.mxu0 0.0
        %3949 = vmatpush1.msra.mxu0 %v2612
        %3950 = vmatprep.subr.mxu0 0.0
        %3951 = vmatpush1.msra.mxu0 %v2611
        %3952 = vmatprep.subr.mxu0 0.0
        %3953 = vmatpush1.msra.mxu0 %v2610
        %3954 = vmatprep.subr.mxu0 0.0
        %3955 = vmatpush1.msra.mxu0 %v2609
        %3956 = vmatprep.subr.mxu0 0.0
        %3957 = vmatpush1.msra.mxu0 %v2608
        %3958 = vmatprep.subr.mxu0 0.0
        %3959 = vmatpush1.msra.mxu0 %v2607
        %3960 = vmatprep.subr.mxu0 0.0
        %3961 = vmatpush1.msra.mxu0 %v2606
        %3962 = vmatprep.subr.mxu0 0.0
        %3963 = vmatpush1.msra.mxu0 %v2605
        %3964 = vmatprep.subr.mxu0 0.0
        %3965 = vmatpush1.msra.mxu0 %v2604
        %3966 = vmatprep.subr.mxu0 0.0
        %3967 = vmatpush1.msra.mxu0 %v2603
        %3968 = vmatprep.subr.mxu0 0.0
        %3969 = vmatpush2.msra.mxu0 0.0
        %3970 = vmatprep.subr.mxu0 0.0
        %3971 = vmatpush2.msra.mxu0 0.0
        %3972 = vmatprep.subr.mxu0 0.0
        %3973 = vmatpush2.msra.mxu0 0.0
        %3974 = vmatprep.subr.mxu0 0.0
        %3975 = vmatpush2.msra.mxu0 0.0
        %3976 = vmatprep.subr.mxu0 0.0
        %3977 = vmatpush2.msra.mxu0 0.0
        %3978 = vmatprep.subr.mxu0 0.0
        %3979 = vmatpush2.msra.mxu0 0.0
        %3980 = vmatprep.subr.mxu0 0.0
        %3981 = vmatpush2.msra.mxu0 0.0
        %3982 = vmatprep.subr.mxu0 0.0
        %3983 = vmatpush2.msra.mxu0 0.0
        %3984 = vmatprep.subr.mxu0 0.0
        %3985 = vmatpush2.msra.mxu0 0.0
        %3986 = vmatprep.subr.mxu0 0.0
        %3987 = vmatpush2.msra.mxu0 0.0
        %3988 = vmatprep.subr.mxu0 0.0
        %3989 = vmatpush2.msra.mxu0 0.0
        %3990 = vmatprep.subr.mxu0 0.0
        %3991 = vmatpush2.msra.mxu0 0.0
        %3992 = vmatprep.subr.mxu0 0.0
        %3993 = vmatpush2.msra.mxu0 0.0
        %3994 = vmatprep.subr.mxu0 0.0
        %3995 = vmatpush2.msra.mxu0 0.0
        %3996 = vmatprep.subr.mxu0 0.0
        %3997 = vmatpush2.msra.mxu0 0.0
        %3998 = vmatprep.subr.mxu0 0.0
        %3999 = vmatpush2.msra.mxu0 0.0
        %4000 = vmatprep.mubr.f32.mxu0 0.0
        %4001 = vmatmul.mubr.f32.gmra.mxu0 %v2922
        %v4002 = vpop.f32.mrf.mxu0
        %v4003 = vadd.f32 %v3778, %v4002
        %v4004 = vpop.f32.mrf.mxu0
        %4005 = vmatprep.mubr.f32.mxu0 0.0
        %4006 = vmatmul.mubr.f32.gmra.mxu0 %v2924
        %v4007 = vpop.f32.mrf.mxu0
        %v4008 = vadd.f32 %v3783, %v4007
        %v4009 = vpop.f32.mrf.mxu0
        %4010 = vmatprep.mubr.f32.mxu0 0.0
        %4011 = vmatmul.mubr.f32.gmra.mxu0 %v2927
        %v4012 = vpop.f32.mrf.mxu0
        %v4013 = vadd.f32 %v3788, %v4012
        %v4014 = vpop.f32.mrf.mxu0
        %4015 = vmatprep.mubr.f32.mxu0 0.0
        %4016 = vmatmul.mubr.f32.gmra.mxu0 %v2929
        %v4017 = vpop.f32.mrf.mxu0
        %v4018 = vadd.f32 %v3793, %v4017
        %v4019 = vpop.f32.mrf.mxu0
        %4020 = vmatprep.mubr.f32.mxu0 0.0
        %4021 = vmatmul.mubr.f32.gmra.mxu0 %v2932
        %v4022 = vpop.f32.mrf.mxu0
        %v4023 = vadd.f32 %v3798, %v4022
        %v4024 = vpop.f32.mrf.mxu0
        %4025 = vmatprep.mubr.f32.mxu0 0.0
        %4026 = vmatmul.mubr.f32.gmra.mxu0 %v2934
        %v4027 = vpop.f32.mrf.mxu0
        %v4028 = vadd.f32 %v3803, %v4027
        %v4029 = vpop.f32.mrf.mxu0
        %4030 = vmatprep.mubr.f32.mxu0 0.0
        %4031 = vmatmul.mubr.f32.gmra.mxu0 %v2937
        %v4032 = vpop.f32.mrf.mxu0
        %v4033 = vadd.f32 %v3808, %v4032
        %v4034 = vpop.f32.mrf.mxu0
        %4035 = vmatprep.mubr.f32.mxu0 0.0
        %4036 = vmatmul.mubr.f32.gmra.mxu0 %v2939
        %v4037 = vpop.f32.mrf.mxu0
        %v4038 = vadd.f32 %v3813, %v4037
        %v4039 = vpop.f32.mrf.mxu0
        %4040 = vmatprep.mubr.f32.mxu0 0.0
        %4041 = vmatmul.mubr.f32.gmra.mxu0 %v2942
        %v4042 = vpop.f32.mrf.mxu0
        %v4043 = vadd.f32 %v3818, %v4042
        %v4044 = vpop.f32.mrf.mxu0
        %4045 = vmatprep.mubr.f32.mxu0 0.0
        %4046 = vmatmul.mubr.f32.gmra.mxu0 %v2944
        %v4047 = vpop.f32.mrf.mxu0
        %v4048 = vadd.f32 %v3823, %v4047
        %v4049 = vpop.f32.mrf.mxu0
        %4050 = vmatprep.mubr.f32.mxu0 0.0
        %4051 = vmatmul.mubr.f32.gmra.mxu0 %v2947
        %v4052 = vpop.f32.mrf.mxu0
        %v4053 = vadd.f32 %v3828, %v4052
        %v4054 = vpop.f32.mrf.mxu0
        %4055 = vmatprep.mubr.f32.mxu0 0.0
        %4056 = vmatmul.mubr.f32.gmra.mxu0 %v2949
        %v4057 = vpop.f32.mrf.mxu0
        %v4058 = vadd.f32 %v3833, %v4057
        %v4059 = vpop.f32.mrf.mxu0
        %4060 = vmatprep.mubr.f32.mxu0 0.0
        %4061 = vmatmul.mubr.f32.gmra.mxu0 %v2952
        %v4062 = vpop.f32.mrf.mxu0
        %v4063 = vadd.f32 %v3838, %v4062
        %v4064 = vpop.f32.mrf.mxu0
        %4065 = vmatprep.mubr.f32.mxu0 0.0
        %4066 = vmatmul.mubr.f32.gmra.mxu0 %v2954
        %v4067 = vpop.f32.mrf.mxu0
        %v4068 = vadd.f32 %v3843, %v4067
        %v4069 = vpop.f32.mrf.mxu0
        %4070 = vmatprep.mubr.f32.mxu0 0.0
        %4071 = vmatmul.mubr.f32.gmra.mxu0 %v2957
        %v4072 = vpop.f32.mrf.mxu0
        %v4073 = vadd.f32 %v3848, %v4072
        %v4074 = vpop.f32.mrf.mxu0
        %4075 = vmatprep.mubr.f32.mxu0 0.0
        %4076 = vmatmul.mubr.f32.gmra.mxu0 %v2959
        %v4077 = vpop.f32.mrf.mxu0
        %v4078 = vadd.f32 %v3853, %v4077
        %v4079 = vpop.f32.mrf.mxu0
        %4080 = vmatprep.mubr.f32.mxu0 0.0
        %4081 = vmatmul.mubr.f32.gmra.mxu0 %v2962
        %v4082 = vpop.f32.mrf.mxu0
        %v4083 = vadd.f32 %v3858, %v4082
        %v4084 = vpop.f32.mrf.mxu0
        %4085 = vmatprep.mubr.f32.mxu0 0.0
        %4086 = vmatmul.mubr.f32.gmra.mxu0 %v2964
        %v4087 = vpop.f32.mrf.mxu0
        %v4088 = vadd.f32 %v3863, %v4087
        %v4089 = vpop.f32.mrf.mxu0
        %4090 = vmatprep.mubr.f32.mxu0 0.0
        %4091 = vmatmul.mubr.f32.gmra.mxu0 %v2967
        %v4092 = vpop.f32.mrf.mxu0
        %v4093 = vadd.f32 %v3868, %v4092
        %v4094 = vpop.f32.mrf.mxu0
        %4095 = vmatprep.mubr.f32.mxu0 0.0
        %4096 = vmatmul.mubr.f32.gmra.mxu0 %v2969
        %v4097 = vpop.f32.mrf.mxu0
        %v4098 = vadd.f32 %v3873, %v4097
        %v4099 = vpop.f32.mrf.mxu0
        %4100 = vmatprep.mubr.f32.mxu0 0.0
        %4101 = vmatmul.mubr.f32.gmra.mxu0 %v2972
        %v4102 = vpop.f32.mrf.mxu0
        %v4103 = vadd.f32 %v3878, %v4102
        %v4104 = vpop.f32.mrf.mxu0
        %4105 = vmatprep.mubr.f32.mxu0 0.0
        %4106 = vmatmul.mubr.f32.gmra.mxu0 %v2974
        %v4107 = vpop.f32.mrf.mxu0
        %v4108 = vadd.f32 %v3883, %v4107
        %v4109 = vpop.f32.mrf.mxu0
        %4110 = vmatprep.mubr.f32.mxu0 0.0
        %4111 = vmatmul.mubr.f32.gmra.mxu0 %v2977
        %v4112 = vpop.f32.mrf.mxu0
        %v4113 = vadd.f32 %v3888, %v4112
        %v4114 = vpop.f32.mrf.mxu0
        %4115 = vmatprep.mubr.f32.mxu0 0.0
        %4116 = vmatmul.mubr.f32.gmra.mxu0 %v2979
        %v4117 = vpop.f32.mrf.mxu0
        %v4118 = vadd.f32 %v3893, %v4117
        %v4119 = vpop.f32.mrf.mxu0
        %4120 = vmatprep.mubr.f32.mxu0 0.0
        %4121 = vmatmul.mubr.f32.gmra.mxu0 %v2982
        %v4122 = vpop.f32.mrf.mxu0
        %v4123 = vadd.f32 %v3898, %v4122
        %v4124 = vpop.f32.mrf.mxu0
        %4125 = vmatprep.mubr.f32.mxu0 0.0
        %4126 = vmatmul.mubr.f32.gmra.mxu0 %v2984
        %v4127 = vpop.f32.mrf.mxu0
        %v4128 = vadd.f32 %v3903, %v4127
        %v4129 = vpop.f32.mrf.mxu0
        %4130 = vmatprep.mubr.f32.mxu0 0.0
        %4131 = vmatmul.mubr.f32.gmra.mxu0 %v2987
        %v4132 = vpop.f32.mrf.mxu0
        %v4133 = vadd.f32 %v3908, %v4132
        %v4134 = vpop.f32.mrf.mxu0
        %4135 = vmatprep.mubr.f32.mxu0 0.0
        %4136 = vmatmul.mubr.f32.gmra.mxu0 %v2989
        %v4137 = vpop.f32.mrf.mxu0
        %v4138 = vadd.f32 %v3913, %v4137
        %v4139 = vpop.f32.mrf.mxu0
        %4140 = vmatprep.mubr.f32.mxu0 0.0
        %4141 = vmatmul.mubr.f32.gmra.mxu0 %v3031
        %v4142 = vpop.f32.mrf.mxu0
        %v4143 = vadd.f32 %v3918, %v4142
        %v4144 = vpop.f32.mrf.mxu0
        %4145 = vmatprep.mubr.f32.mxu0 0.0
        %4146 = vmatmul.mubr.f32.gmra.mxu0 %v3033
        %v4147 = vpop.f32.mrf.mxu0
        %v4148 = vadd.f32 %v3923, %v4147
        %v4149 = vpop.f32.mrf.mxu0
        %4150 = vmatprep.mubr.f32.mxu0 0.0
        %4151 = vmatmul.mubr.f32.gmra.mxu0 %v1183
        %v4152 = vpop.f32.mrf.mxu0
        %v4153 = vadd.f32 %v3928, %v4152
        %v4154 = vpop.f32.mrf.mxu0
        %4155 = vmatprep.mubr.f32.mxu0 0.0
        %4156 = vmatmul.mubr.f32.gmra.mxu0 %v1183
        %v4157 = vpop.f32.mrf.mxu0
        %v4158 = vadd.f32 %v3933, %v4157
        %v4159 = vpop.f32.mrf.mxu0
        %4160 = vdwg.mxu0
        %v4162 = vlaneseq
        %v4163 = vshrl.u32 %v4162, 7
        %v4164 = vsub.s32 0, %v4163
        %v4165 = vrot.slane %v744, %v4164
        %v4167 = vmul.f32 %v4003, %v4165
        %v4168 = vmul.f32 %v4008, %v4165
        %v4169 = vmul.f32 %v4013, %v4165
        %v4170 = vmul.f32 %v4018, %v4165
        %v4171 = vmul.f32 %v4023, %v4165
        %v4172 = vmul.f32 %v4028, %v4165
        %v4173 = vmul.f32 %v4033, %v4165
        %v4174 = vmul.f32 %v4038, %v4165
        %v4175 = vmul.f32 %v4043, %v4165
        %v4176 = vmul.f32 %v4048, %v4165
        %v4177 = vmul.f32 %v4053, %v4165
        %v4178 = vmul.f32 %v4058, %v4165
        %v4179 = vmul.f32 %v4063, %v4165
        %v4180 = vmul.f32 %v4068, %v4165
        %v4181 = vmul.f32 %v4073, %v4165
        %v4182 = vmul.f32 %v4078, %v4165
        %v4183 = vmul.f32 %v4083, %v4165
        %v4184 = vmul.f32 %v4088, %v4165
        %v4185 = vmul.f32 %v4093, %v4165
        %v4186 = vmul.f32 %v4098, %v4165
        %v4187 = vmul.f32 %v4103, %v4165
        %v4188 = vmul.f32 %v4108, %v4165
        %v4189 = vmul.f32 %v4113, %v4165
        %v4190 = vmul.f32 %v4118, %v4165
        %v4191 = vmul.f32 %v4123, %v4165
        %v4192 = vmul.f32 %v4128, %v4165
        %v4193 = vmul.f32 %v4133, %v4165
        %v4194 = vmul.f32 %v4138, %v4165
        %v4195 = vmul.f32 %v4143, %v4165
        %v4196 = vmul.f32 %v4148, %v4165
        %v4197 = vmul.f32 %v4153, %v4165
        %v4198 = vmul.f32 %v4158, %v4165
        %v4200 = vlaneseq
        %v4201 = vshrl.u32 %v4200, 7
        %v4202 = vsub.s32 0, %v4201
        %v4203 = vrot.slane %v745, %v4202
        %v4205 = vadd.f32 %v4167, %v4203
        %v4206 = vadd.f32 %v4168, %v4203
        %v4207 = vadd.f32 %v4169, %v4203
        %v4208 = vadd.f32 %v4170, %v4203
        %v4209 = vadd.f32 %v4171, %v4203
        %v4210 = vadd.f32 %v4172, %v4203
        %v4211 = vadd.f32 %v4173, %v4203
        %v4212 = vadd.f32 %v4174, %v4203
        %v4213 = vadd.f32 %v4175, %v4203
        %v4214 = vadd.f32 %v4176, %v4203
        %v4215 = vadd.f32 %v4177, %v4203
        %v4216 = vadd.f32 %v4178, %v4203
        %v4217 = vadd.f32 %v4179, %v4203
        %v4218 = vadd.f32 %v4180, %v4203
        %v4219 = vadd.f32 %v4181, %v4203
        %v4220 = vadd.f32 %v4182, %v4203
        %v4221 = vadd.f32 %v4183, %v4203
        %v4222 = vadd.f32 %v4184, %v4203
        %v4223 = vadd.f32 %v4185, %v4203
        %v4224 = vadd.f32 %v4186, %v4203
        %v4225 = vadd.f32 %v4187, %v4203
        %v4226 = vadd.f32 %v4188, %v4203
        %v4227 = vadd.f32 %v4189, %v4203
        %v4228 = vadd.f32 %v4190, %v4203
        %v4229 = vadd.f32 %v4191, %v4203
        %v4230 = vadd.f32 %v4192, %v4203
        %v4231 = vadd.f32 %v4193, %v4203
        %v4232 = vadd.f32 %v4194, %v4203
        %v4233 = vadd.f32 %v4195, %v4203
        %v4234 = vadd.f32 %v4196, %v4203
        %v4235 = vadd.f32 %v4197, %v4203
        %v4236 = vadd.f32 %v4198, %v4203
        %v4237 = vmax.f32 %v4205, 0.0
        %v4238 = vmax.f32 %v4206, 0.0
        %v4239 = vmax.f32 %v4207, 0.0
        %v4240 = vmax.f32 %v4208, 0.0
        %v4241 = vmax.f32 %v4209, 0.0
        %v4242 = vmax.f32 %v4210, 0.0
        %v4243 = vmax.f32 %v4211, 0.0
        %v4244 = vmax.f32 %v4212, 0.0
        %v4245 = vmax.f32 %v4213, 0.0
        %v4246 = vmax.f32 %v4214, 0.0
        %v4247 = vmax.f32 %v4215, 0.0
        %v4248 = vmax.f32 %v4216, 0.0
        %v4249 = vmax.f32 %v4217, 0.0
        %v4250 = vmax.f32 %v4218, 0.0
        %v4251 = vmax.f32 %v4219, 0.0
        %v4252 = vmax.f32 %v4220, 0.0
        %v4253 = vmax.f32 %v4221, 0.0
        %v4254 = vmax.f32 %v4222, 0.0
        %v4255 = vmax.f32 %v4223, 0.0
        %v4256 = vmax.f32 %v4224, 0.0
        %v4257 = vmax.f32 %v4225, 0.0
        %v4258 = vmax.f32 %v4226, 0.0
        %v4259 = vmax.f32 %v4227, 0.0
        %v4260 = vmax.f32 %v4228, 0.0
        %v4261 = vmax.f32 %v4229, 0.0
        %v4262 = vmax.f32 %v4230, 0.0
        %v4263 = vmax.f32 %v4231, 0.0
        %v4264 = vmax.f32 %v4232, 0.0
        %v4265 = vmax.f32 %v4233, 0.0
        %v4266 = vmax.f32 %v4234, 0.0
        %v4267 = vmax.f32 %v4235, 0.0
        %v4268 = vmax.f32 %v4236, 0.0
        %4269 = vst [vmem:[%s325] sm:$0xff] %v4237
        %4270 = vst [vmem:[%s325 + $0x8] sm:$0xff] %v4238
        %4271 = vst [vmem:[%s325 + $0x10] sm:$0xff] %v4239
        %4272 = vst [vmem:[%s325 + $0x18] sm:$0xff] %v4240
        %4273 = vst [vmem:[%s325 + $0x20] sm:$0xff] %v4241
        %4274 = vst [vmem:[%s325 + $0x28] sm:$0xff] %v4242
        %4275 = vst [vmem:[%s325 + $0x30] sm:$0xff] %v4243
        %4276 = vst [vmem:[%s325 + $0x38] sm:$0xff] %v4244
        %4277 = vst [vmem:[%s325 + $0x40] sm:$0xff] %v4245
        %4278 = vst [vmem:[%s325 + $0x48] sm:$0xff] %v4246
        %4279 = vst [vmem:[%s325 + $0x50] sm:$0xff] %v4247
        %4280 = vst [vmem:[%s325 + $0x58] sm:$0xff] %v4248
        %4281 = vst [vmem:[%s325 + $0x60] sm:$0xff] %v4249
        %4282 = vst [vmem:[%s325 + $0x68] sm:$0xff] %v4250
        %4283 = vst [vmem:[%s325 + $0x70] sm:$0xff] %v4251
        %4284 = vst [vmem:[%s325 + $0x78] sm:$0xff] %v4252
        %4285 = vst [vmem:[%s325 + $0x80] sm:$0xff] %v4253
        %4286 = vst [vmem:[%s325 + $0x88] sm:$0xff] %v4254
        %4287 = vst [vmem:[%s325 + $0x90] sm:$0xff] %v4255
        %4288 = vst [vmem:[%s325 + $0x98] sm:$0xff] %v4256
        %4289 = vst [vmem:[%s325 + $0xa0] sm:$0xff] %v4257
        %4290 = vst [vmem:[%s325 + $0xa8] sm:$0xff] %v4258
        %4291 = vst [vmem:[%s325 + $0xb0] sm:$0xff] %v4259
        %4292 = vst [vmem:[%s325 + $0xb8] sm:$0xff] %v4260
        %4293 = vst [vmem:[%s325 + $0xc0] sm:$0xff] %v4261
        %4294 = vst [vmem:[%s325 + $0xc8] sm:$0xff] %v4262
        %4295 = vst [vmem:[%s325 + $0xd0] sm:$0xff] %v4263
        %4296 = vst [vmem:[%s325 + $0xd8] sm:$0xff] %v4264
        %4297 = vst [vmem:[%s325 + $0xe0] sm:$0xff] %v4265
        %4298 = vst [vmem:[%s325 + $0xe8] sm:$0xff] %v4266
        %4299 = vst [vmem:[%s325 + $0xf0] sm:$0xff] %v4267
        %4300 = vst [vmem:[%s325 + $0xf8] sm:$0xff] %v4268
        %s4301 = sand.u32 %s185, 1
        %s4302 = scalar_lea.sflag [#allocation4], %s4301
        %s4303 = sand.u32 %s185, 1
        %s4304 = smul.addr %s4303, 256
        %s4305 = scalar_lea.vmem [#allocation8], %s4304
        // Predicated region
        $region61: #{tpu_custom_call.1} parent=47 // pred_check
          %p4306 = pneg %p195
        $region62: #{tpu_custom_call.1} parent=47 // pred_check_branch
          %4308 = sbr.rel (%p4306) target = $region64
        $region63: #{tpu_custom_call.1} parent=47 // pred_region
          %s4310 = ssub.s32 4096, 4096
          %4311 = vsyncadd %s4302, %s4310
          %s4312 = smul.addr %s25, 32
          %s4313 = smul.addr %s4312, 128
          %s4314 = scalar_lea.hbm %s7, %s4313
          %s4315 = sshll.u32 %s4305, 4
          %s4316 = int_to_ptr.vmem [resolvable:$true] %s4315
          %4321 = dma.vmem_to_hbm [thread:$0]  %s4316, 4096, %s4314, %s4302, 128, 128, 8
        $region64: #{tpu_custom_call.1} parent=47 // pred_fallthru
          _
      $region48: #{tpu_custom_call.1} parent=5 // pred_fallthru
        _
      %p4322 = scmp.le.s32.totalorder 2, %s20
      // Predicated region
      $region65: #{tpu_custom_call.1} parent=5 // pred_check
        %p4323 = pneg %p4322
      $region66: #{tpu_custom_call.1} parent=5 // pred_check_branch
        %4325 = sbr.rel (%p4323) target = $region68
      $region67: #{tpu_custom_call.1} parent=5 // pred_region
        %s4326 = ssub.s32 %s20, 2
        // Predicated region
        $region69: #{tpu_custom_call.1} parent=67 // pred_check
          %p4327 = pneg %p201
        $region70: #{tpu_custom_call.1} parent=67 // pred_check_branch
          %4329 = sbr.rel (%p4327) target = $region72
        $region71: #{tpu_custom_call.1} parent=67 // pred_region
          %s4330 = sand.u32 %s186, 1
          %s4331 = scalar_lea.sflag [#allocation4], %s4330
          %s4332 = sand.u32 %s186, 1
          %s4333 = smul.addr %s4332, 256
          %s4334 = scalar_lea.vmem [#allocation8], %s4333
          %4335 = dma.done %s4331, 4096
        $region72: #{tpu_custom_call.1} parent=67 // pred_fallthru
          _
      $region68: #{tpu_custom_call.1} parent=5 // pred_fallthru
        _
    $region6: #{tpu_custom_call.1} parent=1 // loop_footer
      %s24 = sadd.s32 1, %s20
    $region7: #{tpu_custom_call.1} parent=1 // loop_footer_branch
      %19 = sbr.rel target = $region3
    $region8: #{tpu_custom_call.1} parent=1 // loop_exit
      _
    %4336 = vsyncpa [#allocation3], 1
    %s4337 = scalar_lea.sflag [#allocation3], 1
    %4338 = vsyncpa %s4337, 1
    %4339 = vsyncpa [#allocation6], 1
    %4340 = vsyncpa [#allocation4], 1
    %s4341 = scalar_lea.sflag [#allocation4], 1
    %4342 = vsyncpa %s4341, 1

</llo_original>
